<compile_context>
chip_gen: v7x
topology: tpu7x:2x2x1
jax: 0.10.0
libtpu: 0.0.40
codegen_flags: <defaults>
</compile_context>

<pallas_src>
import jax
import jax.numpy as jnp
from jax.experimental import pallas as pl
from jax.experimental.pallas import tpu as pltpu

_HP = jax.lax.Precision.HIGHEST


# ----------------------------------------------------------------------------- weight prep
def _shift_matrix(n, d):
    # S[src, dst] = 1 iff src == dst + d  (zero-padding semantics fall out of the index bounds)
    i = jnp.arange(n)
    return ((i[:, None] - i[None, :]) == d).astype(jnp.float32)


def build_spatial_conv_matrix(w_sa, H, W):
    """Dense (2*H*W, H*W) matrix M such that, for maps of shape (2, H, W),
    conv2d_same(maps, w_sa).reshape(H*W) == maps.reshape(2*H*W) @ M.
    Data-independent: depends only on the 7x7 conv weights (weight preparation)."""
    K = w_sa.shape[-1]
    P = (K - 1) // 2
    HW = H * W
    SH = jnp.stack([_shift_matrix(H, kh - P) for kh in range(K)])  # (K, H, H)
    SW = jnp.stack([_shift_matrix(W, kw - P) for kw in range(K)])  # (K, W, W)
    blocks = []
    for ch in range(2):
        # block[hi, wi, ho, wo] = sum_{kh,kw} w[ch,kh,kw] * SH[kh,hi,ho] * SW[kw,wi,wo]
        blk = jnp.einsum("ab,aij,bkl->ikjl", w_sa[ch].astype(jnp.float32), SH, SW,
                         precision=_HP).reshape(HW, HW)
        blocks.append(blk)
    return jnp.concatenate(blocks, axis=0)  # (2*HW, HW): rows = [mean-channel | max-channel]


# ----------------------------------------------------------------------------- fused kernel
def _cbam_kernel(x_ref, w1t_ref, w2t_ref, wconv_ref, y_ref):
    # x_ref: (bt, C, HW)  w1t_ref: (C, Cr)  w2t_ref: (Cr, C)  wconv_ref: (2*HW, HW)
    # y_ref: (bt, C, HW)
    x = x_ref[...].astype(jnp.float32)                     # (bt, C, HW)
    bt = x.shape[0]

    # ---- Channel attention (pools -> shared MLP on MXU -> sigmoid gate) ----
    avg = jnp.mean(x, axis=2)                              # (bt, C)  lane reduce
    mx = jnp.max(x, axis=2)                                # (bt, C)
    pools = jnp.concatenate([avg, mx], axis=0)             # (2*bt, C)  one fused MLP pass
    h = jnp.maximum(
        jnp.dot(pools, w1t_ref[...], precision=_HP,
                preferred_element_type=jnp.float32), 0.0)  # (2*bt, Cr)
    z = jnp.dot(h, w2t_ref[...], precision=_HP,
                preferred_element_type=jnp.float32)        # (2*bt, C)
    ca = jax.nn.sigmoid(z[:bt] + z[bt:])                   # (bt, C)
    out1 = x * ca[:, :, None]                              # (bt, C, HW) channel-gated

    # ---- Spatial attention (channel mean/max maps -> 7x7 conv as one MXU matmul) ----
    mean_map = jnp.mean(out1, axis=1)                      # (bt, HW)  sublane reduce
    max_map = jnp.max(out1, axis=1)                        # (bt, HW)
    maps = jnp.concatenate([mean_map, max_map], axis=1)    # (bt, 2*HW)
    conv = jnp.dot(maps, wconv_ref[...], precision=_HP,
                   preferred_element_type=jnp.float32)     # (bt, HW)
    sa = jax.nn.sigmoid(conv)                              # (bt, HW)

    y_ref[...] = (out1 * sa[:, None, :]).astype(y_ref.dtype)   # lane-dense store


# ----------------------------------------------------------------------------- wrapper
def _pick_batch_tile(B, C, HW, itemsize=4, target_bytes=512 * 1024, min_steps=2):
    """Grow the batch tile so per-step payload amortizes pipeline overhead, but keep at
    least `min_steps` grid steps when possible so v7x megacore can shard the batch axis."""
    per = C * HW * itemsize
    bt = max(1, min(B, max(1, target_bytes // per)))
    if B >= min_steps:
        bt = max(1, min(bt, B // min_steps))
    while B % bt:
        bt -= 1
    return bt


def cbam_forward(x, w1, w2, w_sa):
    """x: (B, C, H, W) f32.  w1: (Cr, C), w2: (C, Cr), w_sa: (2, K, K)."""
    B, C, H, W = x.shape
    Cr = w1.shape[0]
    HW = H * W

    xf = x.reshape(B, C, HW)                       # lane-dense activation layout
    w1t = jnp.transpose(w1)                        # (C, Cr)
    w2t = jnp.transpose(w2)                        # (Cr, C)
    wconv = build_spatial_conv_matrix(w_sa, H, W)  # (2*HW, HW) weight-only Toeplitz matrix

    bt = _pick_batch_tile(B, C, HW)
    grid = (B // bt,)

    y = pl.pallas_call(
        _cbam_kernel,
        out_shape=jax.ShapeDtypeStruct((B, C, HW), jnp.float32),
        grid=grid,
        in_specs=[
            pl.BlockSpec((bt, C, HW), lambda i: (i, 0, 0)),
            pl.BlockSpec((C, Cr), lambda i: (0, 0)),
            pl.BlockSpec((Cr, C), lambda i: (0, 0)),
            pl.BlockSpec((2 * HW, HW), lambda i: (0, 0)),
        ],
        out_specs=pl.BlockSpec((bt, C, HW), lambda i: (i, 0, 0)),
        compiler_params=pltpu.CompilerParams(dimension_semantics=("parallel",)),
    )(xf, w1t, w2t, wconv)
    return y.reshape(B, C, H, W)


# ----------------------------------------------------------------------------- reference
def cbam_reference(x, w1, w2, w_sa):
    """Pure-JAX reference mirroring the PyTorch module (f32, explicit padded 7x7 conv)."""
    B, C, H, W = x.shape
    K = w_sa.shape[-1]
    P = (K - 1) // 2
    avg = x.mean(axis=(2, 3))
    mx = x.max(axis=(2, 3))

    def mlp(v):
        h = jnp.maximum(jnp.dot(v, w1.T, precision=_HP), 0.0)
        return jnp.dot(h, w2.T, precision=_HP)

    ca = jax.nn.sigmoid(mlp(avg) + mlp(mx))                 # (B, C)
    out1 = x * ca[:, :, None, None]
    maps = jnp.concatenate(
        [out1.mean(axis=1, keepdims=True), out1.max(axis=1, keepdims=True)], axis=1)
    mp = jnp.pad(maps, ((0, 0), (0, 0), (P, P), (P, P)))
    conv = jnp.zeros((B, H, W), jnp.float32)
    for ch in range(2):
        for kh in range(K):
            for kw in range(K):
                conv = conv + w_sa[ch, kh, kw] * mp[:, ch, kh:kh + H, kw:kw + W]
    sa = jax.nn.sigmoid(conv)[:, None, :, :]
    return out1 * sa


if __name__ == "__main__":
    B, C, H, W = 2, 32, 16, 16
    reduction = 16
    Cr = C // reduction
    K = 7

    key = jax.random.PRNGKey(0)
    kx, k1, k2, k3 = jax.random.split(key, 4)
    x = jax.random.normal(kx, (B, C, H, W), jnp.float32)
    w1 = jax.random.normal(k1, (Cr, C), jnp.float32) * 0.2      # Conv2d(C, C//r, 1, bias=False)
    w2 = jax.random.normal(k2, (C, Cr), jnp.float32) * 0.2      # Conv2d(C//r, C, 1, bias=False)
    w_sa = jax.random.normal(k3, (2, K, K), jnp.float32) * 0.2  # Conv2d(2, 1, 7, pad=3, bias=False)

    y = cbam_forward(x, w1, w2, w_sa)
    jax.block_until_ready(y)

    y_ref = cbam_reference(x, w1, w2, w_sa)
    assert y.shape == (B, C, H, W)
    max_err = float(jnp.max(jnp.abs(y - y_ref)))
    assert jnp.allclose(y, y_ref, atol=2e-3, rtol=2e-3), max_err
    print("KERNEL_OK")
</pallas_src>

<mosaic_0001>
module attributes {stable_mosaic.version = 11 : i64} {
  func.func @_cbam_kernel(%arg0: i32, %arg1: memref<1x32x256xf32, #tpu.memory_space<vmem>>, %arg2: memref<32x2xf32, #tpu.memory_space<vmem>>, %arg3: memref<2x32xf32, #tpu.memory_space<vmem>>, %arg4: memref<512x256xf32, #tpu.memory_space<vmem>>, %arg5: memref<1x32x256xf32, #tpu.memory_space<vmem>>) attributes {dimension_semantics = [#tpu.dimension_semantics<parallel>], iteration_bounds = array<i64: 2>, scalar_prefetch = 0 : i64, scratch_operands = 0 : i64, tpu.core_type = #tpu.core_type<tc>, window_params = [{transform_indices = @transform_0, window_bounds = array<i64: 1, 32, 256>}, {pipeline_mode = #tpu.pipeline_mode<synchronous>, transform_indices = @transform_1, window_bounds = array<i64: 32, 2>}, {pipeline_mode = #tpu.pipeline_mode<synchronous>, transform_indices = @transform_2, window_bounds = array<i64: 2, 32>}, {pipeline_mode = #tpu.pipeline_mode<synchronous>, transform_indices = @transform_3, window_bounds = array<i64: 512, 256>}, {transform_indices = @transform_4, window_bounds = array<i64: 1, 32, 256>}]} {
    %c0 = arith.constant 0 : index
    %c0_0 = arith.constant 0 : index
    %c0_1 = arith.constant 0 : index
    %0 = vector.load %arg1[%c0, %c0_0, %c0_1] : memref<1x32x256xf32, #tpu.memory_space<vmem>>, vector<1x32x256xf32>
    %cst = arith.constant dense<0.000000e+00> : vector<1x32xf32>
    %1 = vector.multi_reduction <add>, %0, %cst [2] : vector<1x32x256xf32> to vector<1x32xf32>
    %cst_2 = arith.constant 2.560000e+02 : f32
    %2 = vector.broadcast %cst_2 : f32 to vector<1x32xf32>
    %3 = arith.divf %1, %2 : vector<1x32xf32>
    %cst_3 = arith.constant dense<0xFF800000> : vector<1x32xf32>
    %4 = vector.multi_reduction <maximumf>, %0, %cst_3 [2] : vector<1x32x256xf32> to vector<1x32xf32>
    %5 = tpu.concatenate %3, %4 in 0 : vector<1x32xf32>, vector<1x32xf32> -> vector<2x32xf32>
    %c0_4 = arith.constant 0 : index
    %c0_5 = arith.constant 0 : index
    %6 = vector.load %arg2[%c0_4, %c0_5] : memref<32x2xf32, #tpu.memory_space<vmem>>, vector<32x2xf32>
    %cst_6 = arith.constant dense<0.000000e+00> : vector<2x2xf32>
    %7 = tpu.matmul %5, %6, %cst_6 {dimension_numbers = #tpu.dot_dimension_numbers<[1], [0], [0], [1], [0, 0, 1, 1], [], []>, precision = #tpu.contract_precision<fp32>} : vector<2x32xf32>, vector<32x2xf32>, vector<2x2xf32> -> vector<2x2xf32>
    %cst_7 = arith.constant 0.000000e+00 : f32
    %8 = vector.broadcast %cst_7 : f32 to vector<2x2xf32>
    %9 = arith.maximumf %7, %8 : vector<2x2xf32>
    %c0_8 = arith.constant 0 : index
    %c0_9 = arith.constant 0 : index
    %10 = vector.load %arg3[%c0_8, %c0_9] : memref<2x32xf32, #tpu.memory_space<vmem>>, vector<2x32xf32>
    %cst_10 = arith.constant dense<0.000000e+00> : vector<2x32xf32>
    %11 = tpu.matmul %9, %10, %cst_10 {dimension_numbers = #tpu.dot_dimension_numbers<[1], [0], [0], [1], [0, 0, 1, 1], [], []>, precision = #tpu.contract_precision<fp32>} : vector<2x2xf32>, vector<2x32xf32>, vector<2x32xf32> -> vector<2x32xf32>
    %12 = vector.extract_strided_slice %11 {offsets = [0, 0], sizes = [1, 32], strides = [1, 1]} : vector<2x32xf32> to vector<1x32xf32>
    %13 = vector.extract_strided_slice %11 {offsets = [1, 0], sizes = [1, 32], strides = [1, 1]} : vector<2x32xf32> to vector<1x32xf32>
    %14 = arith.addf %12, %13 : vector<1x32xf32>
    %15 = arith.negf %14 : vector<1x32xf32>
    %16 = math.exp %15 : vector<1x32xf32>
    %cst_11 = arith.constant 1.000000e+00 : f32
    %17 = vector.broadcast %cst_11 : f32 to vector<1x32xf32>
    %18 = arith.addf %17, %16 : vector<1x32xf32>
    %19 = arith.divf %17, %18 : vector<1x32xf32>
    %20 = vector.shape_cast %19 : vector<1x32xf32> to vector<1x32x1xf32>
    %21 = vector.broadcast %20 : vector<1x32x1xf32> to vector<1x32x256xf32>
    %22 = arith.mulf %0, %21 : vector<1x32x256xf32>
    %cst_12 = arith.constant dense<0.000000e+00> : vector<1x256xf32>
    %23 = vector.multi_reduction <add>, %22, %cst_12 [1] : vector<1x32x256xf32> to vector<1x256xf32>
    %cst_13 = arith.constant 3.200000e+01 : f32
    %24 = vector.broadcast %cst_13 : f32 to vector<1x256xf32>
    %25 = arith.divf %23, %24 : vector<1x256xf32>
    %cst_14 = arith.constant dense<0xFF800000> : vector<1x256xf32>
    %26 = vector.multi_reduction <maximumf>, %22, %cst_14 [1] : vector<1x32x256xf32> to vector<1x256xf32>
    %27 = tpu.concatenate %25, %26 in 1 : vector<1x256xf32>, vector<1x256xf32> -> vector<1x512xf32>
    %c0_15 = arith.constant 0 : index
    %c0_16 = arith.constant 0 : index
    %28 = vector.load %arg4[%c0_15, %c0_16] : memref<512x256xf32, #tpu.memory_space<vmem>>, vector<512x256xf32>
    %cst_17 = arith.constant dense<0.000000e+00> : vector<1x256xf32>
    %29 = tpu.matmul %27, %28, %cst_17 {dimension_numbers = #tpu.dot_dimension_numbers<[1], [0], [0], [1], [0, 0, 1, 1], [], []>, precision = #tpu.contract_precision<fp32>} : vector<1x512xf32>, vector<512x256xf32>, vector<1x256xf32> -> vector<1x256xf32>
    %30 = arith.negf %29 : vector<1x256xf32>
    %31 = math.exp %30 : vector<1x256xf32>
    %cst_18 = arith.constant 1.000000e+00 : f32
    %32 = vector.broadcast %cst_18 : f32 to vector<1x256xf32>
    %33 = arith.addf %32, %31 : vector<1x256xf32>
    %34 = arith.divf %32, %33 : vector<1x256xf32>
    %35 = vector.shape_cast %34 : vector<1x256xf32> to vector<1x1x256xf32>
    %36 = vector.broadcast %35 : vector<1x1x256xf32> to vector<1x32x256xf32>
    %37 = arith.mulf %22, %36 : vector<1x32x256xf32>
    %c0_19 = arith.constant 0 : index
    %c0_20 = arith.constant 0 : index
    %c0_21 = arith.constant 0 : index
    %38 = vector.load %arg5[%c0_19, %c0_20, %c0_21] : memref<1x32x256xf32, #tpu.memory_space<vmem>>, vector<1x32x256xf32>
    tpu.vector_store %arg5[%c0_19, %c0_20, %c0_21], %37 {strides = array<i32>} : memref<1x32x256xf32, #tpu.memory_space<vmem>>, vector<1x32x256xf32>,
    return
  }
  func.func @transform_0(%arg0: i32) -> (i32, i32, i32) {
    %c0_i32 = arith.constant 0 : i32
    %c0_i32_0 = arith.constant 0 : i32
    %c0_i32_1 = arith.constant 0 : i32
    return %arg0, %c0_i32, %c0_i32_0 : i32, i32, i32
  }
  func.func @transform_1(%arg0: i32) -> (i32, i32) {
    %c0_i32 = arith.constant 0 : i32
    %c0_i32_0 = arith.constant 0 : i32
    %c0_i32_1 = arith.constant 0 : i32
    return %c0_i32, %c0_i32_0 : i32, i32
  }
  func.func @transform_2(%arg0: i32) -> (i32, i32) {
    %c0_i32 = arith.constant 0 : i32
    %c0_i32_0 = arith.constant 0 : i32
    %c0_i32_1 = arith.constant 0 : i32
    return %c0_i32, %c0_i32_0 : i32, i32
  }
  func.func @transform_3(%arg0: i32) -> (i32, i32) {
    %c0_i32 = arith.constant 0 : i32
    %c0_i32_0 = arith.constant 0 : i32
    %c0_i32_1 = arith.constant 0 : i32
    return %c0_i32, %c0_i32_0 : i32, i32
  }
  func.func @transform_4(%arg0: i32) -> (i32, i32, i32) {
    %c0_i32 = arith.constant 0 : i32
    %c0_i32_0 = arith.constant 0 : i32
    %c0_i32_1 = arith.constant 0 : i32
    return %arg0, %c0_i32, %c0_i32_0 : i32, i32, i32
  }
}

</mosaic_0001>

<llo_original>
// kernel: tpu_custom_call.1
$region0: #{tpu_custom_call.1}
  #allocation0 [shape = 'u32[]', space=smem, size = 0x4, offset = 0x4, fixed_abs, tag = 'smem constant byte address 0x4 - core index']
  #allocation1 [shape = 'u32[144,128]{1,0:T(1,128)}', space=vmem, size = 0x12000, scoped, tag = 'internal scratch']
  %s0 = inlined_call_operand.hbm [shape: f32[2,32,256], index: 0, kind: input, shape index: {}]
  %s1 = inlined_call_operand.vmem [shape: f32[32,2], index: 1, kind: input, shape index: {}]
  %s2 = inlined_call_operand.vmem [shape: f32[2,32], index: 2, kind: input, shape index: {}]
  %s3 = inlined_call_operand.hbm [shape: f32[512,256], index: 3, kind: input, shape index: {}]
  %s4 = inlined_call_operand.hbm [shape: f32[2,32,256], index: 4, kind: output, shape index: {}]
  %s5 = sld [smem:[#allocation0]]
  $region57: #{tpu_custom_call.1} parent=0
    _
  %s7 = ssub.s32 1, %s5
  %s8 = scalar_select 0, %s7, %s5
  $region1: #{tpu_custom_call.1} parent=0
    #allocation2 [shape = 'u8[65536]{0}', space=vmem, size = 0x10000, scoped, tag = 'input window, operand 0']
    #allocation3 [shape = 's32[2]{0}', space=sflag, size = 0x8, scoped, tag = 'scoped memory for tpu_custom_call.1']
    #allocation4 [shape = 's32[2]{0}', space=sflag, size = 0x8, scoped, tag = 'scoped memory for tpu_custom_call.1']
    #allocation5 [shape = 'u8[524288]{0}', space=vmem, size = 0x80000, scoped, tag = 'input window, operand 3, single buffered']
    #allocation6 [shape = 's32[1]{0}', space=sflag, size = 0x4, scoped, tag = 'scoped memory for tpu_custom_call.1']
    #allocation7 [shape = 'u8[65536]{0}', space=vmem, size = 0x10000, scoped, tag = 'output window, operand 0']
    %9 = vsyncpa [#allocation3], 0
    %s10 = scalar_lea.sflag [#allocation3], 1
    %11 = vsyncpa %s10, 0
    %12 = vsyncpa [#allocation6], 0
    %13 = vsyncpa [#allocation4], 0
    %s14 = scalar_lea.sflag [#allocation4], 1
    %15 = vsyncpa %s14, 0
    loop: start=0, step=1, limit=4
    $region2: #{tpu_custom_call.1} parent=1 // loop_pre_header
      _
    $region3: #{tpu_custom_call.1} parent=1 // loop_header
      %s17 = sphi 0, %s21
      %p18 = scmp.ge.s32.totalorder %s17, 4
      %s27 = sphi 0, %s29
      %s30 = sphi 0, %s27
      %s31 = sphi 0, %s30
      %s47 = sphi 0, %s31
      %s51 = sphi 0, %s51
      %s53 = sphi 0, %s51
      %s54 = sphi 0, %s53
      %s68 = sphi 0, %s54
      %s72 = sphi 0, %s72
      %s74 = sphi 0, %s72
      %s75 = sphi 0, %s74
      %s89 = sphi 0, %s75
      %s93 = sphi 0, %s93
      %s95 = sphi 0, %s93
      %s96 = sphi 0, %s95
      %s110 = sphi 0, %s96
      %s116 = sphi 0, %s118
      %s119 = sphi 0, %s116
      %s120 = sphi 0, %s119
      %s136 = sphi 0, %s120
    $region4: #{tpu_custom_call.1} parent=1 // loop_header_branch
      %20 = sbr.rel (%p18) target = $region8
    $region5: #{tpu_custom_call.1} parent=1 // loop_body
      %s22 = ssub.s32 %s17, 1
      %s23 = ssub.s32 %s17, 2
      %s24 = sadd.s32 %s17, 1
      %s25 = ssub.s32 %s17, %s24
      %p26 = scmp.eq.s32.totalorder %s25, 0
      %s28 = sadd.s32 %s27, 1
      %s29 = scalar_select %p26, %s27, %s28
      %p32 = pneg %p26
      %p33 = scmp.eq.s32.totalorder %s17, 1
      %p34 = por %p32, %p33
      %p35 = scmp.ne.s32.totalorder %s27, %s30
      %p36 = scmp.eq.s32.totalorder %s17, 0
      %p37 = por %p35, %p36
      %p38 = scmp.ne.s32.totalorder %s27, %s30
      %p39 = scmp.eq.s32.totalorder %s22, 1
      %p40 = por %p38, %p39
      %p41 = scmp.ne.s32.totalorder %s30, %s31
      %p42 = scmp.eq.s32.totalorder %s22, 0
      %p43 = por %p41, %p42
      %p44 = scmp.ne.s32.totalorder %s30, %s31
      %p45 = scmp.eq.s32.totalorder %s23, 1
      %p46 = por %p44, %p45
      %p48 = scmp.ne.s32.totalorder %s31, %s47
      %p49 = scmp.eq.s32.totalorder %s23, 0
      %p50 = por %p48, %p49
      %s52 = sadd.s32 %s51, 1
      %p55 = scmp.eq.s32.totalorder %s17, 1
      %p56 = scmp.ne.s32.totalorder %s51, %s53
      %p57 = scmp.eq.s32.totalorder %s17, 0
      %p58 = por %p56, %p57
      %p59 = scmp.ne.s32.totalorder %s51, %s53
      %p60 = scmp.eq.s32.totalorder %s22, 1
      %p61 = por %p59, %p60
      %p62 = scmp.ne.s32.totalorder %s53, %s54
      %p63 = scmp.eq.s32.totalorder %s22, 0
      %p64 = por %p62, %p63
      %p65 = scmp.ne.s32.totalorder %s53, %s54
      %p66 = scmp.eq.s32.totalorder %s23, 1
      %p67 = por %p65, %p66
      %p69 = scmp.ne.s32.totalorder %s54, %s68
      %p70 = scmp.eq.s32.totalorder %s23, 0
      %p71 = por %p69, %p70
      %s73 = sadd.s32 %s72, 1
      %p76 = scmp.eq.s32.totalorder %s17, 1
      %p77 = scmp.ne.s32.totalorder %s72, %s74
      %p78 = scmp.eq.s32.totalorder %s17, 0
      %p79 = por %p77, %p78
      %p80 = scmp.ne.s32.totalorder %s72, %s74
      %p81 = scmp.eq.s32.totalorder %s22, 1
      %p82 = por %p80, %p81
      %p83 = scmp.ne.s32.totalorder %s74, %s75
      %p84 = scmp.eq.s32.totalorder %s22, 0
      %p85 = por %p83, %p84
      %p86 = scmp.ne.s32.totalorder %s74, %s75
      %p87 = scmp.eq.s32.totalorder %s23, 1
      %p88 = por %p86, %p87
      %p90 = scmp.ne.s32.totalorder %s75, %s89
      %p91 = scmp.eq.s32.totalorder %s23, 0
      %p92 = por %p90, %p91
      %s94 = sadd.s32 %s93, 1
      %p97 = scmp.eq.s32.totalorder %s17, 1
      %p98 = scmp.ne.s32.totalorder %s93, %s95
      %p99 = scmp.eq.s32.totalorder %s17, 0
      %p100 = por %p98, %p99
      %p101 = scmp.ne.s32.totalorder %s93, %s95
      %p102 = scmp.eq.s32.totalorder %s22, 1
      %p103 = por %p101, %p102
      %p104 = scmp.ne.s32.totalorder %s95, %s96
      %p105 = scmp.eq.s32.totalorder %s22, 0
      %p106 = por %p104, %p105
      %p107 = scmp.ne.s32.totalorder %s95, %s96
      %p108 = scmp.eq.s32.totalorder %s23, 1
      %p109 = por %p107, %p108
      %p111 = scmp.ne.s32.totalorder %s96, %s110
      %p112 = scmp.eq.s32.totalorder %s23, 0
      %p113 = por %p111, %p112
      %s114 = ssub.s32 %s17, %s24
      %p115 = scmp.eq.s32.totalorder %s114, 0
      %s117 = sadd.s32 %s116, 1
      %s118 = scalar_select %p115, %s116, %s117
      %p121 = pneg %p115
      %p122 = scmp.eq.s32.totalorder %s17, 1
      %p123 = por %p121, %p122
      %p124 = scmp.ne.s32.totalorder %s116, %s119
      %p125 = scmp.eq.s32.totalorder %s17, 0
      %p126 = por %p124, %p125
      %p127 = scmp.ne.s32.totalorder %s116, %s119
      %p128 = scmp.eq.s32.totalorder %s22, 1
      %p129 = por %p127, %p128
      %p130 = scmp.ne.s32.totalorder %s119, %s120
      %p131 = scmp.eq.s32.totalorder %s22, 0
      %p132 = por %p130, %p131
      %p133 = scmp.ne.s32.totalorder %s119, %s120
      %p134 = scmp.eq.s32.totalorder %s23, 1
      %p135 = por %p133, %p134
      %p137 = scmp.ne.s32.totalorder %s120, %s136
      %p138 = scmp.eq.s32.totalorder %s23, 0
      %p139 = por %p137, %p138
      %p140 = scmp.le.s32.totalorder 1, %s17
      %p141 = scmp.lt.s32.totalorder %s17, 3
      %p142 = pnand %p140, %p141
      %p143 = pneg %p142
      // Predicated region
      $region9: #{tpu_custom_call.1} parent=5 // pred_check
        _
      $region10: #{tpu_custom_call.1} parent=5 // pred_check_branch
        %145 = sbr.rel (%p142) target = $region12
      $region11: #{tpu_custom_call.1} parent=5 // pred_region
        %s146 = ssub.s32 %s17, 1
        // Predicated region
        $region13: #{tpu_custom_call.1} parent=11 // pred_check
          %p147 = pneg %p64
        $region14: #{tpu_custom_call.1} parent=11 // pred_check_branch
          %149 = sbr.rel (%p147) target = $region16
        $region15: #{tpu_custom_call.1} parent=11 // pred_region
          _
        $region16: #{tpu_custom_call.1} parent=11 // pred_fallthru
          _
        // Predicated region
        $region17: #{tpu_custom_call.1} parent=11 // pred_check
          %p150 = pneg %p85
        $region18: #{tpu_custom_call.1} parent=11 // pred_check_branch
          %152 = sbr.rel (%p150) target = $region20
        $region19: #{tpu_custom_call.1} parent=11 // pred_region
          _
        $region20: #{tpu_custom_call.1} parent=11 // pred_fallthru
          _
        // Predicated region
        $region21: #{tpu_custom_call.1} parent=11 // pred_check
          %p153 = pneg %p106
        $region22: #{tpu_custom_call.1} parent=11 // pred_check_branch
          %155 = sbr.rel (%p153) target = $region24
        $region23: #{tpu_custom_call.1} parent=11 // pred_region
          %s157 = ssub.s32 16384, 16384
          %158 = vsyncadd [#allocation6], %s157
          %s159 = sshll.u32 [#allocation5], 4
          %s160 = int_to_ptr.vmem [resolvable:$true] %s159
          %165 = dma.hbm_to_vmem [thread:$0]  %s3, 16384, %s160, [#allocation6], 256, 256, 16
        $region24: #{tpu_custom_call.1} parent=11 // pred_fallthru
          _
      $region12: #{tpu_custom_call.1} parent=5 // pred_fallthru
        _
      %p166 = scmp.lt.s32.totalorder %s17, 2
      // Predicated region
      $region25: #{tpu_custom_call.1} parent=5 // pred_check
        %p167 = pneg %p166
      $region26: #{tpu_custom_call.1} parent=5 // pred_check_branch
        %169 = sbr.rel (%p167) target = $region28
      $region27: #{tpu_custom_call.1} parent=5 // pred_region
        // Predicated region
        $region29: #{tpu_custom_call.1} parent=27 // pred_check
          %p170 = pneg %p37
        $region30: #{tpu_custom_call.1} parent=27 // pred_check_branch
          %172 = sbr.rel (%p170) target = $region32
        $region31: #{tpu_custom_call.1} parent=27 // pred_region
          %s173 = sand.u32 %s27, 1
          %s174 = scalar_lea.sflag [#allocation3], %s173
          %s175 = sand.u32 %s27, 1
          %s176 = smul.addr %s175, 64
          %s177 = scalar_lea.vmem [#allocation2], %s176
          %s179 = ssub.s32 1024, 1024
          %180 = vsyncadd %s174, %s179
          %s181 = smul.addr %s17, 8
          %s182 = smul.addr %s181, 128
          %s183 = scalar_lea.hbm %s0, %s182
          %s184 = sshll.u32 %s177, 4
          %s185 = int_to_ptr.vmem [resolvable:$true] %s184
          %190 = dma.hbm_to_vmem [thread:$0]  %s183, 1024, %s185, %s174, 256, 256, 16
        $region32: #{tpu_custom_call.1} parent=27 // pred_fallthru
          _
      $region28: #{tpu_custom_call.1} parent=5 // pred_fallthru
        _
      %p191 = scmp.le.s32.totalorder 1, %s17
      %p192 = scmp.lt.s32.totalorder %s17, 3
      %p193 = pnand %p191, %p192
      %p194 = pneg %p193
      // Predicated region
      $region33: #{tpu_custom_call.1} parent=5 // pred_check
        _
      $region34: #{tpu_custom_call.1} parent=5 // pred_check_branch
        %196 = sbr.rel (%p193) target = $region36
      $region35: #{tpu_custom_call.1} parent=5 // pred_region
        %s197 = ssub.s32 %s17, 1
        %s198 = sand.u32 %s30, 1
        %s199 = scalar_lea.sflag [#allocation3], %s198
        %s200 = sand.u32 %s30, 1
        %s201 = smul.addr %s200, 64
        %s202 = scalar_lea.vmem [#allocation2], %s201
        // Predicated region
        $region37: #{tpu_custom_call.1} parent=35 // pred_check
          %p203 = pneg %p43
        $region38: #{tpu_custom_call.1} parent=35 // pred_check_branch
          %205 = sbr.rel (%p203) target = $region40
        $region39: #{tpu_custom_call.1} parent=35 // pred_region
          %206 = dma.done %s199, 1024
        $region40: #{tpu_custom_call.1} parent=35 // pred_fallthru
          _
        // Predicated region
        $region41: #{tpu_custom_call.1} parent=35 // pred_check
          %p207 = pneg %p106
        $region42: #{tpu_custom_call.1} parent=35 // pred_check_branch
          %209 = sbr.rel (%p207) target = $region44
        $region43: #{tpu_custom_call.1} parent=35 // pred_region
          %210 = dma.done [#allocation6], 16384
        $region44: #{tpu_custom_call.1} parent=35 // pred_fallthru
          _
        %s211 = sand.u32 %s30, 1
        %s212 = scalar_lea.sflag [#allocation3], %s211
        %s213 = sand.u32 %s30, 1
        %s214 = smul.addr %s213, 64
        %s215 = scalar_lea.vmem [#allocation2], %s214
        %p216 = pneg %p43
        %p217 = pneg %p40
        %p218 = pneg %p64
        %p219 = pneg %p61
        %p220 = pneg %p85
        %p221 = pneg %p82
        %p222 = pneg %p106
        %p223 = pneg %p103
        %p224 = pneg %p132
        %p225 = pneg %p129
        %s226 = sand.u32 %s119, 1
        %s227 = scalar_lea.sflag [#allocation4], %s226
        %s228 = sand.u32 %s119, 1
        %s229 = smul.addr %s228, 64
        %s230 = scalar_lea.vmem [#allocation7], %s229
        %v231 = vld [vmem:[%s202] sm:$0xff]
        %v232 = vld [vmem:[%s202 + $0x8] sm:$0xff]
        %v233 = vld [vmem:[%s202 + $0x10] sm:$0xff]
        %v234 = vld [vmem:[%s202 + $0x18] sm:$0xff]
        %v235 = vld [vmem:[%s202 + $0x20] sm:$0xff]
        %v236 = vld [vmem:[%s202 + $0x28] sm:$0xff]
        %v237 = vld [vmem:[%s202 + $0x30] sm:$0xff]
        %v238 = vld [vmem:[%s202 + $0x38] sm:$0xff]
        %v239 = vadd.f32 %v231, %v232
        %240 = vadd.xlane.f32.xlu0 %v239
        %v241 = vpop.xlane.xlu0 %240
        %v242 = vadd.f32 %v233, %v234
        %243 = vadd.xlane.f32.xlu0 %v242
        %v244 = vpop.xlane.xlu0 %243
        %v245 = vadd.f32 %v235, %v236
        %246 = vadd.xlane.f32.xlu0 %v245
        %v247 = vpop.xlane.xlu0 %246
        %v248 = vadd.f32 %v237, %v238
        %249 = vadd.xlane.f32.xlu0 %v248
        %v250 = vpop.xlane.xlu0 %249
        %v251 = vrcp.pop 256.0
        %v252 = vmul.f32 %v241, %v251
        %v253 = vmul.f32 %v244, %v251
        %v254 = vmul.f32 %v247, %v251
        %v255 = vmul.f32 %v250, %v251
        %v256 = vmax.f32 %v231, %v232
        %257 = vmax.xlane.f32.xlu0 %v256
        %v258 = vpop.xlane.xlu0 %257
        %v259 = vmax.f32 %v233, %v234
        %260 = vmax.xlane.f32.xlu0 %v259
        %v261 = vpop.xlane.xlu0 %260
        %v262 = vmax.f32 %v235, %v236
        %263 = vmax.xlane.f32.xlu0 %v262
        %v264 = vpop.xlane.xlu0 %263
        %v265 = vmax.f32 %v237, %v238
        %266 = vmax.xlane.f32.xlu0 %v265
        %v267 = vpop.xlane.xlu0 %266
        %v272 = vlaneseq
        %v273 = vand.u32 %v272, 127
        %v274 = vlaneseq
        %v275 = vshrl.u32 %v274, 7
        %v276 = vsub.s32 %v273, %v275
        %v277 = vrot.slane %v252, %v276
        %v278 = vadd.s32 %v273, 4294967288
        %v279 = vlaneseq
        %v280 = vshrl.u32 %v279, 7
        %v281 = vsub.s32 %v278, %v280
        %v282 = vrot.slane %v253, %v281
        %vm283 = vcmask 130112
        %v284 = vsel %vm283, %v282, %v277
        %v285 = vadd.s32 %v273, 4294967280
        %v286 = vlaneseq
        %v287 = vshrl.u32 %v286, 7
        %v288 = vsub.s32 %v285, %v287
        %v289 = vrot.slane %v254, %v288
        %vm290 = vcmask 195712
        %v291 = vsel %vm290, %v289, %v284
        %v292 = vadd.s32 %v273, 4294967272
        %v293 = vlaneseq
        %v294 = vshrl.u32 %v293, 7
        %v295 = vsub.s32 %v292, %v294
        %v296 = vrot.slane %v255, %v295
        %vm297 = vcmask 261312
        %v298 = vsel %vm297, %v296, %v291
        %v304 = vlaneseq
        %v305 = vshrl.u32 %v304, 7
        %v306 = vsub.s32 %v273, %v305
        %v307 = vrot.slane %v258, %v306
        %v308 = vlaneseq
        %v309 = vshrl.u32 %v308, 7
        %v310 = vsub.s32 %v278, %v309
        %v311 = vrot.slane %v261, %v310
        %v312 = vsel %vm283, %v311, %v307
        %v313 = vlaneseq
        %v314 = vshrl.u32 %v313, 7
        %v315 = vsub.s32 %v285, %v314
        %v316 = vrot.slane %v264, %v315
        %v317 = vsel %vm290, %v316, %v312
        %v318 = vlaneseq
        %v319 = vshrl.u32 %v318, 7
        %v320 = vsub.s32 %v292, %v319
        %v321 = vrot.slane %v267, %v320
        %v322 = vsel %vm297, %v321, %v317
        %vm324 = vcmask 1040384
        %v325 = vsel %vm324, %v298, %v322
        %v326 = vld [vmem:[%s1] sm:$0xff]
        %v327 = vld [vmem:[%s1 + $0x8] sm:$0xff]
        %v328 = vld [vmem:[%s1 + $0x10] sm:$0xff]
        %v329 = vld [vmem:[%s1 + $0x18] sm:$0xff]
        %vm330 = vcmask 261120
        %v332 = vsel %vm330, %v325, 0
        %334 = vmatprep.subr.mxu0 0.0
        %v335 = vand.u32 %v326, 4294901760
        %336 = vmatpush1.msra.mxu0 %v335
        %337 = vmatprep.subr.mxu0 0.0
        %v338 = vand.u32 %v327, 4294901760
        %339 = vmatpush1.msra.mxu0 %v338
        %340 = vmatprep.subr.mxu0 0.0
        %v341 = vand.u32 %v328, 4294901760
        %342 = vmatpush1.msra.mxu0 %v341
        %343 = vmatprep.subr.mxu0 0.0
        %v344 = vand.u32 %v329, 4294901760
        %345 = vmatpush1.msra.mxu0 %v344
        %346 = vmatprep.subr.mxu0 0.0
        %347 = vmatpush1.msra.mxu0 0.0
        %348 = vmatprep.subr.mxu0 0.0
        %349 = vmatpush1.msra.mxu0 0.0
        %350 = vmatprep.subr.mxu0 0.0
        %351 = vmatpush1.msra.mxu0 0.0
        %352 = vmatprep.subr.mxu0 0.0
        %353 = vmatpush1.msra.mxu0 0.0
        %354 = vmatprep.subr.mxu0 0.0
        %355 = vmatpush1.msra.mxu0 0.0
        %356 = vmatprep.subr.mxu0 0.0
        %357 = vmatpush1.msra.mxu0 0.0
        %358 = vmatprep.subr.mxu0 0.0
        %359 = vmatpush1.msra.mxu0 0.0
        %360 = vmatprep.subr.mxu0 0.0
        %361 = vmatpush1.msra.mxu0 0.0
        %362 = vmatprep.subr.mxu0 0.0
        %363 = vmatpush1.msra.mxu0 0.0
        %364 = vmatprep.subr.mxu0 0.0
        %365 = vmatpush1.msra.mxu0 0.0
        %366 = vmatprep.subr.mxu0 0.0
        %367 = vmatpush1.msra.mxu0 0.0
        %368 = vmatprep.subr.mxu0 0.0
        %369 = vmatpush1.msra.mxu0 0.0
        %370 = vmatprep.subr.mxu0 0.0
        %371 = vmatpush1.msra.mxu0 0.0
        %372 = vmatprep.subr.mxu0 0.0
        %373 = vmatpush1.msra.mxu0 0.0
        %374 = vmatprep.subr.mxu0 0.0
        %375 = vmatpush1.msra.mxu0 0.0
        %376 = vmatprep.subr.mxu0 0.0
        %377 = vmatpush1.msra.mxu0 0.0
        %378 = vmatprep.subr.mxu0 0.0
        %379 = vmatpush1.msra.mxu0 0.0
        %380 = vmatprep.subr.mxu0 0.0
        %381 = vmatpush1.msra.mxu0 0.0
        %382 = vmatprep.subr.mxu0 0.0
        %383 = vmatpush1.msra.mxu0 0.0
        %384 = vmatprep.subr.mxu0 0.0
        %385 = vmatpush1.msra.mxu0 0.0
        %386 = vmatprep.subr.mxu0 0.0
        %387 = vmatpush1.msra.mxu0 0.0
        %388 = vmatprep.subr.mxu0 0.0
        %389 = vmatpush1.msra.mxu0 0.0
        %390 = vmatprep.subr.mxu0 0.0
        %391 = vmatpush1.msra.mxu0 0.0
        %392 = vmatprep.subr.mxu0 0.0
        %393 = vmatpush1.msra.mxu0 0.0
        %394 = vmatprep.subr.mxu0 0.0
        %395 = vmatpush1.msra.mxu0 0.0
        %396 = vmatprep.subr.mxu0 0.0
        %397 = vmatpush1.msra.mxu0 0.0
        %398 = vmatprep.subr.mxu0 0.0
        %399 = vmatpush1.msra.mxu0 0.0
        %400 = vmatprep.subr.mxu0 0.0
        %401 = vmatpush1.msra.mxu0 0.0
        %402 = vmatprep.mubr.f32.mxu0 0.0
        %v403 = vand.u32 %v332, 4294901760
        %v404 = vsub.f32 %v332, %v403
        %v405 = vand.u32 %v404, 4294901760
        %v406 = vsub.f32 %v404, %v405
        %v407 = vand.u32 %v406, 4294901760
        %408 = vmatmul.mubr.f32.gmra.mrb[0].mxu0 %v407
        %v409 = vpop.f32.mrb[0].mxu0
        %v410 = vadd.f32 0.0, %v409
        %v411 = vpop.f32.mrb[0].mxu0
        %412 = vdwg.mxu0
        %413 = vmatprep.subr.mxu0 0.0
        %v414 = vand.u32 %v326, 4294901760
        %v415 = vsub.f32 %v326, %v414
        %v416 = vand.u32 %v415, 4294901760
        %v417 = vsub.f32 %v415, %v416
        %v418 = vand.u32 %v417, 4294901760
        %419 = vmatpush1.msra.mxu0 %v418
        %420 = vmatprep.subr.mxu0 0.0
        %v421 = vand.u32 %v327, 4294901760
        %v422 = vsub.f32 %v327, %v421
        %v423 = vand.u32 %v422, 4294901760
        %v424 = vsub.f32 %v422, %v423
        %v425 = vand.u32 %v424, 4294901760
        %426 = vmatpush1.msra.mxu0 %v425
        %427 = vmatprep.subr.mxu0 0.0
        %v428 = vand.u32 %v328, 4294901760
        %v429 = vsub.f32 %v328, %v428
        %v430 = vand.u32 %v429, 4294901760
        %v431 = vsub.f32 %v429, %v430
        %v432 = vand.u32 %v431, 4294901760
        %433 = vmatpush1.msra.mxu0 %v432
        %434 = vmatprep.subr.mxu0 0.0
        %v435 = vand.u32 %v329, 4294901760
        %v436 = vsub.f32 %v329, %v435
        %v437 = vand.u32 %v436, 4294901760
        %v438 = vsub.f32 %v436, %v437
        %v439 = vand.u32 %v438, 4294901760
        %440 = vmatpush1.msra.mxu0 %v439
        %441 = vmatprep.subr.mxu0 0.0
        %442 = vmatpush1.msra.mxu0 0.0
        %443 = vmatprep.subr.mxu0 0.0
        %444 = vmatpush1.msra.mxu0 0.0
        %445 = vmatprep.subr.mxu0 0.0
        %446 = vmatpush1.msra.mxu0 0.0
        %447 = vmatprep.subr.mxu0 0.0
        %448 = vmatpush1.msra.mxu0 0.0
        %449 = vmatprep.subr.mxu0 0.0
        %450 = vmatpush1.msra.mxu0 0.0
        %451 = vmatprep.subr.mxu0 0.0
        %452 = vmatpush1.msra.mxu0 0.0
        %453 = vmatprep.subr.mxu0 0.0
        %454 = vmatpush1.msra.mxu0 0.0
        %455 = vmatprep.subr.mxu0 0.0
        %456 = vmatpush1.msra.mxu0 0.0
        %457 = vmatprep.subr.mxu0 0.0
        %458 = vmatpush1.msra.mxu0 0.0
        %459 = vmatprep.subr.mxu0 0.0
        %460 = vmatpush1.msra.mxu0 0.0
        %461 = vmatprep.subr.mxu0 0.0
        %462 = vmatpush1.msra.mxu0 0.0
        %463 = vmatprep.subr.mxu0 0.0
        %464 = vmatpush1.msra.mxu0 0.0
        %465 = vmatprep.subr.mxu0 0.0
        %466 = vmatpush1.msra.mxu0 0.0
        %467 = vmatprep.subr.mxu0 0.0
        %468 = vmatpush1.msra.mxu0 0.0
        %469 = vmatprep.subr.mxu0 0.0
        %470 = vmatpush1.msra.mxu0 0.0
        %471 = vmatprep.subr.mxu0 0.0
        %472 = vmatpush1.msra.mxu0 0.0
        %473 = vmatprep.subr.mxu0 0.0
        %474 = vmatpush1.msra.mxu0 0.0
        %475 = vmatprep.subr.mxu0 0.0
        %476 = vmatpush1.msra.mxu0 0.0
        %477 = vmatprep.subr.mxu0 0.0
        %478 = vmatpush1.msra.mxu0 0.0
        %479 = vmatprep.subr.mxu0 0.0
        %480 = vmatpush1.msra.mxu0 0.0
        %481 = vmatprep.subr.mxu0 0.0
        %482 = vmatpush1.msra.mxu0 0.0
        %483 = vmatprep.subr.mxu0 0.0
        %484 = vmatpush1.msra.mxu0 0.0
        %485 = vmatprep.subr.mxu0 0.0
        %486 = vmatpush1.msra.mxu0 0.0
        %487 = vmatprep.subr.mxu0 0.0
        %488 = vmatpush1.msra.mxu0 0.0
        %489 = vmatprep.subr.mxu0 0.0
        %490 = vmatpush1.msra.mxu0 0.0
        %491 = vmatprep.subr.mxu0 0.0
        %492 = vmatpush1.msra.mxu0 0.0
        %493 = vmatprep.subr.mxu0 0.0
        %494 = vmatpush1.msra.mxu0 0.0
        %495 = vmatprep.subr.mxu0 0.0
        %496 = vmatpush1.msra.mxu0 0.0
        %497 = vmatprep.mubr.f32.mxu0 0.0
        %v498 = vand.u32 %v332, 4294901760
        %499 = vmatmul.mubr.f32.gmra.mrb[0].mxu0 %v498
        %v500 = vpop.f32.mrb[0].mxu0
        %v501 = vadd.f32 %v410, %v500
        %v502 = vpop.f32.mrb[0].mxu0
        %503 = vdwg.mxu0
        %504 = vmatprep.subr.mxu0 0.0
        %v505 = vand.u32 %v326, 4294901760
        %v506 = vsub.f32 %v326, %v505
        %507 = vmatpush1.msra.mxu0 %v506
        %508 = vmatprep.subr.mxu0 0.0
        %v509 = vand.u32 %v327, 4294901760
        %v510 = vsub.f32 %v327, %v509
        %511 = vmatpush1.msra.mxu0 %v510
        %512 = vmatprep.subr.mxu0 0.0
        %v513 = vand.u32 %v328, 4294901760
        %v514 = vsub.f32 %v328, %v513
        %515 = vmatpush1.msra.mxu0 %v514
        %516 = vmatprep.subr.mxu0 0.0
        %v517 = vand.u32 %v329, 4294901760
        %v518 = vsub.f32 %v329, %v517
        %519 = vmatpush1.msra.mxu0 %v518
        %520 = vmatprep.subr.mxu0 0.0
        %521 = vmatpush1.msra.mxu0 0.0
        %522 = vmatprep.subr.mxu0 0.0
        %523 = vmatpush1.msra.mxu0 0.0
        %524 = vmatprep.subr.mxu0 0.0
        %525 = vmatpush1.msra.mxu0 0.0
        %526 = vmatprep.subr.mxu0 0.0
        %527 = vmatpush1.msra.mxu0 0.0
        %528 = vmatprep.subr.mxu0 0.0
        %529 = vmatpush1.msra.mxu0 0.0
        %530 = vmatprep.subr.mxu0 0.0
        %531 = vmatpush1.msra.mxu0 0.0
        %532 = vmatprep.subr.mxu0 0.0
        %533 = vmatpush1.msra.mxu0 0.0
        %534 = vmatprep.subr.mxu0 0.0
        %535 = vmatpush1.msra.mxu0 0.0
        %536 = vmatprep.subr.mxu0 0.0
        %537 = vmatpush1.msra.mxu0 0.0
        %538 = vmatprep.subr.mxu0 0.0
        %539 = vmatpush1.msra.mxu0 0.0
        %540 = vmatprep.subr.mxu0 0.0
        %541 = vmatpush1.msra.mxu0 0.0
        %542 = vmatprep.subr.mxu0 0.0
        %543 = vmatpush1.msra.mxu0 0.0
        %544 = vmatprep.subr.mxu0 0.0
        %545 = vmatpush1.msra.mxu0 0.0
        %546 = vmatprep.subr.mxu0 0.0
        %547 = vmatpush1.msra.mxu0 0.0
        %548 = vmatprep.subr.mxu0 0.0
        %549 = vmatpush1.msra.mxu0 0.0
        %550 = vmatprep.subr.mxu0 0.0
        %551 = vmatpush1.msra.mxu0 0.0
        %552 = vmatprep.subr.mxu0 0.0
        %553 = vmatpush1.msra.mxu0 0.0
        %554 = vmatprep.subr.mxu0 0.0
        %555 = vmatpush1.msra.mxu0 0.0
        %556 = vmatprep.subr.mxu0 0.0
        %557 = vmatpush1.msra.mxu0 0.0
        %558 = vmatprep.subr.mxu0 0.0
        %559 = vmatpush1.msra.mxu0 0.0
        %560 = vmatprep.subr.mxu0 0.0
        %561 = vmatpush1.msra.mxu0 0.0
        %562 = vmatprep.subr.mxu0 0.0
        %563 = vmatpush1.msra.mxu0 0.0
        %564 = vmatprep.subr.mxu0 0.0
        %565 = vmatpush1.msra.mxu0 0.0
        %566 = vmatprep.subr.mxu0 0.0
        %567 = vmatpush1.msra.mxu0 0.0
        %568 = vmatprep.subr.mxu0 0.0
        %569 = vmatpush1.msra.mxu0 0.0
        %570 = vmatprep.subr.mxu0 0.0
        %571 = vmatpush1.msra.mxu0 0.0
        %572 = vmatprep.subr.mxu0 0.0
        %573 = vmatpush1.msra.mxu0 0.0
        %574 = vmatprep.subr.mxu0 0.0
        %575 = vmatpush1.msra.mxu0 0.0
        %576 = vmatprep.mubr.f32.mxu0 0.0
        %v577 = vand.u32 %v332, 4294901760
        %v578 = vsub.f32 %v332, %v577
        %579 = vmatmul.mubr.f32.gmra.mrb[0].mxu0 %v578
        %v580 = vpop.f32.mrb[0].mxu0
        %v581 = vadd.f32 %v501, %v580
        %v582 = vpop.f32.mrb[0].mxu0
        %583 = vdwg.mxu0
        %584 = vmatprep.subr.mxu0 0.0
        %v585 = vand.u32 %v326, 4294901760
        %586 = vmatpush1.msra.mxu0 %v585
        %587 = vmatprep.subr.mxu0 0.0
        %v588 = vand.u32 %v327, 4294901760
        %589 = vmatpush1.msra.mxu0 %v588
        %590 = vmatprep.subr.mxu0 0.0
        %v591 = vand.u32 %v328, 4294901760
        %592 = vmatpush1.msra.mxu0 %v591
        %593 = vmatprep.subr.mxu0 0.0
        %v594 = vand.u32 %v329, 4294901760
        %595 = vmatpush1.msra.mxu0 %v594
        %596 = vmatprep.subr.mxu0 0.0
        %597 = vmatpush1.msra.mxu0 0.0
        %598 = vmatprep.subr.mxu0 0.0
        %599 = vmatpush1.msra.mxu0 0.0
        %600 = vmatprep.subr.mxu0 0.0
        %601 = vmatpush1.msra.mxu0 0.0
        %602 = vmatprep.subr.mxu0 0.0
        %603 = vmatpush1.msra.mxu0 0.0
        %604 = vmatprep.subr.mxu0 0.0
        %605 = vmatpush1.msra.mxu0 0.0
        %606 = vmatprep.subr.mxu0 0.0
        %607 = vmatpush1.msra.mxu0 0.0
        %608 = vmatprep.subr.mxu0 0.0
        %609 = vmatpush1.msra.mxu0 0.0
        %610 = vmatprep.subr.mxu0 0.0
        %611 = vmatpush1.msra.mxu0 0.0
        %612 = vmatprep.subr.mxu0 0.0
        %613 = vmatpush1.msra.mxu0 0.0
        %614 = vmatprep.subr.mxu0 0.0
        %615 = vmatpush1.msra.mxu0 0.0
        %616 = vmatprep.subr.mxu0 0.0
        %617 = vmatpush1.msra.mxu0 0.0
        %618 = vmatprep.subr.mxu0 0.0
        %619 = vmatpush1.msra.mxu0 0.0
        %620 = vmatprep.subr.mxu0 0.0
        %621 = vmatpush1.msra.mxu0 0.0
        %622 = vmatprep.subr.mxu0 0.0
        %623 = vmatpush1.msra.mxu0 0.0
        %624 = vmatprep.subr.mxu0 0.0
        %625 = vmatpush1.msra.mxu0 0.0
        %626 = vmatprep.subr.mxu0 0.0
        %627 = vmatpush1.msra.mxu0 0.0
        %628 = vmatprep.subr.mxu0 0.0
        %629 = vmatpush1.msra.mxu0 0.0
        %630 = vmatprep.subr.mxu0 0.0
        %631 = vmatpush1.msra.mxu0 0.0
        %632 = vmatprep.subr.mxu0 0.0
        %633 = vmatpush1.msra.mxu0 0.0
        %634 = vmatprep.subr.mxu0 0.0
        %635 = vmatpush1.msra.mxu0 0.0
        %636 = vmatprep.subr.mxu0 0.0
        %637 = vmatpush1.msra.mxu0 0.0
        %638 = vmatprep.subr.mxu0 0.0
        %639 = vmatpush1.msra.mxu0 0.0
        %640 = vmatprep.subr.mxu0 0.0
        %641 = vmatpush1.msra.mxu0 0.0
        %642 = vmatprep.subr.mxu0 0.0
        %643 = vmatpush1.msra.mxu0 0.0
        %644 = vmatprep.subr.mxu0 0.0
        %645 = vmatpush1.msra.mxu0 0.0
        %646 = vmatprep.subr.mxu0 0.0
        %647 = vmatpush1.msra.mxu0 0.0
        %648 = vmatprep.subr.mxu0 0.0
        %649 = vmatpush1.msra.mxu0 0.0
        %650 = vmatprep.subr.mxu0 0.0
        %651 = vmatpush1.msra.mxu0 0.0
        %652 = vmatprep.mubr.f32.mxu0 0.0
        %v653 = vand.u32 %v332, 4294901760
        %v654 = vsub.f32 %v332, %v653
        %v655 = vand.u32 %v654, 4294901760
        %656 = vmatmul.mubr.f32.gmra.mrb[0].mxu0 %v655
        %v657 = vpop.f32.mrb[0].mxu0
        %v658 = vadd.f32 %v581, %v657
        %v659 = vpop.f32.mrb[0].mxu0
        %660 = vdwg.mxu0
        %661 = vmatprep.subr.mxu0 0.0
        %v662 = vand.u32 %v326, 4294901760
        %v663 = vsub.f32 %v326, %v662
        %v664 = vand.u32 %v663, 4294901760
        %665 = vmatpush1.msra.mxu0 %v664
        %666 = vmatprep.subr.mxu0 0.0
        %v667 = vand.u32 %v327, 4294901760
        %v668 = vsub.f32 %v327, %v667
        %v669 = vand.u32 %v668, 4294901760
        %670 = vmatpush1.msra.mxu0 %v669
        %671 = vmatprep.subr.mxu0 0.0
        %v672 = vand.u32 %v328, 4294901760
        %v673 = vsub.f32 %v328, %v672
        %v674 = vand.u32 %v673, 4294901760
        %675 = vmatpush1.msra.mxu0 %v674
        %676 = vmatprep.subr.mxu0 0.0
        %v677 = vand.u32 %v329, 4294901760
        %v678 = vsub.f32 %v329, %v677
        %v679 = vand.u32 %v678, 4294901760
        %680 = vmatpush1.msra.mxu0 %v679
        %681 = vmatprep.subr.mxu0 0.0
        %682 = vmatpush1.msra.mxu0 0.0
        %683 = vmatprep.subr.mxu0 0.0
        %684 = vmatpush1.msra.mxu0 0.0
        %685 = vmatprep.subr.mxu0 0.0
        %686 = vmatpush1.msra.mxu0 0.0
        %687 = vmatprep.subr.mxu0 0.0
        %688 = vmatpush1.msra.mxu0 0.0
        %689 = vmatprep.subr.mxu0 0.0
        %690 = vmatpush1.msra.mxu0 0.0
        %691 = vmatprep.subr.mxu0 0.0
        %692 = vmatpush1.msra.mxu0 0.0
        %693 = vmatprep.subr.mxu0 0.0
        %694 = vmatpush1.msra.mxu0 0.0
        %695 = vmatprep.subr.mxu0 0.0
        %696 = vmatpush1.msra.mxu0 0.0
        %697 = vmatprep.subr.mxu0 0.0
        %698 = vmatpush1.msra.mxu0 0.0
        %699 = vmatprep.subr.mxu0 0.0
        %700 = vmatpush1.msra.mxu0 0.0
        %701 = vmatprep.subr.mxu0 0.0
        %702 = vmatpush1.msra.mxu0 0.0
        %703 = vmatprep.subr.mxu0 0.0
        %704 = vmatpush1.msra.mxu0 0.0
        %705 = vmatprep.subr.mxu0 0.0
        %706 = vmatpush1.msra.mxu0 0.0
        %707 = vmatprep.subr.mxu0 0.0
        %708 = vmatpush1.msra.mxu0 0.0
        %709 = vmatprep.subr.mxu0 0.0
        %710 = vmatpush1.msra.mxu0 0.0
        %711 = vmatprep.subr.mxu0 0.0
        %712 = vmatpush1.msra.mxu0 0.0
        %713 = vmatprep.subr.mxu0 0.0
        %714 = vmatpush1.msra.mxu0 0.0
        %715 = vmatprep.subr.mxu0 0.0
        %716 = vmatpush1.msra.mxu0 0.0
        %717 = vmatprep.subr.mxu0 0.0
        %718 = vmatpush1.msra.mxu0 0.0
        %719 = vmatprep.subr.mxu0 0.0
        %720 = vmatpush1.msra.mxu0 0.0
        %721 = vmatprep.subr.mxu0 0.0
        %722 = vmatpush1.msra.mxu0 0.0
        %723 = vmatprep.subr.mxu0 0.0
        %724 = vmatpush1.msra.mxu0 0.0
        %725 = vmatprep.subr.mxu0 0.0
        %726 = vmatpush1.msra.mxu0 0.0
        %727 = vmatprep.subr.mxu0 0.0
        %728 = vmatpush1.msra.mxu0 0.0
        %729 = vmatprep.subr.mxu0 0.0
        %730 = vmatpush1.msra.mxu0 0.0
        %731 = vmatprep.subr.mxu0 0.0
        %732 = vmatpush1.msra.mxu0 0.0
        %733 = vmatprep.subr.mxu0 0.0
        %734 = vmatpush1.msra.mxu0 0.0
        %735 = vmatprep.subr.mxu0 0.0
        %736 = vmatpush1.msra.mxu0 0.0
        %737 = vmatprep.mubr.f32.mxu0 0.0
        %v738 = vand.u32 %v332, 4294901760
        %739 = vmatmul.mubr.f32.gmra.mrb[0].mxu0 %v738
        %v740 = vpop.f32.mrb[0].mxu0
        %v741 = vadd.f32 %v658, %v740
        %v742 = vpop.f32.mrb[0].mxu0
        %743 = vdwg.mxu0
        %744 = vmatprep.subr.mxu0 0.0
        %v745 = vand.u32 %v326, 4294901760
        %746 = vmatpush1.msra.mxu0 %v745
        %747 = vmatprep.subr.mxu0 0.0
        %v748 = vand.u32 %v327, 4294901760
        %749 = vmatpush1.msra.mxu0 %v748
        %750 = vmatprep.subr.mxu0 0.0
        %v751 = vand.u32 %v328, 4294901760
        %752 = vmatpush1.msra.mxu0 %v751
        %753 = vmatprep.subr.mxu0 0.0
        %v754 = vand.u32 %v329, 4294901760
        %755 = vmatpush1.msra.mxu0 %v754
        %756 = vmatprep.subr.mxu0 0.0
        %757 = vmatpush1.msra.mxu0 0.0
        %758 = vmatprep.subr.mxu0 0.0
        %759 = vmatpush1.msra.mxu0 0.0
        %760 = vmatprep.subr.mxu0 0.0
        %761 = vmatpush1.msra.mxu0 0.0
        %762 = vmatprep.subr.mxu0 0.0
        %763 = vmatpush1.msra.mxu0 0.0
        %764 = vmatprep.subr.mxu0 0.0
        %765 = vmatpush1.msra.mxu0 0.0
        %766 = vmatprep.subr.mxu0 0.0
        %767 = vmatpush1.msra.mxu0 0.0
        %768 = vmatprep.subr.mxu0 0.0
        %769 = vmatpush1.msra.mxu0 0.0
        %770 = vmatprep.subr.mxu0 0.0
        %771 = vmatpush1.msra.mxu0 0.0
        %772 = vmatprep.subr.mxu0 0.0
        %773 = vmatpush1.msra.mxu0 0.0
        %774 = vmatprep.subr.mxu0 0.0
        %775 = vmatpush1.msra.mxu0 0.0
        %776 = vmatprep.subr.mxu0 0.0
        %777 = vmatpush1.msra.mxu0 0.0
        %778 = vmatprep.subr.mxu0 0.0
        %779 = vmatpush1.msra.mxu0 0.0
        %780 = vmatprep.subr.mxu0 0.0
        %781 = vmatpush1.msra.mxu0 0.0
        %782 = vmatprep.subr.mxu0 0.0
        %783 = vmatpush1.msra.mxu0 0.0
        %784 = vmatprep.subr.mxu0 0.0
        %785 = vmatpush1.msra.mxu0 0.0
        %786 = vmatprep.subr.mxu0 0.0
        %787 = vmatpush1.msra.mxu0 0.0
        %788 = vmatprep.subr.mxu0 0.0
        %789 = vmatpush1.msra.mxu0 0.0
        %790 = vmatprep.subr.mxu0 0.0
        %791 = vmatpush1.msra.mxu0 0.0
        %792 = vmatprep.subr.mxu0 0.0
        %793 = vmatpush1.msra.mxu0 0.0
        %794 = vmatprep.subr.mxu0 0.0
        %795 = vmatpush1.msra.mxu0 0.0
        %796 = vmatprep.subr.mxu0 0.0
        %797 = vmatpush1.msra.mxu0 0.0
        %798 = vmatprep.subr.mxu0 0.0
        %799 = vmatpush1.msra.mxu0 0.0
        %800 = vmatprep.subr.mxu0 0.0
        %801 = vmatpush1.msra.mxu0 0.0
        %802 = vmatprep.subr.mxu0 0.0
        %803 = vmatpush1.msra.mxu0 0.0
        %804 = vmatprep.subr.mxu0 0.0
        %805 = vmatpush1.msra.mxu0 0.0
        %806 = vmatprep.subr.mxu0 0.0
        %807 = vmatpush1.msra.mxu0 0.0
        %808 = vmatprep.subr.mxu0 0.0
        %809 = vmatpush1.msra.mxu0 0.0
        %810 = vmatprep.subr.mxu0 0.0
        %811 = vmatpush1.msra.mxu0 0.0
        %812 = vmatprep.mubr.f32.mxu0 0.0
        %v813 = vand.u32 %v332, 4294901760
        %814 = vmatmul.mubr.f32.gmra.mrb[0].mxu0 %v813
        %v815 = vpop.f32.mrb[0].mxu0
        %v816 = vadd.f32 %v741, %v815
        %v817 = vpop.f32.mrb[0].mxu0
        %818 = vdwg.mxu0
        %v819 = vmax.f32 %v816, 0.0
        %v820 = vld [vmem:[%s2] sm:$0x3]
        %vm821 = vcmask 15360
        %v823 = vsel %vm821, %v819, 0
        %vm825 = vcmask 1041408
        %v827 = vsel %vm825, %v820, 0
        %829 = vmatprep.subr.mxu0 0.0
        %v830 = vand.u32 %v827, 4294901760
        %831 = vmatpush1.msra.mxu0 %v830
        %832 = vmatprep.subr.mxu0 0.0
        %833 = vmatpush1.msra.mxu0 0.0
        %834 = vmatprep.subr.mxu0 0.0
        %835 = vmatpush1.msra.mxu0 0.0
        %836 = vmatprep.subr.mxu0 0.0
        %837 = vmatpush1.msra.mxu0 0.0
        %838 = vmatprep.subr.mxu0 0.0
        %839 = vmatpush1.msra.mxu0 0.0
        %840 = vmatprep.subr.mxu0 0.0
        %841 = vmatpush1.msra.mxu0 0.0
        %842 = vmatprep.subr.mxu0 0.0
        %843 = vmatpush1.msra.mxu0 0.0
        %844 = vmatprep.subr.mxu0 0.0
        %845 = vmatpush1.msra.mxu0 0.0
        %846 = vmatprep.subr.mxu0 0.0
        %847 = vmatpush1.msra.mxu0 0.0
        %848 = vmatprep.subr.mxu0 0.0
        %849 = vmatpush1.msra.mxu0 0.0
        %850 = vmatprep.subr.mxu0 0.0
        %851 = vmatpush1.msra.mxu0 0.0
        %852 = vmatprep.subr.mxu0 0.0
        %853 = vmatpush1.msra.mxu0 0.0
        %854 = vmatprep.subr.mxu0 0.0
        %855 = vmatpush1.msra.mxu0 0.0
        %856 = vmatprep.subr.mxu0 0.0
        %857 = vmatpush1.msra.mxu0 0.0
        %858 = vmatprep.subr.mxu0 0.0
        %859 = vmatpush1.msra.mxu0 0.0
        %860 = vmatprep.subr.mxu0 0.0
        %861 = vmatpush1.msra.mxu0 0.0
        %862 = vmatprep.subr.mxu0 0.0
        %863 = vmatpush1.msra.mxu0 0.0
        %864 = vmatprep.subr.mxu0 0.0
        %865 = vmatpush1.msra.mxu0 0.0
        %866 = vmatprep.subr.mxu0 0.0
        %867 = vmatpush1.msra.mxu0 0.0
        %868 = vmatprep.subr.mxu0 0.0
        %869 = vmatpush1.msra.mxu0 0.0
        %870 = vmatprep.subr.mxu0 0.0
        %871 = vmatpush1.msra.mxu0 0.0
        %872 = vmatprep.subr.mxu0 0.0
        %873 = vmatpush1.msra.mxu0 0.0
        %874 = vmatprep.subr.mxu0 0.0
        %875 = vmatpush1.msra.mxu0 0.0
        %876 = vmatprep.subr.mxu0 0.0
        %877 = vmatpush1.msra.mxu0 0.0
        %878 = vmatprep.subr.mxu0 0.0
        %879 = vmatpush1.msra.mxu0 0.0
        %880 = vmatprep.subr.mxu0 0.0
        %881 = vmatpush1.msra.mxu0 0.0
        %882 = vmatprep.subr.mxu0 0.0
        %883 = vmatpush1.msra.mxu0 0.0
        %884 = vmatprep.subr.mxu0 0.0
        %885 = vmatpush1.msra.mxu0 0.0
        %886 = vmatprep.subr.mxu0 0.0
        %887 = vmatpush1.msra.mxu0 0.0
        %888 = vmatprep.subr.mxu0 0.0
        %889 = vmatpush1.msra.mxu0 0.0
        %890 = vmatprep.subr.mxu0 0.0
        %891 = vmatpush1.msra.mxu0 0.0
        %892 = vmatprep.subr.mxu0 0.0
        %893 = vmatpush1.msra.mxu0 0.0
        %894 = vmatprep.mubr.f32.mxu0 0.0
        %v895 = vand.u32 %v823, 4294901760
        %v896 = vsub.f32 %v823, %v895
        %v897 = vand.u32 %v896, 4294901760
        %v898 = vsub.f32 %v896, %v897
        %v899 = vand.u32 %v898, 4294901760
        %900 = vmatmul.mubr.f32.gmra.mrb[0].mxu0 %v899
        %v901 = vpop.f32.mrb[0].mxu0
        %v902 = vadd.f32 0.0, %v901
        %v903 = vpop.f32.mrb[0].mxu0
        %904 = vdwg.mxu0
        %905 = vmatprep.subr.mxu0 0.0
        %v906 = vand.u32 %v827, 4294901760
        %v907 = vsub.f32 %v827, %v906
        %v908 = vand.u32 %v907, 4294901760
        %v909 = vsub.f32 %v907, %v908
        %v910 = vand.u32 %v909, 4294901760
        %911 = vmatpush1.msra.mxu0 %v910
        %912 = vmatprep.subr.mxu0 0.0
        %913 = vmatpush1.msra.mxu0 0.0
        %914 = vmatprep.subr.mxu0 0.0
        %915 = vmatpush1.msra.mxu0 0.0
        %916 = vmatprep.subr.mxu0 0.0
        %917 = vmatpush1.msra.mxu0 0.0
        %918 = vmatprep.subr.mxu0 0.0
        %919 = vmatpush1.msra.mxu0 0.0
        %920 = vmatprep.subr.mxu0 0.0
        %921 = vmatpush1.msra.mxu0 0.0
        %922 = vmatprep.subr.mxu0 0.0
        %923 = vmatpush1.msra.mxu0 0.0
        %924 = vmatprep.subr.mxu0 0.0
        %925 = vmatpush1.msra.mxu0 0.0
        %926 = vmatprep.subr.mxu0 0.0
        %927 = vmatpush1.msra.mxu0 0.0
        %928 = vmatprep.subr.mxu0 0.0
        %929 = vmatpush1.msra.mxu0 0.0
        %930 = vmatprep.subr.mxu0 0.0
        %931 = vmatpush1.msra.mxu0 0.0
        %932 = vmatprep.subr.mxu0 0.0
        %933 = vmatpush1.msra.mxu0 0.0
        %934 = vmatprep.subr.mxu0 0.0
        %935 = vmatpush1.msra.mxu0 0.0
        %936 = vmatprep.subr.mxu0 0.0
        %937 = vmatpush1.msra.mxu0 0.0
        %938 = vmatprep.subr.mxu0 0.0
        %939 = vmatpush1.msra.mxu0 0.0
        %940 = vmatprep.subr.mxu0 0.0
        %941 = vmatpush1.msra.mxu0 0.0
        %942 = vmatprep.subr.mxu0 0.0
        %943 = vmatpush1.msra.mxu0 0.0
        %944 = vmatprep.subr.mxu0 0.0
        %945 = vmatpush1.msra.mxu0 0.0
        %946 = vmatprep.subr.mxu0 0.0
        %947 = vmatpush1.msra.mxu0 0.0
        %948 = vmatprep.subr.mxu0 0.0
        %949 = vmatpush1.msra.mxu0 0.0
        %950 = vmatprep.subr.mxu0 0.0
        %951 = vmatpush1.msra.mxu0 0.0
        %952 = vmatprep.subr.mxu0 0.0
        %953 = vmatpush1.msra.mxu0 0.0
        %954 = vmatprep.subr.mxu0 0.0
        %955 = vmatpush1.msra.mxu0 0.0
        %956 = vmatprep.subr.mxu0 0.0
        %957 = vmatpush1.msra.mxu0 0.0
        %958 = vmatprep.subr.mxu0 0.0
        %959 = vmatpush1.msra.mxu0 0.0
        %960 = vmatprep.subr.mxu0 0.0
        %961 = vmatpush1.msra.mxu0 0.0
        %962 = vmatprep.subr.mxu0 0.0
        %963 = vmatpush1.msra.mxu0 0.0
        %964 = vmatprep.subr.mxu0 0.0
        %965 = vmatpush1.msra.mxu0 0.0
        %966 = vmatprep.subr.mxu0 0.0
        %967 = vmatpush1.msra.mxu0 0.0
        %968 = vmatprep.subr.mxu0 0.0
        %969 = vmatpush1.msra.mxu0 0.0
        %970 = vmatprep.subr.mxu0 0.0
        %971 = vmatpush1.msra.mxu0 0.0
        %972 = vmatprep.subr.mxu0 0.0
        %973 = vmatpush1.msra.mxu0 0.0
        %974 = vmatprep.mubr.f32.mxu0 0.0
        %v975 = vand.u32 %v823, 4294901760
        %976 = vmatmul.mubr.f32.gmra.mrb[0].mxu0 %v975
        %v977 = vpop.f32.mrb[0].mxu0
        %v978 = vadd.f32 %v902, %v977
        %v979 = vpop.f32.mrb[0].mxu0
        %980 = vdwg.mxu0
        %981 = vmatprep.subr.mxu0 0.0
        %v982 = vand.u32 %v827, 4294901760
        %v983 = vsub.f32 %v827, %v982
        %984 = vmatpush1.msra.mxu0 %v983
        %985 = vmatprep.subr.mxu0 0.0
        %986 = vmatpush1.msra.mxu0 0.0
        %987 = vmatprep.subr.mxu0 0.0
        %988 = vmatpush1.msra.mxu0 0.0
        %989 = vmatprep.subr.mxu0 0.0
        %990 = vmatpush1.msra.mxu0 0.0
        %991 = vmatprep.subr.mxu0 0.0
        %992 = vmatpush1.msra.mxu0 0.0
        %993 = vmatprep.subr.mxu0 0.0
        %994 = vmatpush1.msra.mxu0 0.0
        %995 = vmatprep.subr.mxu0 0.0
        %996 = vmatpush1.msra.mxu0 0.0
        %997 = vmatprep.subr.mxu0 0.0
        %998 = vmatpush1.msra.mxu0 0.0
        %999 = vmatprep.subr.mxu0 0.0
        %1000 = vmatpush1.msra.mxu0 0.0
        %1001 = vmatprep.subr.mxu0 0.0
        %1002 = vmatpush1.msra.mxu0 0.0
        %1003 = vmatprep.subr.mxu0 0.0
        %1004 = vmatpush1.msra.mxu0 0.0
        %1005 = vmatprep.subr.mxu0 0.0
        %1006 = vmatpush1.msra.mxu0 0.0
        %1007 = vmatprep.subr.mxu0 0.0
        %1008 = vmatpush1.msra.mxu0 0.0
        %1009 = vmatprep.subr.mxu0 0.0
        %1010 = vmatpush1.msra.mxu0 0.0
        %1011 = vmatprep.subr.mxu0 0.0
        %1012 = vmatpush1.msra.mxu0 0.0
        %1013 = vmatprep.subr.mxu0 0.0
        %1014 = vmatpush1.msra.mxu0 0.0
        %1015 = vmatprep.subr.mxu0 0.0
        %1016 = vmatpush1.msra.mxu0 0.0
        %1017 = vmatprep.subr.mxu0 0.0
        %1018 = vmatpush1.msra.mxu0 0.0
        %1019 = vmatprep.subr.mxu0 0.0
        %1020 = vmatpush1.msra.mxu0 0.0
        %1021 = vmatprep.subr.mxu0 0.0
        %1022 = vmatpush1.msra.mxu0 0.0
        %1023 = vmatprep.subr.mxu0 0.0
        %1024 = vmatpush1.msra.mxu0 0.0
        %1025 = vmatprep.subr.mxu0 0.0
        %1026 = vmatpush1.msra.mxu0 0.0
        %1027 = vmatprep.subr.mxu0 0.0
        %1028 = vmatpush1.msra.mxu0 0.0
        %1029 = vmatprep.subr.mxu0 0.0
        %1030 = vmatpush1.msra.mxu0 0.0
        %1031 = vmatprep.subr.mxu0 0.0
        %1032 = vmatpush1.msra.mxu0 0.0
        %1033 = vmatprep.subr.mxu0 0.0
        %1034 = vmatpush1.msra.mxu0 0.0
        %1035 = vmatprep.subr.mxu0 0.0
        %1036 = vmatpush1.msra.mxu0 0.0
        %1037 = vmatprep.subr.mxu0 0.0
        %1038 = vmatpush1.msra.mxu0 0.0
        %1039 = vmatprep.subr.mxu0 0.0
        %1040 = vmatpush1.msra.mxu0 0.0
        %1041 = vmatprep.subr.mxu0 0.0
        %1042 = vmatpush1.msra.mxu0 0.0
        %1043 = vmatprep.subr.mxu0 0.0
        %1044 = vmatpush1.msra.mxu0 0.0
        %1045 = vmatprep.subr.mxu0 0.0
        %1046 = vmatpush1.msra.mxu0 0.0
        %1047 = vmatprep.mubr.f32.mxu0 0.0
        %v1048 = vand.u32 %v823, 4294901760
        %v1049 = vsub.f32 %v823, %v1048
        %1050 = vmatmul.mubr.f32.gmra.mrb[0].mxu0 %v1049
        %v1051 = vpop.f32.mrb[0].mxu0
        %v1052 = vadd.f32 %v978, %v1051
        %v1053 = vpop.f32.mrb[0].mxu0
        %1054 = vdwg.mxu0
        %1055 = vmatprep.subr.mxu0 0.0
        %v1056 = vand.u32 %v827, 4294901760
        %1057 = vmatpush1.msra.mxu0 %v1056
        %1058 = vmatprep.subr.mxu0 0.0
        %1059 = vmatpush1.msra.mxu0 0.0
        %1060 = vmatprep.subr.mxu0 0.0
        %1061 = vmatpush1.msra.mxu0 0.0
        %1062 = vmatprep.subr.mxu0 0.0
        %1063 = vmatpush1.msra.mxu0 0.0
        %1064 = vmatprep.subr.mxu0 0.0
        %1065 = vmatpush1.msra.mxu0 0.0
        %1066 = vmatprep.subr.mxu0 0.0
        %1067 = vmatpush1.msra.mxu0 0.0
        %1068 = vmatprep.subr.mxu0 0.0
        %1069 = vmatpush1.msra.mxu0 0.0
        %1070 = vmatprep.subr.mxu0 0.0
        %1071 = vmatpush1.msra.mxu0 0.0
        %1072 = vmatprep.subr.mxu0 0.0
        %1073 = vmatpush1.msra.mxu0 0.0
        %1074 = vmatprep.subr.mxu0 0.0
        %1075 = vmatpush1.msra.mxu0 0.0
        %1076 = vmatprep.subr.mxu0 0.0
        %1077 = vmatpush1.msra.mxu0 0.0
        %1078 = vmatprep.subr.mxu0 0.0
        %1079 = vmatpush1.msra.mxu0 0.0
        %1080 = vmatprep.subr.mxu0 0.0
        %1081 = vmatpush1.msra.mxu0 0.0
        %1082 = vmatprep.subr.mxu0 0.0
        %1083 = vmatpush1.msra.mxu0 0.0
        %1084 = vmatprep.subr.mxu0 0.0
        %1085 = vmatpush1.msra.mxu0 0.0
        %1086 = vmatprep.subr.mxu0 0.0
        %1087 = vmatpush1.msra.mxu0 0.0
        %1088 = vmatprep.subr.mxu0 0.0
        %1089 = vmatpush1.msra.mxu0 0.0
        %1090 = vmatprep.subr.mxu0 0.0
        %1091 = vmatpush1.msra.mxu0 0.0
        %1092 = vmatprep.subr.mxu0 0.0
        %1093 = vmatpush1.msra.mxu0 0.0
        %1094 = vmatprep.subr.mxu0 0.0
        %1095 = vmatpush1.msra.mxu0 0.0
        %1096 = vmatprep.subr.mxu0 0.0
        %1097 = vmatpush1.msra.mxu0 0.0
        %1098 = vmatprep.subr.mxu0 0.0
        %1099 = vmatpush1.msra.mxu0 0.0
        %1100 = vmatprep.subr.mxu0 0.0
        %1101 = vmatpush1.msra.mxu0 0.0
        %1102 = vmatprep.subr.mxu0 0.0
        %1103 = vmatpush1.msra.mxu0 0.0
        %1104 = vmatprep.subr.mxu0 0.0
        %1105 = vmatpush1.msra.mxu0 0.0
        %1106 = vmatprep.subr.mxu0 0.0
        %1107 = vmatpush1.msra.mxu0 0.0
        %1108 = vmatprep.subr.mxu0 0.0
        %1109 = vmatpush1.msra.mxu0 0.0
        %1110 = vmatprep.subr.mxu0 0.0
        %1111 = vmatpush1.msra.mxu0 0.0
        %1112 = vmatprep.subr.mxu0 0.0
        %1113 = vmatpush1.msra.mxu0 0.0
        %1114 = vmatprep.subr.mxu0 0.0
        %1115 = vmatpush1.msra.mxu0 0.0
        %1116 = vmatprep.subr.mxu0 0.0
        %1117 = vmatpush1.msra.mxu0 0.0
        %1118 = vmatprep.subr.mxu0 0.0
        %1119 = vmatpush1.msra.mxu0 0.0
        %1120 = vmatprep.mubr.f32.mxu0 0.0
        %v1121 = vand.u32 %v823, 4294901760
        %v1122 = vsub.f32 %v823, %v1121
        %v1123 = vand.u32 %v1122, 4294901760
        %1124 = vmatmul.mubr.f32.gmra.mrb[0].mxu0 %v1123
        %v1125 = vpop.f32.mrb[0].mxu0
        %v1126 = vadd.f32 %v1052, %v1125
        %v1127 = vpop.f32.mrb[0].mxu0
        %1128 = vdwg.mxu0
        %1129 = vmatprep.subr.mxu0 0.0
        %v1130 = vand.u32 %v827, 4294901760
        %v1131 = vsub.f32 %v827, %v1130
        %v1132 = vand.u32 %v1131, 4294901760
        %1133 = vmatpush1.msra.mxu0 %v1132
        %1134 = vmatprep.subr.mxu0 0.0
        %1135 = vmatpush1.msra.mxu0 0.0
        %1136 = vmatprep.subr.mxu0 0.0
        %1137 = vmatpush1.msra.mxu0 0.0
        %1138 = vmatprep.subr.mxu0 0.0
        %1139 = vmatpush1.msra.mxu0 0.0
        %1140 = vmatprep.subr.mxu0 0.0
        %1141 = vmatpush1.msra.mxu0 0.0
        %1142 = vmatprep.subr.mxu0 0.0
        %1143 = vmatpush1.msra.mxu0 0.0
        %1144 = vmatprep.subr.mxu0 0.0
        %1145 = vmatpush1.msra.mxu0 0.0
        %1146 = vmatprep.subr.mxu0 0.0
        %1147 = vmatpush1.msra.mxu0 0.0
        %1148 = vmatprep.subr.mxu0 0.0
        %1149 = vmatpush1.msra.mxu0 0.0
        %1150 = vmatprep.subr.mxu0 0.0
        %1151 = vmatpush1.msra.mxu0 0.0
        %1152 = vmatprep.subr.mxu0 0.0
        %1153 = vmatpush1.msra.mxu0 0.0
        %1154 = vmatprep.subr.mxu0 0.0
        %1155 = vmatpush1.msra.mxu0 0.0
        %1156 = vmatprep.subr.mxu0 0.0
        %1157 = vmatpush1.msra.mxu0 0.0
        %1158 = vmatprep.subr.mxu0 0.0
        %1159 = vmatpush1.msra.mxu0 0.0
        %1160 = vmatprep.subr.mxu0 0.0
        %1161 = vmatpush1.msra.mxu0 0.0
        %1162 = vmatprep.subr.mxu0 0.0
        %1163 = vmatpush1.msra.mxu0 0.0
        %1164 = vmatprep.subr.mxu0 0.0
        %1165 = vmatpush1.msra.mxu0 0.0
        %1166 = vmatprep.subr.mxu0 0.0
        %1167 = vmatpush1.msra.mxu0 0.0
        %1168 = vmatprep.subr.mxu0 0.0
        %1169 = vmatpush1.msra.mxu0 0.0
        %1170 = vmatprep.subr.mxu0 0.0
        %1171 = vmatpush1.msra.mxu0 0.0
        %1172 = vmatprep.subr.mxu0 0.0
        %1173 = vmatpush1.msra.mxu0 0.0
        %1174 = vmatprep.subr.mxu0 0.0
        %1175 = vmatpush1.msra.mxu0 0.0
        %1176 = vmatprep.subr.mxu0 0.0
        %1177 = vmatpush1.msra.mxu0 0.0
        %1178 = vmatprep.subr.mxu0 0.0
        %1179 = vmatpush1.msra.mxu0 0.0
        %1180 = vmatprep.subr.mxu0 0.0
        %1181 = vmatpush1.msra.mxu0 0.0
        %1182 = vmatprep.subr.mxu0 0.0
        %1183 = vmatpush1.msra.mxu0 0.0
        %1184 = vmatprep.subr.mxu0 0.0
        %1185 = vmatpush1.msra.mxu0 0.0
        %1186 = vmatprep.subr.mxu0 0.0
        %1187 = vmatpush1.msra.mxu0 0.0
        %1188 = vmatprep.subr.mxu0 0.0
        %1189 = vmatpush1.msra.mxu0 0.0
        %1190 = vmatprep.subr.mxu0 0.0
        %1191 = vmatpush1.msra.mxu0 0.0
        %1192 = vmatprep.subr.mxu0 0.0
        %1193 = vmatpush1.msra.mxu0 0.0
        %1194 = vmatprep.subr.mxu0 0.0
        %1195 = vmatpush1.msra.mxu0 0.0
        %1196 = vmatprep.mubr.f32.mxu0 0.0
        %v1197 = vand.u32 %v823, 4294901760
        %1198 = vmatmul.mubr.f32.gmra.mrb[0].mxu0 %v1197
        %v1199 = vpop.f32.mrb[0].mxu0
        %v1200 = vadd.f32 %v1126, %v1199
        %v1201 = vpop.f32.mrb[0].mxu0
        %1202 = vdwg.mxu0
        %1203 = vmatprep.subr.mxu0 0.0
        %v1204 = vand.u32 %v827, 4294901760
        %1205 = vmatpush1.msra.mxu0 %v1204
        %1206 = vmatprep.subr.mxu0 0.0
        %1207 = vmatpush1.msra.mxu0 0.0
        %1208 = vmatprep.subr.mxu0 0.0
        %1209 = vmatpush1.msra.mxu0 0.0
        %1210 = vmatprep.subr.mxu0 0.0
        %1211 = vmatpush1.msra.mxu0 0.0
        %1212 = vmatprep.subr.mxu0 0.0
        %1213 = vmatpush1.msra.mxu0 0.0
        %1214 = vmatprep.subr.mxu0 0.0
        %1215 = vmatpush1.msra.mxu0 0.0
        %1216 = vmatprep.subr.mxu0 0.0
        %1217 = vmatpush1.msra.mxu0 0.0
        %1218 = vmatprep.subr.mxu0 0.0
        %1219 = vmatpush1.msra.mxu0 0.0
        %1220 = vmatprep.subr.mxu0 0.0
        %1221 = vmatpush1.msra.mxu0 0.0
        %1222 = vmatprep.subr.mxu0 0.0
        %1223 = vmatpush1.msra.mxu0 0.0
        %1224 = vmatprep.subr.mxu0 0.0
        %1225 = vmatpush1.msra.mxu0 0.0
        %1226 = vmatprep.subr.mxu0 0.0
        %1227 = vmatpush1.msra.mxu0 0.0
        %1228 = vmatprep.subr.mxu0 0.0
        %1229 = vmatpush1.msra.mxu0 0.0
        %1230 = vmatprep.subr.mxu0 0.0
        %1231 = vmatpush1.msra.mxu0 0.0
        %1232 = vmatprep.subr.mxu0 0.0
        %1233 = vmatpush1.msra.mxu0 0.0
        %1234 = vmatprep.subr.mxu0 0.0
        %1235 = vmatpush1.msra.mxu0 0.0
        %1236 = vmatprep.subr.mxu0 0.0
        %1237 = vmatpush1.msra.mxu0 0.0
        %1238 = vmatprep.subr.mxu0 0.0
        %1239 = vmatpush1.msra.mxu0 0.0
        %1240 = vmatprep.subr.mxu0 0.0
        %1241 = vmatpush1.msra.mxu0 0.0
        %1242 = vmatprep.subr.mxu0 0.0
        %1243 = vmatpush1.msra.mxu0 0.0
        %1244 = vmatprep.subr.mxu0 0.0
        %1245 = vmatpush1.msra.mxu0 0.0
        %1246 = vmatprep.subr.mxu0 0.0
        %1247 = vmatpush1.msra.mxu0 0.0
        %1248 = vmatprep.subr.mxu0 0.0
        %1249 = vmatpush1.msra.mxu0 0.0
        %1250 = vmatprep.subr.mxu0 0.0
        %1251 = vmatpush1.msra.mxu0 0.0
        %1252 = vmatprep.subr.mxu0 0.0
        %1253 = vmatpush1.msra.mxu0 0.0
        %1254 = vmatprep.subr.mxu0 0.0
        %1255 = vmatpush1.msra.mxu0 0.0
        %1256 = vmatprep.subr.mxu0 0.0
        %1257 = vmatpush1.msra.mxu0 0.0
        %1258 = vmatprep.subr.mxu0 0.0
        %1259 = vmatpush1.msra.mxu0 0.0
        %1260 = vmatprep.subr.mxu0 0.0
        %1261 = vmatpush1.msra.mxu0 0.0
        %1262 = vmatprep.subr.mxu0 0.0
        %1263 = vmatpush1.msra.mxu0 0.0
        %1264 = vmatprep.subr.mxu0 0.0
        %1265 = vmatpush1.msra.mxu0 0.0
        %1266 = vmatprep.subr.mxu0 0.0
        %1267 = vmatpush1.msra.mxu0 0.0
        %1268 = vmatprep.mubr.f32.mxu0 0.0
        %v1269 = vand.u32 %v823, 4294901760
        %1270 = vmatmul.mubr.f32.gmra.mrb[0].mxu0 %v1269
        %v1271 = vpop.f32.mrb[0].mxu0
        %v1272 = vadd.f32 %v1200, %v1271
        %v1273 = vpop.f32.mrb[0].mxu0
        %1274 = vdwg.mxu0
        %v1276 = vrot.slane %v1272, 1
        %v1278 = vadd.f32 %v1272, %v1276
        %v1279 = vxor.u32 %v1278, 2147483648
        %v1280 = vmul.f32 %v1279, 1.442695
        %v1281 = vpow.pop %v1280
        %v1282 = vadd.f32 %v1281, 1.0
        %v1283 = vrcp.pop %v1282
        %v1284 = vmul.f32 1.0, %v1283
        %v1285 = vlaneseq
        %v1286 = vshrl.u32 %v1285, 7
        %v1287 = vsub.s32 0, %v1286
        %v1288 = vrot.slane %v1284, %v1287
        %1290 = vbcast.lane.b32.xlu0 %v1288, 256
        %v1291 = vpop.permute.xlu0 %1290
        %s1293 = sor.u32 256, 8
        %1294 = vbcast.lane.b32.xlu0 %v1288, %s1293
        %v1295 = vpop.permute.xlu0 %1294
        %s1297 = sor.u32 256, 16
        %1298 = vbcast.lane.b32.xlu0 %v1288, %s1297
        %v1299 = vpop.permute.xlu0 %1298
        %s1301 = sor.u32 256, 24
        %1302 = vbcast.lane.b32.xlu0 %v1288, %s1301
        %v1303 = vpop.permute.xlu0 %1302
        %v1304 = vmul.f32 %v231, %v1291
        %v1305 = vmul.f32 %v232, %v1291
        %v1306 = vmul.f32 %v233, %v1295
        %v1307 = vmul.f32 %v234, %v1295
        %v1308 = vmul.f32 %v235, %v1299
        %v1309 = vmul.f32 %v236, %v1299
        %v1310 = vmul.f32 %v237, %v1303
        %v1311 = vmul.f32 %v238, %v1303
        %v1312 = vadd.f32 %v1304, %v1306
        %v1313 = vadd.f32 %v1312, %v1308
        %v1314 = vadd.f32 %v1313, %v1310
        %v1315 = vrot.slane %v1314, 4
        %v1316 = vadd.f32 %v1314, %v1315
        %v1317 = vrot.slane %v1316, 2
        %v1318 = vadd.f32 %v1316, %v1317
        %v1319 = vrot.slane %v1318, 1
        %v1320 = vadd.f32 %v1318, %v1319
        %v1321 = vadd.f32 %v1305, %v1307
        %v1322 = vadd.f32 %v1321, %v1309
        %v1323 = vadd.f32 %v1322, %v1311
        %v1324 = vrot.slane %v1323, 4
        %v1325 = vadd.f32 %v1323, %v1324
        %v1326 = vrot.slane %v1325, 2
        %v1327 = vadd.f32 %v1325, %v1326
        %v1328 = vrot.slane %v1327, 1
        %v1329 = vadd.f32 %v1327, %v1328
        %v1330 = vrcp.pop 32.0
        %v1331 = vmul.f32 %v1320, %v1330
        %v1332 = vmul.f32 %v1329, %v1330
        %v1333 = vmax.f32 %v1304, %v1308
        %v1334 = vmax.f32 %v1306, %v1310
        %v1335 = vmax.f32 %v1333, %v1334
        %v1336 = vrot.slane %v1335, 4
        %v1337 = vmax.f32 %v1335, %v1336
        %v1338 = vrot.slane %v1337, 2
        %v1339 = vmax.f32 %v1337, %v1338
        %v1340 = vrot.slane %v1339, 1
        %v1341 = vmax.f32 %v1339, %v1340
        %v1342 = vmax.f32 %v1305, %v1309
        %v1343 = vmax.f32 %v1307, %v1311
        %v1344 = vmax.f32 %v1342, %v1343
        %v1345 = vrot.slane %v1344, 4
        %v1346 = vmax.f32 %v1344, %v1345
        %v1347 = vrot.slane %v1346, 2
        %v1348 = vmax.f32 %v1346, %v1347
        %v1349 = vrot.slane %v1348, 1
        %v1350 = vmax.f32 %v1348, %v1349
        %v1351 = vld [vmem:[#allocation5] sm:$0xff]
        %v1352 = vld [vmem:[#allocation5 + $0x8] sm:$0xff]
        %v1353 = vld [vmem:[#allocation5 + $0x10] sm:$0xff]
        %v1354 = vld [vmem:[#allocation5 + $0x18] sm:$0xff]
        %v1355 = vld [vmem:[#allocation5 + $0x20] sm:$0xff]
        %v1356 = vld [vmem:[#allocation5 + $0x28] sm:$0xff]
        %v1357 = vld [vmem:[#allocation5 + $0x30] sm:$0xff]
        %v1358 = vld [vmem:[#allocation5 + $0x38] sm:$0xff]
        %v1359 = vld [vmem:[#allocation5 + $0x40] sm:$0xff]
        %v1360 = vld [vmem:[#allocation5 + $0x48] sm:$0xff]
        %v1361 = vld [vmem:[#allocation5 + $0x50] sm:$0xff]
        %v1362 = vld [vmem:[#allocation5 + $0x58] sm:$0xff]
        %v1363 = vld [vmem:[#allocation5 + $0x60] sm:$0xff]
        %v1364 = vld [vmem:[#allocation5 + $0x68] sm:$0xff]
        %v1365 = vld [vmem:[#allocation5 + $0x70] sm:$0xff]
        %v1366 = vld [vmem:[#allocation5 + $0x78] sm:$0xff]
        %v1367 = vld [vmem:[#allocation5 + $0x80] sm:$0xff]
        %v1368 = vld [vmem:[#allocation5 + $0x88] sm:$0xff]
        %v1369 = vld [vmem:[#allocation5 + $0x90] sm:$0xff]
        %v1370 = vld [vmem:[#allocation5 + $0x98] sm:$0xff]
        %v1371 = vld [vmem:[#allocation5 + $0xa0] sm:$0xff]
        %v1372 = vld [vmem:[#allocation5 + $0xa8] sm:$0xff]
        %v1373 = vld [vmem:[#allocation5 + $0xb0] sm:$0xff]
        %v1374 = vld [vmem:[#allocation5 + $0xb8] sm:$0xff]
        %v1375 = vld [vmem:[#allocation5 + $0xc0] sm:$0xff]
        %v1376 = vld [vmem:[#allocation5 + $0xc8] sm:$0xff]
        %v1377 = vld [vmem:[#allocation5 + $0xd0] sm:$0xff]
        %v1378 = vld [vmem:[#allocation5 + $0xd8] sm:$0xff]
        %v1379 = vld [vmem:[#allocation5 + $0xe0] sm:$0xff]
        %v1380 = vld [vmem:[#allocation5 + $0xe8] sm:$0xff]
        %v1381 = vld [vmem:[#allocation5 + $0xf0] sm:$0xff]
        %v1382 = vld [vmem:[#allocation5 + $0xf8] sm:$0xff]
        %v1383 = vld [vmem:[#allocation5 + $0x100] sm:$0xff]
        %v1384 = vld [vmem:[#allocation5 + $0x108] sm:$0xff]
        %v1385 = vld [vmem:[#allocation5 + $0x110] sm:$0xff]
        %v1386 = vld [vmem:[#allocation5 + $0x118] sm:$0xff]
        %v1387 = vld [vmem:[#allocation5 + $0x120] sm:$0xff]
        %v1388 = vld [vmem:[#allocation5 + $0x128] sm:$0xff]
        %v1389 = vld [vmem:[#allocation5 + $0x130] sm:$0xff]
        %v1390 = vld [vmem:[#allocation5 + $0x138] sm:$0xff]
        %v1391 = vld [vmem:[#allocation5 + $0x140] sm:$0xff]
        %v1392 = vld [vmem:[#allocation5 + $0x148] sm:$0xff]
        %v1393 = vld [vmem:[#allocation5 + $0x150] sm:$0xff]
        %v1394 = vld [vmem:[#allocation5 + $0x158] sm:$0xff]
        %v1395 = vld [vmem:[#allocation5 + $0x160] sm:$0xff]
        %v1396 = vld [vmem:[#allocation5 + $0x168] sm:$0xff]
        %v1397 = vld [vmem:[#allocation5 + $0x170] sm:$0xff]
        %v1398 = vld [vmem:[#allocation5 + $0x178] sm:$0xff]
        %v1399 = vld [vmem:[#allocation5 + $0x180] sm:$0xff]
        %v1400 = vld [vmem:[#allocation5 + $0x188] sm:$0xff]
        %v1401 = vld [vmem:[#allocation5 + $0x190] sm:$0xff]
        %v1402 = vld [vmem:[#allocation5 + $0x198] sm:$0xff]
        %v1403 = vld [vmem:[#allocation5 + $0x1a0] sm:$0xff]
        %v1404 = vld [vmem:[#allocation5 + $0x1a8] sm:$0xff]
        %v1405 = vld [vmem:[#allocation5 + $0x1b0] sm:$0xff]
        %v1406 = vld [vmem:[#allocation5 + $0x1b8] sm:$0xff]
        %v1407 = vld [vmem:[#allocation5 + $0x1c0] sm:$0xff]
        %v1408 = vld [vmem:[#allocation5 + $0x1c8] sm:$0xff]
        %v1409 = vld [vmem:[#allocation5 + $0x1d0] sm:$0xff]
        %v1410 = vld [vmem:[#allocation5 + $0x1d8] sm:$0xff]
        %v1411 = vld [vmem:[#allocation5 + $0x1e0] sm:$0xff]
        %v1412 = vld [vmem:[#allocation5 + $0x1e8] sm:$0xff]
        %v1413 = vld [vmem:[#allocation5 + $0x1f0] sm:$0xff]
        %v1414 = vld [vmem:[#allocation5 + $0x1f8] sm:$0xff]
        %v1415 = vld [vmem:[#allocation5 + $0x200] sm:$0xff]
        %v1416 = vld [vmem:[#allocation5 + $0x208] sm:$0xff]
        %v1417 = vld [vmem:[#allocation5 + $0x210] sm:$0xff]
        %v1418 = vld [vmem:[#allocation5 + $0x218] sm:$0xff]
        %v1419 = vld [vmem:[#allocation5 + $0x220] sm:$0xff]
        %v1420 = vld [vmem:[#allocation5 + $0x228] sm:$0xff]
        %v1421 = vld [vmem:[#allocation5 + $0x230] sm:$0xff]
        %v1422 = vld [vmem:[#allocation5 + $0x238] sm:$0xff]
        %v1423 = vld [vmem:[#allocation5 + $0x240] sm:$0xff]
        %v1424 = vld [vmem:[#allocation5 + $0x248] sm:$0xff]
        %v1425 = vld [vmem:[#allocation5 + $0x250] sm:$0xff]
        %v1426 = vld [vmem:[#allocation5 + $0x258] sm:$0xff]
        %v1427 = vld [vmem:[#allocation5 + $0x260] sm:$0xff]
        %v1428 = vld [vmem:[#allocation5 + $0x268] sm:$0xff]
        %v1429 = vld [vmem:[#allocation5 + $0x270] sm:$0xff]
        %v1430 = vld [vmem:[#allocation5 + $0x278] sm:$0xff]
        %v1431 = vld [vmem:[#allocation5 + $0x280] sm:$0xff]
        %v1432 = vld [vmem:[#allocation5 + $0x288] sm:$0xff]
        %v1433 = vld [vmem:[#allocation5 + $0x290] sm:$0xff]
        %v1434 = vld [vmem:[#allocation5 + $0x298] sm:$0xff]
        %v1435 = vld [vmem:[#allocation5 + $0x2a0] sm:$0xff]
        %v1436 = vld [vmem:[#allocation5 + $0x2a8] sm:$0xff]
        %v1437 = vld [vmem:[#allocation5 + $0x2b0] sm:$0xff]
        %v1438 = vld [vmem:[#allocation5 + $0x2b8] sm:$0xff]
        %v1439 = vld [vmem:[#allocation5 + $0x2c0] sm:$0xff]
        %v1440 = vld [vmem:[#allocation5 + $0x2c8] sm:$0xff]
        %v1441 = vld [vmem:[#allocation5 + $0x2d0] sm:$0xff]
        %v1442 = vld [vmem:[#allocation5 + $0x2d8] sm:$0xff]
        %v1443 = vld [vmem:[#allocation5 + $0x2e0] sm:$0xff]
        %v1444 = vld [vmem:[#allocation5 + $0x2e8] sm:$0xff]
        %v1445 = vld [vmem:[#allocation5 + $0x2f0] sm:$0xff]
        %v1446 = vld [vmem:[#allocation5 + $0x2f8] sm:$0xff]
        %v1447 = vld [vmem:[#allocation5 + $0x300] sm:$0xff]
        %v1448 = vld [vmem:[#allocation5 + $0x308] sm:$0xff]
        %v1449 = vld [vmem:[#allocation5 + $0x310] sm:$0xff]
        %v1450 = vld [vmem:[#allocation5 + $0x318] sm:$0xff]
        %v1451 = vld [vmem:[#allocation5 + $0x320] sm:$0xff]
        %v1452 = vld [vmem:[#allocation5 + $0x328] sm:$0xff]
        %v1453 = vld [vmem:[#allocation5 + $0x330] sm:$0xff]
        %v1454 = vld [vmem:[#allocation5 + $0x338] sm:$0xff]
        %v1455 = vld [vmem:[#allocation5 + $0x340] sm:$0xff]
        %v1456 = vld [vmem:[#allocation5 + $0x348] sm:$0xff]
        %v1457 = vld [vmem:[#allocation5 + $0x350] sm:$0xff]
        %v1458 = vld [vmem:[#allocation5 + $0x358] sm:$0xff]
        %v1459 = vld [vmem:[#allocation5 + $0x360] sm:$0xff]
        %v1460 = vld [vmem:[#allocation5 + $0x368] sm:$0xff]
        %v1461 = vld [vmem:[#allocation5 + $0x370] sm:$0xff]
        %v1462 = vld [vmem:[#allocation5 + $0x378] sm:$0xff]
        %v1463 = vld [vmem:[#allocation5 + $0x380] sm:$0xff]
        %v1464 = vld [vmem:[#allocation5 + $0x388] sm:$0xff]
        %v1465 = vld [vmem:[#allocation5 + $0x390] sm:$0xff]
        %v1466 = vld [vmem:[#allocation5 + $0x398] sm:$0xff]
        %v1467 = vld [vmem:[#allocation5 + $0x3a0] sm:$0xff]
        %v1468 = vld [vmem:[#allocation5 + $0x3a8] sm:$0xff]
        %v1469 = vld [vmem:[#allocation5 + $0x3b0] sm:$0xff]
        %v1470 = vld [vmem:[#allocation5 + $0x3b8] sm:$0xff]
        %v1471 = vld [vmem:[#allocation5 + $0x3c0] sm:$0xff]
        %v1472 = vld [vmem:[#allocation5 + $0x3c8] sm:$0xff]
        %v1473 = vld [vmem:[#allocation5 + $0x3d0] sm:$0xff]
        %v1474 = vld [vmem:[#allocation5 + $0x3d8] sm:$0xff]
        %v1475 = vld [vmem:[#allocation5 + $0x3e0] sm:$0xff]
        %v1476 = vld [vmem:[#allocation5 + $0x3e8] sm:$0xff]
        %v1477 = vld [vmem:[#allocation5 + $0x3f0] sm:$0xff]
        %v1478 = vld [vmem:[#allocation5 + $0x3f8] sm:$0xff]
        %v1479 = vand.u32 %v1352, 4294901760
        %1480 = vmatprep.subr.mxu0 %v1479
        %v1481 = vand.u32 %v1351, 4294901760
        %1482 = vmatpush1.msra.mxu0 %v1481
        %v1483 = vand.u32 %v1354, 4294901760
        %1484 = vmatprep.subr.mxu0 %v1483
        %v1485 = vand.u32 %v1353, 4294901760
        %1486 = vmatpush1.msra.mxu0 %v1485
        %v1487 = vand.u32 %v1356, 4294901760
        %1488 = vmatprep.subr.mxu0 %v1487
        %v1489 = vand.u32 %v1355, 4294901760
        %1490 = vmatpush1.msra.mxu0 %v1489
        %v1491 = vand.u32 %v1358, 4294901760
        %1492 = vmatprep.subr.mxu0 %v1491
        %v1493 = vand.u32 %v1357, 4294901760
        %1494 = vmatpush1.msra.mxu0 %v1493
        %v1495 = vand.u32 %v1360, 4294901760
        %1496 = vmatprep.subr.mxu0 %v1495
        %v1497 = vand.u32 %v1359, 4294901760
        %1498 = vmatpush1.msra.mxu0 %v1497
        %v1499 = vand.u32 %v1362, 4294901760
        %1500 = vmatprep.subr.mxu0 %v1499
        %v1501 = vand.u32 %v1361, 4294901760
        %1502 = vmatpush1.msra.mxu0 %v1501
        %v1503 = vand.u32 %v1364, 4294901760
        %1504 = vmatprep.subr.mxu0 %v1503
        %v1505 = vand.u32 %v1363, 4294901760
        %1506 = vmatpush1.msra.mxu0 %v1505
        %v1507 = vand.u32 %v1366, 4294901760
        %1508 = vmatprep.subr.mxu0 %v1507
        %v1509 = vand.u32 %v1365, 4294901760
        %1510 = vmatpush1.msra.mxu0 %v1509
        %v1511 = vand.u32 %v1368, 4294901760
        %1512 = vmatprep.subr.mxu0 %v1511
        %v1513 = vand.u32 %v1367, 4294901760
        %1514 = vmatpush1.msra.mxu0 %v1513
        %v1515 = vand.u32 %v1370, 4294901760
        %1516 = vmatprep.subr.mxu0 %v1515
        %v1517 = vand.u32 %v1369, 4294901760
        %1518 = vmatpush1.msra.mxu0 %v1517
        %v1519 = vand.u32 %v1372, 4294901760
        %1520 = vmatprep.subr.mxu0 %v1519
        %v1521 = vand.u32 %v1371, 4294901760
        %1522 = vmatpush1.msra.mxu0 %v1521
        %v1523 = vand.u32 %v1374, 4294901760
        %1524 = vmatprep.subr.mxu0 %v1523
        %v1525 = vand.u32 %v1373, 4294901760
        %1526 = vmatpush1.msra.mxu0 %v1525
        %v1527 = vand.u32 %v1376, 4294901760
        %1528 = vmatprep.subr.mxu0 %v1527
        %v1529 = vand.u32 %v1375, 4294901760
        %1530 = vmatpush1.msra.mxu0 %v1529
        %v1531 = vand.u32 %v1378, 4294901760
        %1532 = vmatprep.subr.mxu0 %v1531
        %v1533 = vand.u32 %v1377, 4294901760
        %1534 = vmatpush1.msra.mxu0 %v1533
        %v1535 = vand.u32 %v1380, 4294901760
        %1536 = vmatprep.subr.mxu0 %v1535
        %v1537 = vand.u32 %v1379, 4294901760
        %1538 = vmatpush1.msra.mxu0 %v1537
        %v1539 = vand.u32 %v1382, 4294901760
        %1540 = vmatprep.subr.mxu0 %v1539
        %v1541 = vand.u32 %v1381, 4294901760
        %1542 = vmatpush1.msra.mxu0 %v1541
        %v1543 = vand.u32 %v1384, 4294901760
        %1544 = vmatprep.subr.mxu0 %v1543
        %v1545 = vand.u32 %v1383, 4294901760
        %1546 = vmatpush1.msra.mxu0 %v1545
        %v1547 = vand.u32 %v1386, 4294901760
        %1548 = vmatprep.subr.mxu0 %v1547
        %v1549 = vand.u32 %v1385, 4294901760
        %1550 = vmatpush1.msra.mxu0 %v1549
        %v1551 = vand.u32 %v1388, 4294901760
        %1552 = vmatprep.subr.mxu0 %v1551
        %v1553 = vand.u32 %v1387, 4294901760
        %1554 = vmatpush1.msra.mxu0 %v1553
        %v1555 = vand.u32 %v1390, 4294901760
        %1556 = vmatprep.subr.mxu0 %v1555
        %v1557 = vand.u32 %v1389, 4294901760
        %1558 = vmatpush1.msra.mxu0 %v1557
        %v1559 = vand.u32 %v1392, 4294901760
        %1560 = vmatprep.subr.mxu0 %v1559
        %v1561 = vand.u32 %v1391, 4294901760
        %1562 = vmatpush1.msra.mxu0 %v1561
        %v1563 = vand.u32 %v1394, 4294901760
        %1564 = vmatprep.subr.mxu0 %v1563
        %v1565 = vand.u32 %v1393, 4294901760
        %1566 = vmatpush1.msra.mxu0 %v1565
        %v1567 = vand.u32 %v1396, 4294901760
        %1568 = vmatprep.subr.mxu0 %v1567
        %v1569 = vand.u32 %v1395, 4294901760
        %1570 = vmatpush1.msra.mxu0 %v1569
        %v1571 = vand.u32 %v1398, 4294901760
        %1572 = vmatprep.subr.mxu0 %v1571
        %v1573 = vand.u32 %v1397, 4294901760
        %1574 = vmatpush1.msra.mxu0 %v1573
        %v1575 = vand.u32 %v1400, 4294901760
        %1576 = vmatprep.subr.mxu0 %v1575
        %v1577 = vand.u32 %v1399, 4294901760
        %1578 = vmatpush1.msra.mxu0 %v1577
        %v1579 = vand.u32 %v1402, 4294901760
        %1580 = vmatprep.subr.mxu0 %v1579
        %v1581 = vand.u32 %v1401, 4294901760
        %1582 = vmatpush1.msra.mxu0 %v1581
        %v1583 = vand.u32 %v1404, 4294901760
        %1584 = vmatprep.subr.mxu0 %v1583
        %v1585 = vand.u32 %v1403, 4294901760
        %1586 = vmatpush1.msra.mxu0 %v1585
        %v1587 = vand.u32 %v1406, 4294901760
        %1588 = vmatprep.subr.mxu0 %v1587
        %v1589 = vand.u32 %v1405, 4294901760
        %1590 = vmatpush1.msra.mxu0 %v1589
        %v1591 = vand.u32 %v1408, 4294901760
        %1592 = vmatprep.subr.mxu0 %v1591
        %v1593 = vand.u32 %v1407, 4294901760
        %1594 = vmatpush1.msra.mxu0 %v1593
        %v1595 = vand.u32 %v1410, 4294901760
        %1596 = vmatprep.subr.mxu0 %v1595
        %v1597 = vand.u32 %v1409, 4294901760
        %1598 = vmatpush1.msra.mxu0 %v1597
        %v1599 = vand.u32 %v1412, 4294901760
        %1600 = vmatprep.subr.mxu0 %v1599
        %v1601 = vand.u32 %v1411, 4294901760
        %1602 = vmatpush1.msra.mxu0 %v1601
        %v1603 = vand.u32 %v1414, 4294901760
        %1604 = vmatprep.subr.mxu0 %v1603
        %v1605 = vand.u32 %v1413, 4294901760
        %1606 = vmatpush1.msra.mxu0 %v1605
        %v1607 = vand.u32 %v1332, 4294901760
        %v1608 = vsub.f32 %v1332, %v1607
        %v1609 = vand.u32 %v1608, 4294901760
        %v1610 = vsub.f32 %v1608, %v1609
        %v1611 = vand.u32 %v1610, 4294901760
        %1612 = vmatprep.mubr.f32.mxu0 %v1611
        %v1613 = vand.u32 %v1331, 4294901760
        %v1614 = vsub.f32 %v1331, %v1613
        %v1615 = vand.u32 %v1614, 4294901760
        %v1616 = vsub.f32 %v1614, %v1615
        %v1617 = vand.u32 %v1616, 4294901760
        %1618 = vmatmul.mubr.f32.gmra.mrb[0].mxu0 %v1617
        %v1619 = vpop.f32.mrb[0].mxu0
        %v1620 = vadd.f32 0.0, %v1619
        %v1621 = vpop.f32.mrb[0].mxu0
        %v1622 = vadd.f32 0.0, %v1621
        %1623 = vdwg.mxu0
        %v1624 = vand.u32 %v1352, 4294901760
        %v1625 = vsub.f32 %v1352, %v1624
        %v1626 = vand.u32 %v1625, 4294901760
        %v1627 = vsub.f32 %v1625, %v1626
        %v1628 = vand.u32 %v1627, 4294901760
        %1629 = vmatprep.subr.mxu0 %v1628
        %v1630 = vand.u32 %v1351, 4294901760
        %v1631 = vsub.f32 %v1351, %v1630
        %v1632 = vand.u32 %v1631, 4294901760
        %v1633 = vsub.f32 %v1631, %v1632
        %v1634 = vand.u32 %v1633, 4294901760
        %1635 = vmatpush1.msra.mxu0 %v1634
        %v1636 = vand.u32 %v1354, 4294901760
        %v1637 = vsub.f32 %v1354, %v1636
        %v1638 = vand.u32 %v1637, 4294901760
        %v1639 = vsub.f32 %v1637, %v1638
        %v1640 = vand.u32 %v1639, 4294901760
        %1641 = vmatprep.subr.mxu0 %v1640
        %v1642 = vand.u32 %v1353, 4294901760
        %v1643 = vsub.f32 %v1353, %v1642
        %v1644 = vand.u32 %v1643, 4294901760
        %v1645 = vsub.f32 %v1643, %v1644
        %v1646 = vand.u32 %v1645, 4294901760
        %1647 = vmatpush1.msra.mxu0 %v1646
        %v1648 = vand.u32 %v1356, 4294901760
        %v1649 = vsub.f32 %v1356, %v1648
        %v1650 = vand.u32 %v1649, 4294901760
        %v1651 = vsub.f32 %v1649, %v1650
        %v1652 = vand.u32 %v1651, 4294901760
        %1653 = vmatprep.subr.mxu0 %v1652
        %v1654 = vand.u32 %v1355, 4294901760
        %v1655 = vsub.f32 %v1355, %v1654
        %v1656 = vand.u32 %v1655, 4294901760
        %v1657 = vsub.f32 %v1655, %v1656
        %v1658 = vand.u32 %v1657, 4294901760
        %1659 = vmatpush1.msra.mxu0 %v1658
        %v1660 = vand.u32 %v1358, 4294901760
        %v1661 = vsub.f32 %v1358, %v1660
        %v1662 = vand.u32 %v1661, 4294901760
        %v1663 = vsub.f32 %v1661, %v1662
        %v1664 = vand.u32 %v1663, 4294901760
        %1665 = vmatprep.subr.mxu0 %v1664
        %v1666 = vand.u32 %v1357, 4294901760
        %v1667 = vsub.f32 %v1357, %v1666
        %v1668 = vand.u32 %v1667, 4294901760
        %v1669 = vsub.f32 %v1667, %v1668
        %v1670 = vand.u32 %v1669, 4294901760
        %1671 = vmatpush1.msra.mxu0 %v1670
        %v1672 = vand.u32 %v1360, 4294901760
        %v1673 = vsub.f32 %v1360, %v1672
        %v1674 = vand.u32 %v1673, 4294901760
        %v1675 = vsub.f32 %v1673, %v1674
        %v1676 = vand.u32 %v1675, 4294901760
        %1677 = vmatprep.subr.mxu0 %v1676
        %v1678 = vand.u32 %v1359, 4294901760
        %v1679 = vsub.f32 %v1359, %v1678
        %v1680 = vand.u32 %v1679, 4294901760
        %v1681 = vsub.f32 %v1679, %v1680
        %v1682 = vand.u32 %v1681, 4294901760
        %1683 = vmatpush1.msra.mxu0 %v1682
        %v1684 = vand.u32 %v1362, 4294901760
        %v1685 = vsub.f32 %v1362, %v1684
        %v1686 = vand.u32 %v1685, 4294901760
        %v1687 = vsub.f32 %v1685, %v1686
        %v1688 = vand.u32 %v1687, 4294901760
        %1689 = vmatprep.subr.mxu0 %v1688
        %v1690 = vand.u32 %v1361, 4294901760
        %v1691 = vsub.f32 %v1361, %v1690
        %v1692 = vand.u32 %v1691, 4294901760
        %v1693 = vsub.f32 %v1691, %v1692
        %v1694 = vand.u32 %v1693, 4294901760
        %1695 = vmatpush1.msra.mxu0 %v1694
        %v1696 = vand.u32 %v1364, 4294901760
        %v1697 = vsub.f32 %v1364, %v1696
        %v1698 = vand.u32 %v1697, 4294901760
        %v1699 = vsub.f32 %v1697, %v1698
        %v1700 = vand.u32 %v1699, 4294901760
        %1701 = vmatprep.subr.mxu0 %v1700
        %v1702 = vand.u32 %v1363, 4294901760
        %v1703 = vsub.f32 %v1363, %v1702
        %v1704 = vand.u32 %v1703, 4294901760
        %v1705 = vsub.f32 %v1703, %v1704
        %v1706 = vand.u32 %v1705, 4294901760
        %1707 = vmatpush1.msra.mxu0 %v1706
        %v1708 = vand.u32 %v1366, 4294901760
        %v1709 = vsub.f32 %v1366, %v1708
        %v1710 = vand.u32 %v1709, 4294901760
        %v1711 = vsub.f32 %v1709, %v1710
        %v1712 = vand.u32 %v1711, 4294901760
        %1713 = vmatprep.subr.mxu0 %v1712
        %v1714 = vand.u32 %v1365, 4294901760
        %v1715 = vsub.f32 %v1365, %v1714
        %v1716 = vand.u32 %v1715, 4294901760
        %v1717 = vsub.f32 %v1715, %v1716
        %v1718 = vand.u32 %v1717, 4294901760
        %1719 = vmatpush1.msra.mxu0 %v1718
        %v1720 = vand.u32 %v1368, 4294901760
        %v1721 = vsub.f32 %v1368, %v1720
        %v1722 = vand.u32 %v1721, 4294901760
        %v1723 = vsub.f32 %v1721, %v1722
        %v1724 = vand.u32 %v1723, 4294901760
        %1725 = vmatprep.subr.mxu0 %v1724
        %v1726 = vand.u32 %v1367, 4294901760
        %v1727 = vsub.f32 %v1367, %v1726
        %v1728 = vand.u32 %v1727, 4294901760
        %v1729 = vsub.f32 %v1727, %v1728
        %v1730 = vand.u32 %v1729, 4294901760
        %1731 = vmatpush1.msra.mxu0 %v1730
        %v1732 = vand.u32 %v1370, 4294901760
        %v1733 = vsub.f32 %v1370, %v1732
        %v1734 = vand.u32 %v1733, 4294901760
        %v1735 = vsub.f32 %v1733, %v1734
        %v1736 = vand.u32 %v1735, 4294901760
        %1737 = vmatprep.subr.mxu0 %v1736
        %v1738 = vand.u32 %v1369, 4294901760
        %v1739 = vsub.f32 %v1369, %v1738
        %v1740 = vand.u32 %v1739, 4294901760
        %v1741 = vsub.f32 %v1739, %v1740
        %v1742 = vand.u32 %v1741, 4294901760
        %1743 = vmatpush1.msra.mxu0 %v1742
        %v1744 = vand.u32 %v1372, 4294901760
        %v1745 = vsub.f32 %v1372, %v1744
        %v1746 = vand.u32 %v1745, 4294901760
        %v1747 = vsub.f32 %v1745, %v1746
        %v1748 = vand.u32 %v1747, 4294901760
        %1749 = vmatprep.subr.mxu0 %v1748
        %v1750 = vand.u32 %v1371, 4294901760
        %v1751 = vsub.f32 %v1371, %v1750
        %v1752 = vand.u32 %v1751, 4294901760
        %v1753 = vsub.f32 %v1751, %v1752
        %v1754 = vand.u32 %v1753, 4294901760
        %1755 = vmatpush1.msra.mxu0 %v1754
        %v1756 = vand.u32 %v1374, 4294901760
        %v1757 = vsub.f32 %v1374, %v1756
        %v1758 = vand.u32 %v1757, 4294901760
        %v1759 = vsub.f32 %v1757, %v1758
        %v1760 = vand.u32 %v1759, 4294901760
        %1761 = vmatprep.subr.mxu0 %v1760
        %v1762 = vand.u32 %v1373, 4294901760
        %v1763 = vsub.f32 %v1373, %v1762
        %v1764 = vand.u32 %v1763, 4294901760
        %v1765 = vsub.f32 %v1763, %v1764
        %v1766 = vand.u32 %v1765, 4294901760
        %1767 = vmatpush1.msra.mxu0 %v1766
        %v1768 = vand.u32 %v1376, 4294901760
        %v1769 = vsub.f32 %v1376, %v1768
        %v1770 = vand.u32 %v1769, 4294901760
        %v1771 = vsub.f32 %v1769, %v1770
        %v1772 = vand.u32 %v1771, 4294901760
        %1773 = vmatprep.subr.mxu0 %v1772
        %v1774 = vand.u32 %v1375, 4294901760
        %v1775 = vsub.f32 %v1375, %v1774
        %v1776 = vand.u32 %v1775, 4294901760
        %v1777 = vsub.f32 %v1775, %v1776
        %v1778 = vand.u32 %v1777, 4294901760
        %1779 = vmatpush1.msra.mxu0 %v1778
        %v1780 = vand.u32 %v1378, 4294901760
        %v1781 = vsub.f32 %v1378, %v1780
        %v1782 = vand.u32 %v1781, 4294901760
        %v1783 = vsub.f32 %v1781, %v1782
        %v1784 = vand.u32 %v1783, 4294901760
        %1785 = vmatprep.subr.mxu0 %v1784
        %v1786 = vand.u32 %v1377, 4294901760
        %v1787 = vsub.f32 %v1377, %v1786
        %v1788 = vand.u32 %v1787, 4294901760
        %v1789 = vsub.f32 %v1787, %v1788
        %v1790 = vand.u32 %v1789, 4294901760
        %1791 = vmatpush1.msra.mxu0 %v1790
        %v1792 = vand.u32 %v1380, 4294901760
        %v1793 = vsub.f32 %v1380, %v1792
        %v1794 = vand.u32 %v1793, 4294901760
        %v1795 = vsub.f32 %v1793, %v1794
        %v1796 = vand.u32 %v1795, 4294901760
        %1797 = vmatprep.subr.mxu0 %v1796
        %v1798 = vand.u32 %v1379, 4294901760
        %v1799 = vsub.f32 %v1379, %v1798
        %v1800 = vand.u32 %v1799, 4294901760
        %v1801 = vsub.f32 %v1799, %v1800
        %v1802 = vand.u32 %v1801, 4294901760
        %1803 = vmatpush1.msra.mxu0 %v1802
        %v1804 = vand.u32 %v1382, 4294901760
        %v1805 = vsub.f32 %v1382, %v1804
        %v1806 = vand.u32 %v1805, 4294901760
        %v1807 = vsub.f32 %v1805, %v1806
        %v1808 = vand.u32 %v1807, 4294901760
        %1809 = vmatprep.subr.mxu0 %v1808
        %v1810 = vand.u32 %v1381, 4294901760
        %v1811 = vsub.f32 %v1381, %v1810
        %v1812 = vand.u32 %v1811, 4294901760
        %v1813 = vsub.f32 %v1811, %v1812
        %v1814 = vand.u32 %v1813, 4294901760
        %1815 = vmatpush1.msra.mxu0 %v1814
        %v1816 = vand.u32 %v1384, 4294901760
        %v1817 = vsub.f32 %v1384, %v1816
        %v1818 = vand.u32 %v1817, 4294901760
        %v1819 = vsub.f32 %v1817, %v1818
        %v1820 = vand.u32 %v1819, 4294901760
        %1821 = vmatprep.subr.mxu0 %v1820
        %v1822 = vand.u32 %v1383, 4294901760
        %v1823 = vsub.f32 %v1383, %v1822
        %v1824 = vand.u32 %v1823, 4294901760
        %v1825 = vsub.f32 %v1823, %v1824
        %v1826 = vand.u32 %v1825, 4294901760
        %1827 = vmatpush1.msra.mxu0 %v1826
        %v1828 = vand.u32 %v1386, 4294901760
        %v1829 = vsub.f32 %v1386, %v1828
        %v1830 = vand.u32 %v1829, 4294901760
        %v1831 = vsub.f32 %v1829, %v1830
        %v1832 = vand.u32 %v1831, 4294901760
        %1833 = vmatprep.subr.mxu0 %v1832
        %v1834 = vand.u32 %v1385, 4294901760
        %v1835 = vsub.f32 %v1385, %v1834
        %v1836 = vand.u32 %v1835, 4294901760
        %v1837 = vsub.f32 %v1835, %v1836
        %v1838 = vand.u32 %v1837, 4294901760
        %1839 = vmatpush1.msra.mxu0 %v1838
        %v1840 = vand.u32 %v1388, 4294901760
        %v1841 = vsub.f32 %v1388, %v1840
        %v1842 = vand.u32 %v1841, 4294901760
        %v1843 = vsub.f32 %v1841, %v1842
        %v1844 = vand.u32 %v1843, 4294901760
        %1845 = vmatprep.subr.mxu0 %v1844
        %v1846 = vand.u32 %v1387, 4294901760
        %v1847 = vsub.f32 %v1387, %v1846
        %v1848 = vand.u32 %v1847, 4294901760
        %v1849 = vsub.f32 %v1847, %v1848
        %v1850 = vand.u32 %v1849, 4294901760
        %1851 = vmatpush1.msra.mxu0 %v1850
        %v1852 = vand.u32 %v1390, 4294901760
        %v1853 = vsub.f32 %v1390, %v1852
        %v1854 = vand.u32 %v1853, 4294901760
        %v1855 = vsub.f32 %v1853, %v1854
        %v1856 = vand.u32 %v1855, 4294901760
        %1857 = vmatprep.subr.mxu0 %v1856
        %v1858 = vand.u32 %v1389, 4294901760
        %v1859 = vsub.f32 %v1389, %v1858
        %v1860 = vand.u32 %v1859, 4294901760
        %v1861 = vsub.f32 %v1859, %v1860
        %v1862 = vand.u32 %v1861, 4294901760
        %1863 = vmatpush1.msra.mxu0 %v1862
        %v1864 = vand.u32 %v1392, 4294901760
        %v1865 = vsub.f32 %v1392, %v1864
        %v1866 = vand.u32 %v1865, 4294901760
        %v1867 = vsub.f32 %v1865, %v1866
        %v1868 = vand.u32 %v1867, 4294901760
        %1869 = vmatprep.subr.mxu0 %v1868
        %v1870 = vand.u32 %v1391, 4294901760
        %v1871 = vsub.f32 %v1391, %v1870
        %v1872 = vand.u32 %v1871, 4294901760
        %v1873 = vsub.f32 %v1871, %v1872
        %v1874 = vand.u32 %v1873, 4294901760
        %1875 = vmatpush1.msra.mxu0 %v1874
        %v1876 = vand.u32 %v1394, 4294901760
        %v1877 = vsub.f32 %v1394, %v1876
        %v1878 = vand.u32 %v1877, 4294901760
        %v1879 = vsub.f32 %v1877, %v1878
        %v1880 = vand.u32 %v1879, 4294901760
        %1881 = vmatprep.subr.mxu0 %v1880
        %v1882 = vand.u32 %v1393, 4294901760
        %v1883 = vsub.f32 %v1393, %v1882
        %v1884 = vand.u32 %v1883, 4294901760
        %v1885 = vsub.f32 %v1883, %v1884
        %v1886 = vand.u32 %v1885, 4294901760
        %1887 = vmatpush1.msra.mxu0 %v1886
        %v1888 = vand.u32 %v1396, 4294901760
        %v1889 = vsub.f32 %v1396, %v1888
        %v1890 = vand.u32 %v1889, 4294901760
        %v1891 = vsub.f32 %v1889, %v1890
        %v1892 = vand.u32 %v1891, 4294901760
        %1893 = vmatprep.subr.mxu0 %v1892
        %v1894 = vand.u32 %v1395, 4294901760
        %v1895 = vsub.f32 %v1395, %v1894
        %v1896 = vand.u32 %v1895, 4294901760
        %v1897 = vsub.f32 %v1895, %v1896
        %v1898 = vand.u32 %v1897, 4294901760
        %1899 = vmatpush1.msra.mxu0 %v1898
        %v1900 = vand.u32 %v1398, 4294901760
        %v1901 = vsub.f32 %v1398, %v1900
        %v1902 = vand.u32 %v1901, 4294901760
        %v1903 = vsub.f32 %v1901, %v1902
        %v1904 = vand.u32 %v1903, 4294901760
        %1905 = vmatprep.subr.mxu0 %v1904
        %v1906 = vand.u32 %v1397, 4294901760
        %v1907 = vsub.f32 %v1397, %v1906
        %v1908 = vand.u32 %v1907, 4294901760
        %v1909 = vsub.f32 %v1907, %v1908
        %v1910 = vand.u32 %v1909, 4294901760
        %1911 = vmatpush1.msra.mxu0 %v1910
        %v1912 = vand.u32 %v1400, 4294901760
        %v1913 = vsub.f32 %v1400, %v1912
        %v1914 = vand.u32 %v1913, 4294901760
        %v1915 = vsub.f32 %v1913, %v1914
        %v1916 = vand.u32 %v1915, 4294901760
        %1917 = vmatprep.subr.mxu0 %v1916
        %v1918 = vand.u32 %v1399, 4294901760
        %v1919 = vsub.f32 %v1399, %v1918
        %v1920 = vand.u32 %v1919, 4294901760
        %v1921 = vsub.f32 %v1919, %v1920
        %v1922 = vand.u32 %v1921, 4294901760
        %1923 = vmatpush1.msra.mxu0 %v1922
        %v1924 = vand.u32 %v1402, 4294901760
        %v1925 = vsub.f32 %v1402, %v1924
        %v1926 = vand.u32 %v1925, 4294901760
        %v1927 = vsub.f32 %v1925, %v1926
        %v1928 = vand.u32 %v1927, 4294901760
        %1929 = vmatprep.subr.mxu0 %v1928
        %v1930 = vand.u32 %v1401, 4294901760
        %v1931 = vsub.f32 %v1401, %v1930
        %v1932 = vand.u32 %v1931, 4294901760
        %v1933 = vsub.f32 %v1931, %v1932
        %v1934 = vand.u32 %v1933, 4294901760
        %1935 = vmatpush1.msra.mxu0 %v1934
        %v1936 = vand.u32 %v1404, 4294901760
        %v1937 = vsub.f32 %v1404, %v1936
        %v1938 = vand.u32 %v1937, 4294901760
        %v1939 = vsub.f32 %v1937, %v1938
        %v1940 = vand.u32 %v1939, 4294901760
        %1941 = vmatprep.subr.mxu0 %v1940
        %v1942 = vand.u32 %v1403, 4294901760
        %v1943 = vsub.f32 %v1403, %v1942
        %v1944 = vand.u32 %v1943, 4294901760
        %v1945 = vsub.f32 %v1943, %v1944
        %v1946 = vand.u32 %v1945, 4294901760
        %1947 = vmatpush1.msra.mxu0 %v1946
        %v1948 = vand.u32 %v1406, 4294901760
        %v1949 = vsub.f32 %v1406, %v1948
        %v1950 = vand.u32 %v1949, 4294901760
        %v1951 = vsub.f32 %v1949, %v1950
        %v1952 = vand.u32 %v1951, 4294901760
        %1953 = vmatprep.subr.mxu0 %v1952
        %v1954 = vand.u32 %v1405, 4294901760
        %v1955 = vsub.f32 %v1405, %v1954
        %v1956 = vand.u32 %v1955, 4294901760
        %v1957 = vsub.f32 %v1955, %v1956
        %v1958 = vand.u32 %v1957, 4294901760
        %1959 = vmatpush1.msra.mxu0 %v1958
        %v1960 = vand.u32 %v1408, 4294901760
        %v1961 = vsub.f32 %v1408, %v1960
        %v1962 = vand.u32 %v1961, 4294901760
        %v1963 = vsub.f32 %v1961, %v1962
        %v1964 = vand.u32 %v1963, 4294901760
        %1965 = vmatprep.subr.mxu0 %v1964
        %v1966 = vand.u32 %v1407, 4294901760
        %v1967 = vsub.f32 %v1407, %v1966
        %v1968 = vand.u32 %v1967, 4294901760
        %v1969 = vsub.f32 %v1967, %v1968
        %v1970 = vand.u32 %v1969, 4294901760
        %1971 = vmatpush1.msra.mxu0 %v1970
        %v1972 = vand.u32 %v1410, 4294901760
        %v1973 = vsub.f32 %v1410, %v1972
        %v1974 = vand.u32 %v1973, 4294901760
        %v1975 = vsub.f32 %v1973, %v1974
        %v1976 = vand.u32 %v1975, 4294901760
        %1977 = vmatprep.subr.mxu0 %v1976
        %v1978 = vand.u32 %v1409, 4294901760
        %v1979 = vsub.f32 %v1409, %v1978
        %v1980 = vand.u32 %v1979, 4294901760
        %v1981 = vsub.f32 %v1979, %v1980
        %v1982 = vand.u32 %v1981, 4294901760
        %1983 = vmatpush1.msra.mxu0 %v1982
        %v1984 = vand.u32 %v1412, 4294901760
        %v1985 = vsub.f32 %v1412, %v1984
        %v1986 = vand.u32 %v1985, 4294901760
        %v1987 = vsub.f32 %v1985, %v1986
        %v1988 = vand.u32 %v1987, 4294901760
        %1989 = vmatprep.subr.mxu0 %v1988
        %v1990 = vand.u32 %v1411, 4294901760
        %v1991 = vsub.f32 %v1411, %v1990
        %v1992 = vand.u32 %v1991, 4294901760
        %v1993 = vsub.f32 %v1991, %v1992
        %v1994 = vand.u32 %v1993, 4294901760
        %1995 = vmatpush1.msra.mxu0 %v1994
        %v1996 = vand.u32 %v1414, 4294901760
        %v1997 = vsub.f32 %v1414, %v1996
        %v1998 = vand.u32 %v1997, 4294901760
        %v1999 = vsub.f32 %v1997, %v1998
        %v2000 = vand.u32 %v1999, 4294901760
        %2001 = vmatprep.subr.mxu0 %v2000
        %v2002 = vand.u32 %v1413, 4294901760
        %v2003 = vsub.f32 %v1413, %v2002
        %v2004 = vand.u32 %v2003, 4294901760
        %v2005 = vsub.f32 %v2003, %v2004
        %v2006 = vand.u32 %v2005, 4294901760
        %2007 = vmatpush1.msra.mxu0 %v2006
        %v2008 = vand.u32 %v1332, 4294901760
        %2009 = vmatprep.mubr.f32.mxu0 %v2008
        %v2010 = vand.u32 %v1331, 4294901760
        %2011 = vmatmul.mubr.f32.gmra.mrb[0].mxu0 %v2010
        %v2012 = vpop.f32.mrb[0].mxu0
        %v2013 = vadd.f32 %v1620, %v2012
        %v2014 = vpop.f32.mrb[0].mxu0
        %v2015 = vadd.f32 %v1622, %v2014
        %2016 = vdwg.mxu0
        %v2017 = vand.u32 %v1352, 4294901760
        %v2018 = vsub.f32 %v1352, %v2017
        %2019 = vmatprep.subr.mxu0 %v2018
        %v2020 = vand.u32 %v1351, 4294901760
        %v2021 = vsub.f32 %v1351, %v2020
        %2022 = vmatpush1.msra.mxu0 %v2021
        %v2023 = vand.u32 %v1354, 4294901760
        %v2024 = vsub.f32 %v1354, %v2023
        %2025 = vmatprep.subr.mxu0 %v2024
        %v2026 = vand.u32 %v1353, 4294901760
        %v2027 = vsub.f32 %v1353, %v2026
        %2028 = vmatpush1.msra.mxu0 %v2027
        %v2029 = vand.u32 %v1356, 4294901760
        %v2030 = vsub.f32 %v1356, %v2029
        %2031 = vmatprep.subr.mxu0 %v2030
        %v2032 = vand.u32 %v1355, 4294901760
        %v2033 = vsub.f32 %v1355, %v2032
        %2034 = vmatpush1.msra.mxu0 %v2033
        %v2035 = vand.u32 %v1358, 4294901760
        %v2036 = vsub.f32 %v1358, %v2035
        %2037 = vmatprep.subr.mxu0 %v2036
        %v2038 = vand.u32 %v1357, 4294901760
        %v2039 = vsub.f32 %v1357, %v2038
        %2040 = vmatpush1.msra.mxu0 %v2039
        %v2041 = vand.u32 %v1360, 4294901760
        %v2042 = vsub.f32 %v1360, %v2041
        %2043 = vmatprep.subr.mxu0 %v2042
        %v2044 = vand.u32 %v1359, 4294901760
        %v2045 = vsub.f32 %v1359, %v2044
        %2046 = vmatpush1.msra.mxu0 %v2045
        %v2047 = vand.u32 %v1362, 4294901760
        %v2048 = vsub.f32 %v1362, %v2047
        %2049 = vmatprep.subr.mxu0 %v2048
        %v2050 = vand.u32 %v1361, 4294901760
        %v2051 = vsub.f32 %v1361, %v2050
        %2052 = vmatpush1.msra.mxu0 %v2051
        %v2053 = vand.u32 %v1364, 4294901760
        %v2054 = vsub.f32 %v1364, %v2053
        %2055 = vmatprep.subr.mxu0 %v2054
        %v2056 = vand.u32 %v1363, 4294901760
        %v2057 = vsub.f32 %v1363, %v2056
        %2058 = vmatpush1.msra.mxu0 %v2057
        %v2059 = vand.u32 %v1366, 4294901760
        %v2060 = vsub.f32 %v1366, %v2059
        %2061 = vmatprep.subr.mxu0 %v2060
        %v2062 = vand.u32 %v1365, 4294901760
        %v2063 = vsub.f32 %v1365, %v2062
        %2064 = vmatpush1.msra.mxu0 %v2063
        %v2065 = vand.u32 %v1368, 4294901760
        %v2066 = vsub.f32 %v1368, %v2065
        %2067 = vmatprep.subr.mxu0 %v2066
        %v2068 = vand.u32 %v1367, 4294901760
        %v2069 = vsub.f32 %v1367, %v2068
        %2070 = vmatpush1.msra.mxu0 %v2069
        %v2071 = vand.u32 %v1370, 4294901760
        %v2072 = vsub.f32 %v1370, %v2071
        %2073 = vmatprep.subr.mxu0 %v2072
        %v2074 = vand.u32 %v1369, 4294901760
        %v2075 = vsub.f32 %v1369, %v2074
        %2076 = vmatpush1.msra.mxu0 %v2075
        %v2077 = vand.u32 %v1372, 4294901760
        %v2078 = vsub.f32 %v1372, %v2077
        %2079 = vmatprep.subr.mxu0 %v2078
        %v2080 = vand.u32 %v1371, 4294901760
        %v2081 = vsub.f32 %v1371, %v2080
        %2082 = vmatpush1.msra.mxu0 %v2081
        %v2083 = vand.u32 %v1374, 4294901760
        %v2084 = vsub.f32 %v1374, %v2083
        %2085 = vmatprep.subr.mxu0 %v2084
        %v2086 = vand.u32 %v1373, 4294901760
        %v2087 = vsub.f32 %v1373, %v2086
        %2088 = vmatpush1.msra.mxu0 %v2087
        %v2089 = vand.u32 %v1376, 4294901760
        %v2090 = vsub.f32 %v1376, %v2089
        %2091 = vmatprep.subr.mxu0 %v2090
        %v2092 = vand.u32 %v1375, 4294901760
        %v2093 = vsub.f32 %v1375, %v2092
        %2094 = vmatpush1.msra.mxu0 %v2093
        %v2095 = vand.u32 %v1378, 4294901760
        %v2096 = vsub.f32 %v1378, %v2095
        %2097 = vmatprep.subr.mxu0 %v2096
        %v2098 = vand.u32 %v1377, 4294901760
        %v2099 = vsub.f32 %v1377, %v2098
        %2100 = vmatpush1.msra.mxu0 %v2099
        %v2101 = vand.u32 %v1380, 4294901760
        %v2102 = vsub.f32 %v1380, %v2101
        %2103 = vmatprep.subr.mxu0 %v2102
        %v2104 = vand.u32 %v1379, 4294901760
        %v2105 = vsub.f32 %v1379, %v2104
        %2106 = vmatpush1.msra.mxu0 %v2105
        %v2107 = vand.u32 %v1382, 4294901760
        %v2108 = vsub.f32 %v1382, %v2107
        %2109 = vmatprep.subr.mxu0 %v2108
        %v2110 = vand.u32 %v1381, 4294901760
        %v2111 = vsub.f32 %v1381, %v2110
        %2112 = vmatpush1.msra.mxu0 %v2111
        %v2113 = vand.u32 %v1384, 4294901760
        %v2114 = vsub.f32 %v1384, %v2113
        %2115 = vmatprep.subr.mxu0 %v2114
        %v2116 = vand.u32 %v1383, 4294901760
        %v2117 = vsub.f32 %v1383, %v2116
        %2118 = vmatpush1.msra.mxu0 %v2117
        %v2119 = vand.u32 %v1386, 4294901760
        %v2120 = vsub.f32 %v1386, %v2119
        %2121 = vmatprep.subr.mxu0 %v2120
        %v2122 = vand.u32 %v1385, 4294901760
        %v2123 = vsub.f32 %v1385, %v2122
        %2124 = vmatpush1.msra.mxu0 %v2123
        %v2125 = vand.u32 %v1388, 4294901760
        %v2126 = vsub.f32 %v1388, %v2125
        %2127 = vmatprep.subr.mxu0 %v2126
        %v2128 = vand.u32 %v1387, 4294901760
        %v2129 = vsub.f32 %v1387, %v2128
        %2130 = vmatpush1.msra.mxu0 %v2129
        %v2131 = vand.u32 %v1390, 4294901760
        %v2132 = vsub.f32 %v1390, %v2131
        %2133 = vmatprep.subr.mxu0 %v2132
        %v2134 = vand.u32 %v1389, 4294901760
        %v2135 = vsub.f32 %v1389, %v2134
        %2136 = vmatpush1.msra.mxu0 %v2135
        %v2137 = vand.u32 %v1392, 4294901760
        %v2138 = vsub.f32 %v1392, %v2137
        %2139 = vmatprep.subr.mxu0 %v2138
        %v2140 = vand.u32 %v1391, 4294901760
        %v2141 = vsub.f32 %v1391, %v2140
        %2142 = vmatpush1.msra.mxu0 %v2141
        %v2143 = vand.u32 %v1394, 4294901760
        %v2144 = vsub.f32 %v1394, %v2143
        %2145 = vmatprep.subr.mxu0 %v2144
        %v2146 = vand.u32 %v1393, 4294901760
        %v2147 = vsub.f32 %v1393, %v2146
        %2148 = vmatpush1.msra.mxu0 %v2147
        %v2149 = vand.u32 %v1396, 4294901760
        %v2150 = vsub.f32 %v1396, %v2149
        %2151 = vmatprep.subr.mxu0 %v2150
        %v2152 = vand.u32 %v1395, 4294901760
        %v2153 = vsub.f32 %v1395, %v2152
        %2154 = vmatpush1.msra.mxu0 %v2153
        %v2155 = vand.u32 %v1398, 4294901760
        %v2156 = vsub.f32 %v1398, %v2155
        %2157 = vmatprep.subr.mxu0 %v2156
        %v2158 = vand.u32 %v1397, 4294901760
        %v2159 = vsub.f32 %v1397, %v2158
        %2160 = vmatpush1.msra.mxu0 %v2159
        %v2161 = vand.u32 %v1400, 4294901760
        %v2162 = vsub.f32 %v1400, %v2161
        %2163 = vmatprep.subr.mxu0 %v2162
        %v2164 = vand.u32 %v1399, 4294901760
        %v2165 = vsub.f32 %v1399, %v2164
        %2166 = vmatpush1.msra.mxu0 %v2165
        %v2167 = vand.u32 %v1402, 4294901760
        %v2168 = vsub.f32 %v1402, %v2167
        %2169 = vmatprep.subr.mxu0 %v2168
        %v2170 = vand.u32 %v1401, 4294901760
        %v2171 = vsub.f32 %v1401, %v2170
        %2172 = vmatpush1.msra.mxu0 %v2171
        %v2173 = vand.u32 %v1404, 4294901760
        %v2174 = vsub.f32 %v1404, %v2173
        %2175 = vmatprep.subr.mxu0 %v2174
        %v2176 = vand.u32 %v1403, 4294901760
        %v2177 = vsub.f32 %v1403, %v2176
        %2178 = vmatpush1.msra.mxu0 %v2177
        %v2179 = vand.u32 %v1406, 4294901760
        %v2180 = vsub.f32 %v1406, %v2179
        %2181 = vmatprep.subr.mxu0 %v2180
        %v2182 = vand.u32 %v1405, 4294901760
        %v2183 = vsub.f32 %v1405, %v2182
        %2184 = vmatpush1.msra.mxu0 %v2183
        %v2185 = vand.u32 %v1408, 4294901760
        %v2186 = vsub.f32 %v1408, %v2185
        %2187 = vmatprep.subr.mxu0 %v2186
        %v2188 = vand.u32 %v1407, 4294901760
        %v2189 = vsub.f32 %v1407, %v2188
        %2190 = vmatpush1.msra.mxu0 %v2189
        %v2191 = vand.u32 %v1410, 4294901760
        %v2192 = vsub.f32 %v1410, %v2191
        %2193 = vmatprep.subr.mxu0 %v2192
        %v2194 = vand.u32 %v1409, 4294901760
        %v2195 = vsub.f32 %v1409, %v2194
        %2196 = vmatpush1.msra.mxu0 %v2195
        %v2197 = vand.u32 %v1412, 4294901760
        %v2198 = vsub.f32 %v1412, %v2197
        %2199 = vmatprep.subr.mxu0 %v2198
        %v2200 = vand.u32 %v1411, 4294901760
        %v2201 = vsub.f32 %v1411, %v2200
        %2202 = vmatpush1.msra.mxu0 %v2201
        %v2203 = vand.u32 %v1414, 4294901760
        %v2204 = vsub.f32 %v1414, %v2203
        %2205 = vmatprep.subr.mxu0 %v2204
        %v2206 = vand.u32 %v1413, 4294901760
        %v2207 = vsub.f32 %v1413, %v2206
        %2208 = vmatpush1.msra.mxu0 %v2207
        %v2209 = vand.u32 %v1332, 4294901760
        %v2210 = vsub.f32 %v1332, %v2209
        %2211 = vmatprep.mubr.f32.mxu0 %v2210
        %v2212 = vand.u32 %v1331, 4294901760
        %v2213 = vsub.f32 %v1331, %v2212
        %2214 = vmatmul.mubr.f32.gmra.mrb[0].mxu0 %v2213
        %v2215 = vpop.f32.mrb[0].mxu0
        %v2216 = vadd.f32 %v2013, %v2215
        %v2217 = vpop.f32.mrb[0].mxu0
        %v2218 = vadd.f32 %v2015, %v2217
        %2219 = vdwg.mxu0
        %v2220 = vand.u32 %v1352, 4294901760
        %2221 = vmatprep.subr.mxu0 %v2220
        %v2222 = vand.u32 %v1351, 4294901760
        %2223 = vmatpush1.msra.mxu0 %v2222
        %v2224 = vand.u32 %v1354, 4294901760
        %2225 = vmatprep.subr.mxu0 %v2224
        %v2226 = vand.u32 %v1353, 4294901760
        %2227 = vmatpush1.msra.mxu0 %v2226
        %v2228 = vand.u32 %v1356, 4294901760
        %2229 = vmatprep.subr.mxu0 %v2228
        %v2230 = vand.u32 %v1355, 4294901760
        %2231 = vmatpush1.msra.mxu0 %v2230
        %v2232 = vand.u32 %v1358, 4294901760
        %2233 = vmatprep.subr.mxu0 %v2232
        %v2234 = vand.u32 %v1357, 4294901760
        %2235 = vmatpush1.msra.mxu0 %v2234
        %v2236 = vand.u32 %v1360, 4294901760
        %2237 = vmatprep.subr.mxu0 %v2236
        %v2238 = vand.u32 %v1359, 4294901760
        %2239 = vmatpush1.msra.mxu0 %v2238
        %v2240 = vand.u32 %v1362, 4294901760
        %2241 = vmatprep.subr.mxu0 %v2240
        %v2242 = vand.u32 %v1361, 4294901760
        %2243 = vmatpush1.msra.mxu0 %v2242
        %v2244 = vand.u32 %v1364, 4294901760
        %2245 = vmatprep.subr.mxu0 %v2244
        %v2246 = vand.u32 %v1363, 4294901760
        %2247 = vmatpush1.msra.mxu0 %v2246
        %v2248 = vand.u32 %v1366, 4294901760
        %2249 = vmatprep.subr.mxu0 %v2248
        %v2250 = vand.u32 %v1365, 4294901760
        %2251 = vmatpush1.msra.mxu0 %v2250
        %v2252 = vand.u32 %v1368, 4294901760
        %2253 = vmatprep.subr.mxu0 %v2252
        %v2254 = vand.u32 %v1367, 4294901760
        %2255 = vmatpush1.msra.mxu0 %v2254
        %v2256 = vand.u32 %v1370, 4294901760
        %2257 = vmatprep.subr.mxu0 %v2256
        %v2258 = vand.u32 %v1369, 4294901760
        %2259 = vmatpush1.msra.mxu0 %v2258
        %v2260 = vand.u32 %v1372, 4294901760
        %2261 = vmatprep.subr.mxu0 %v2260
        %v2262 = vand.u32 %v1371, 4294901760
        %2263 = vmatpush1.msra.mxu0 %v2262
        %v2264 = vand.u32 %v1374, 4294901760
        %2265 = vmatprep.subr.mxu0 %v2264
        %v2266 = vand.u32 %v1373, 4294901760
        %2267 = vmatpush1.msra.mxu0 %v2266
        %v2268 = vand.u32 %v1376, 4294901760
        %2269 = vmatprep.subr.mxu0 %v2268
        %v2270 = vand.u32 %v1375, 4294901760
        %2271 = vmatpush1.msra.mxu0 %v2270
        %v2272 = vand.u32 %v1378, 4294901760
        %2273 = vmatprep.subr.mxu0 %v2272
        %v2274 = vand.u32 %v1377, 4294901760
        %2275 = vmatpush1.msra.mxu0 %v2274
        %v2276 = vand.u32 %v1380, 4294901760
        %2277 = vmatprep.subr.mxu0 %v2276
        %v2278 = vand.u32 %v1379, 4294901760
        %2279 = vmatpush1.msra.mxu0 %v2278
        %v2280 = vand.u32 %v1382, 4294901760
        %2281 = vmatprep.subr.mxu0 %v2280
        %v2282 = vand.u32 %v1381, 4294901760
        %2283 = vmatpush1.msra.mxu0 %v2282
        %v2284 = vand.u32 %v1384, 4294901760
        %2285 = vmatprep.subr.mxu0 %v2284
        %v2286 = vand.u32 %v1383, 4294901760
        %2287 = vmatpush1.msra.mxu0 %v2286
        %v2288 = vand.u32 %v1386, 4294901760
        %2289 = vmatprep.subr.mxu0 %v2288
        %v2290 = vand.u32 %v1385, 4294901760
        %2291 = vmatpush1.msra.mxu0 %v2290
        %v2292 = vand.u32 %v1388, 4294901760
        %2293 = vmatprep.subr.mxu0 %v2292
        %v2294 = vand.u32 %v1387, 4294901760
        %2295 = vmatpush1.msra.mxu0 %v2294
        %v2296 = vand.u32 %v1390, 4294901760
        %2297 = vmatprep.subr.mxu0 %v2296
        %v2298 = vand.u32 %v1389, 4294901760
        %2299 = vmatpush1.msra.mxu0 %v2298
        %v2300 = vand.u32 %v1392, 4294901760
        %2301 = vmatprep.subr.mxu0 %v2300
        %v2302 = vand.u32 %v1391, 4294901760
        %2303 = vmatpush1.msra.mxu0 %v2302
        %v2304 = vand.u32 %v1394, 4294901760
        %2305 = vmatprep.subr.mxu0 %v2304
        %v2306 = vand.u32 %v1393, 4294901760
        %2307 = vmatpush1.msra.mxu0 %v2306
        %v2308 = vand.u32 %v1396, 4294901760
        %2309 = vmatprep.subr.mxu0 %v2308
        %v2310 = vand.u32 %v1395, 4294901760
        %2311 = vmatpush1.msra.mxu0 %v2310
        %v2312 = vand.u32 %v1398, 4294901760
        %2313 = vmatprep.subr.mxu0 %v2312
        %v2314 = vand.u32 %v1397, 4294901760
        %2315 = vmatpush1.msra.mxu0 %v2314
        %v2316 = vand.u32 %v1400, 4294901760
        %2317 = vmatprep.subr.mxu0 %v2316
        %v2318 = vand.u32 %v1399, 4294901760
        %2319 = vmatpush1.msra.mxu0 %v2318
        %v2320 = vand.u32 %v1402, 4294901760
        %2321 = vmatprep.subr.mxu0 %v2320
        %v2322 = vand.u32 %v1401, 4294901760
        %2323 = vmatpush1.msra.mxu0 %v2322
        %v2324 = vand.u32 %v1404, 4294901760
        %2325 = vmatprep.subr.mxu0 %v2324
        %v2326 = vand.u32 %v1403, 4294901760
        %2327 = vmatpush1.msra.mxu0 %v2326
        %v2328 = vand.u32 %v1406, 4294901760
        %2329 = vmatprep.subr.mxu0 %v2328
        %v2330 = vand.u32 %v1405, 4294901760
        %2331 = vmatpush1.msra.mxu0 %v2330
        %v2332 = vand.u32 %v1408, 4294901760
        %2333 = vmatprep.subr.mxu0 %v2332
        %v2334 = vand.u32 %v1407, 4294901760
        %2335 = vmatpush1.msra.mxu0 %v2334
        %v2336 = vand.u32 %v1410, 4294901760
        %2337 = vmatprep.subr.mxu0 %v2336
        %v2338 = vand.u32 %v1409, 4294901760
        %2339 = vmatpush1.msra.mxu0 %v2338
        %v2340 = vand.u32 %v1412, 4294901760
        %2341 = vmatprep.subr.mxu0 %v2340
        %v2342 = vand.u32 %v1411, 4294901760
        %2343 = vmatpush1.msra.mxu0 %v2342
        %v2344 = vand.u32 %v1414, 4294901760
        %2345 = vmatprep.subr.mxu0 %v2344
        %v2346 = vand.u32 %v1413, 4294901760
        %2347 = vmatpush1.msra.mxu0 %v2346
        %v2348 = vand.u32 %v1332, 4294901760
        %v2349 = vsub.f32 %v1332, %v2348
        %v2350 = vand.u32 %v2349, 4294901760
        %2351 = vmatprep.mubr.f32.mxu0 %v2350
        %v2352 = vand.u32 %v1331, 4294901760
        %v2353 = vsub.f32 %v1331, %v2352
        %v2354 = vand.u32 %v2353, 4294901760
        %2355 = vmatmul.mubr.f32.gmra.mrb[0].mxu0 %v2354
        %v2356 = vpop.f32.mrb[0].mxu0
        %v2357 = vadd.f32 %v2216, %v2356
        %v2358 = vpop.f32.mrb[0].mxu0
        %v2359 = vadd.f32 %v2218, %v2358
        %2360 = vdwg.mxu0
        %v2361 = vand.u32 %v1352, 4294901760
        %v2362 = vsub.f32 %v1352, %v2361
        %v2363 = vand.u32 %v2362, 4294901760
        %2364 = vmatprep.subr.mxu0 %v2363
        %v2365 = vand.u32 %v1351, 4294901760
        %v2366 = vsub.f32 %v1351, %v2365
        %v2367 = vand.u32 %v2366, 4294901760
        %2368 = vmatpush1.msra.mxu0 %v2367
        %v2369 = vand.u32 %v1354, 4294901760
        %v2370 = vsub.f32 %v1354, %v2369
        %v2371 = vand.u32 %v2370, 4294901760
        %2372 = vmatprep.subr.mxu0 %v2371
        %v2373 = vand.u32 %v1353, 4294901760
        %v2374 = vsub.f32 %v1353, %v2373
        %v2375 = vand.u32 %v2374, 4294901760
        %2376 = vmatpush1.msra.mxu0 %v2375
        %v2377 = vand.u32 %v1356, 4294901760
        %v2378 = vsub.f32 %v1356, %v2377
        %v2379 = vand.u32 %v2378, 4294901760
        %2380 = vmatprep.subr.mxu0 %v2379
        %v2381 = vand.u32 %v1355, 4294901760
        %v2382 = vsub.f32 %v1355, %v2381
        %v2383 = vand.u32 %v2382, 4294901760
        %2384 = vmatpush1.msra.mxu0 %v2383
        %v2385 = vand.u32 %v1358, 4294901760
        %v2386 = vsub.f32 %v1358, %v2385
        %v2387 = vand.u32 %v2386, 4294901760
        %2388 = vmatprep.subr.mxu0 %v2387
        %v2389 = vand.u32 %v1357, 4294901760
        %v2390 = vsub.f32 %v1357, %v2389
        %v2391 = vand.u32 %v2390, 4294901760
        %2392 = vmatpush1.msra.mxu0 %v2391
        %v2393 = vand.u32 %v1360, 4294901760
        %v2394 = vsub.f32 %v1360, %v2393
        %v2395 = vand.u32 %v2394, 4294901760
        %2396 = vmatprep.subr.mxu0 %v2395
        %v2397 = vand.u32 %v1359, 4294901760
        %v2398 = vsub.f32 %v1359, %v2397
        %v2399 = vand.u32 %v2398, 4294901760
        %2400 = vmatpush1.msra.mxu0 %v2399
        %v2401 = vand.u32 %v1362, 4294901760
        %v2402 = vsub.f32 %v1362, %v2401
        %v2403 = vand.u32 %v2402, 4294901760
        %2404 = vmatprep.subr.mxu0 %v2403
        %v2405 = vand.u32 %v1361, 4294901760
        %v2406 = vsub.f32 %v1361, %v2405
        %v2407 = vand.u32 %v2406, 4294901760
        %2408 = vmatpush1.msra.mxu0 %v2407
        %v2409 = vand.u32 %v1364, 4294901760
        %v2410 = vsub.f32 %v1364, %v2409
        %v2411 = vand.u32 %v2410, 4294901760
        %2412 = vmatprep.subr.mxu0 %v2411
        %v2413 = vand.u32 %v1363, 4294901760
        %v2414 = vsub.f32 %v1363, %v2413
        %v2415 = vand.u32 %v2414, 4294901760
        %2416 = vmatpush1.msra.mxu0 %v2415
        %v2417 = vand.u32 %v1366, 4294901760
        %v2418 = vsub.f32 %v1366, %v2417
        %v2419 = vand.u32 %v2418, 4294901760
        %2420 = vmatprep.subr.mxu0 %v2419
        %v2421 = vand.u32 %v1365, 4294901760
        %v2422 = vsub.f32 %v1365, %v2421
        %v2423 = vand.u32 %v2422, 4294901760
        %2424 = vmatpush1.msra.mxu0 %v2423
        %v2425 = vand.u32 %v1368, 4294901760
        %v2426 = vsub.f32 %v1368, %v2425
        %v2427 = vand.u32 %v2426, 4294901760
        %2428 = vmatprep.subr.mxu0 %v2427
        %v2429 = vand.u32 %v1367, 4294901760
        %v2430 = vsub.f32 %v1367, %v2429
        %v2431 = vand.u32 %v2430, 4294901760
        %2432 = vmatpush1.msra.mxu0 %v2431
        %v2433 = vand.u32 %v1370, 4294901760
        %v2434 = vsub.f32 %v1370, %v2433
        %v2435 = vand.u32 %v2434, 4294901760
        %2436 = vmatprep.subr.mxu0 %v2435
        %v2437 = vand.u32 %v1369, 4294901760
        %v2438 = vsub.f32 %v1369, %v2437
        %v2439 = vand.u32 %v2438, 4294901760
        %2440 = vmatpush1.msra.mxu0 %v2439
        %v2441 = vand.u32 %v1372, 4294901760
        %v2442 = vsub.f32 %v1372, %v2441
        %v2443 = vand.u32 %v2442, 4294901760
        %2444 = vmatprep.subr.mxu0 %v2443
        %v2445 = vand.u32 %v1371, 4294901760
        %v2446 = vsub.f32 %v1371, %v2445
        %v2447 = vand.u32 %v2446, 4294901760
        %2448 = vmatpush1.msra.mxu0 %v2447
        %v2449 = vand.u32 %v1374, 4294901760
        %v2450 = vsub.f32 %v1374, %v2449
        %v2451 = vand.u32 %v2450, 4294901760
        %2452 = vmatprep.subr.mxu0 %v2451
        %v2453 = vand.u32 %v1373, 4294901760
        %v2454 = vsub.f32 %v1373, %v2453
        %v2455 = vand.u32 %v2454, 4294901760
        %2456 = vmatpush1.msra.mxu0 %v2455
        %v2457 = vand.u32 %v1376, 4294901760
        %v2458 = vsub.f32 %v1376, %v2457
        %v2459 = vand.u32 %v2458, 4294901760
        %2460 = vmatprep.subr.mxu0 %v2459
        %v2461 = vand.u32 %v1375, 4294901760
        %v2462 = vsub.f32 %v1375, %v2461
        %v2463 = vand.u32 %v2462, 4294901760
        %2464 = vmatpush1.msra.mxu0 %v2463
        %v2465 = vand.u32 %v1378, 4294901760
        %v2466 = vsub.f32 %v1378, %v2465
        %v2467 = vand.u32 %v2466, 4294901760
        %2468 = vmatprep.subr.mxu0 %v2467
        %v2469 = vand.u32 %v1377, 4294901760
        %v2470 = vsub.f32 %v1377, %v2469
        %v2471 = vand.u32 %v2470, 4294901760
        %2472 = vmatpush1.msra.mxu0 %v2471
        %v2473 = vand.u32 %v1380, 4294901760
        %v2474 = vsub.f32 %v1380, %v2473
        %v2475 = vand.u32 %v2474, 4294901760
        %2476 = vmatprep.subr.mxu0 %v2475
        %v2477 = vand.u32 %v1379, 4294901760
        %v2478 = vsub.f32 %v1379, %v2477
        %v2479 = vand.u32 %v2478, 4294901760
        %2480 = vmatpush1.msra.mxu0 %v2479
        %v2481 = vand.u32 %v1382, 4294901760
        %v2482 = vsub.f32 %v1382, %v2481
        %v2483 = vand.u32 %v2482, 4294901760
        %2484 = vmatprep.subr.mxu0 %v2483
        %v2485 = vand.u32 %v1381, 4294901760
        %v2486 = vsub.f32 %v1381, %v2485
        %v2487 = vand.u32 %v2486, 4294901760
        %2488 = vmatpush1.msra.mxu0 %v2487
        %v2489 = vand.u32 %v1384, 4294901760
        %v2490 = vsub.f32 %v1384, %v2489
        %v2491 = vand.u32 %v2490, 4294901760
        %2492 = vmatprep.subr.mxu0 %v2491
        %v2493 = vand.u32 %v1383, 4294901760
        %v2494 = vsub.f32 %v1383, %v2493
        %v2495 = vand.u32 %v2494, 4294901760
        %2496 = vmatpush1.msra.mxu0 %v2495
        %v2497 = vand.u32 %v1386, 4294901760
        %v2498 = vsub.f32 %v1386, %v2497
        %v2499 = vand.u32 %v2498, 4294901760
        %2500 = vmatprep.subr.mxu0 %v2499
        %v2501 = vand.u32 %v1385, 4294901760
        %v2502 = vsub.f32 %v1385, %v2501
        %v2503 = vand.u32 %v2502, 4294901760
        %2504 = vmatpush1.msra.mxu0 %v2503
        %v2505 = vand.u32 %v1388, 4294901760
        %v2506 = vsub.f32 %v1388, %v2505
        %v2507 = vand.u32 %v2506, 4294901760
        %2508 = vmatprep.subr.mxu0 %v2507
        %v2509 = vand.u32 %v1387, 4294901760
        %v2510 = vsub.f32 %v1387, %v2509
        %v2511 = vand.u32 %v2510, 4294901760
        %2512 = vmatpush1.msra.mxu0 %v2511
        %v2513 = vand.u32 %v1390, 4294901760
        %v2514 = vsub.f32 %v1390, %v2513
        %v2515 = vand.u32 %v2514, 4294901760
        %2516 = vmatprep.subr.mxu0 %v2515
        %v2517 = vand.u32 %v1389, 4294901760
        %v2518 = vsub.f32 %v1389, %v2517
        %v2519 = vand.u32 %v2518, 4294901760
        %2520 = vmatpush1.msra.mxu0 %v2519
        %v2521 = vand.u32 %v1392, 4294901760
        %v2522 = vsub.f32 %v1392, %v2521
        %v2523 = vand.u32 %v2522, 4294901760
        %2524 = vmatprep.subr.mxu0 %v2523
        %v2525 = vand.u32 %v1391, 4294901760
        %v2526 = vsub.f32 %v1391, %v2525
        %v2527 = vand.u32 %v2526, 4294901760
        %2528 = vmatpush1.msra.mxu0 %v2527
        %v2529 = vand.u32 %v1394, 4294901760
        %v2530 = vsub.f32 %v1394, %v2529
        %v2531 = vand.u32 %v2530, 4294901760
        %2532 = vmatprep.subr.mxu0 %v2531
        %v2533 = vand.u32 %v1393, 4294901760
        %v2534 = vsub.f32 %v1393, %v2533
        %v2535 = vand.u32 %v2534, 4294901760
        %2536 = vmatpush1.msra.mxu0 %v2535
        %v2537 = vand.u32 %v1396, 4294901760
        %v2538 = vsub.f32 %v1396, %v2537
        %v2539 = vand.u32 %v2538, 4294901760
        %2540 = vmatprep.subr.mxu0 %v2539
        %v2541 = vand.u32 %v1395, 4294901760
        %v2542 = vsub.f32 %v1395, %v2541
        %v2543 = vand.u32 %v2542, 4294901760
        %2544 = vmatpush1.msra.mxu0 %v2543
        %v2545 = vand.u32 %v1398, 4294901760
        %v2546 = vsub.f32 %v1398, %v2545
        %v2547 = vand.u32 %v2546, 4294901760
        %2548 = vmatprep.subr.mxu0 %v2547
        %v2549 = vand.u32 %v1397, 4294901760
        %v2550 = vsub.f32 %v1397, %v2549
        %v2551 = vand.u32 %v2550, 4294901760
        %2552 = vmatpush1.msra.mxu0 %v2551
        %v2553 = vand.u32 %v1400, 4294901760
        %v2554 = vsub.f32 %v1400, %v2553
        %v2555 = vand.u32 %v2554, 4294901760
        %2556 = vmatprep.subr.mxu0 %v2555
        %v2557 = vand.u32 %v1399, 4294901760
        %v2558 = vsub.f32 %v1399, %v2557
        %v2559 = vand.u32 %v2558, 4294901760
        %2560 = vmatpush1.msra.mxu0 %v2559
        %v2561 = vand.u32 %v1402, 4294901760
        %v2562 = vsub.f32 %v1402, %v2561
        %v2563 = vand.u32 %v2562, 4294901760
        %2564 = vmatprep.subr.mxu0 %v2563
        %v2565 = vand.u32 %v1401, 4294901760
        %v2566 = vsub.f32 %v1401, %v2565
        %v2567 = vand.u32 %v2566, 4294901760
        %2568 = vmatpush1.msra.mxu0 %v2567
        %v2569 = vand.u32 %v1404, 4294901760
        %v2570 = vsub.f32 %v1404, %v2569
        %v2571 = vand.u32 %v2570, 4294901760
        %2572 = vmatprep.subr.mxu0 %v2571
        %v2573 = vand.u32 %v1403, 4294901760
        %v2574 = vsub.f32 %v1403, %v2573
        %v2575 = vand.u32 %v2574, 4294901760
        %2576 = vmatpush1.msra.mxu0 %v2575
        %v2577 = vand.u32 %v1406, 4294901760
        %v2578 = vsub.f32 %v1406, %v2577
        %v2579 = vand.u32 %v2578, 4294901760
        %2580 = vmatprep.subr.mxu0 %v2579
        %v2581 = vand.u32 %v1405, 4294901760
        %v2582 = vsub.f32 %v1405, %v2581
        %v2583 = vand.u32 %v2582, 4294901760
        %2584 = vmatpush1.msra.mxu0 %v2583
        %v2585 = vand.u32 %v1408, 4294901760
        %v2586 = vsub.f32 %v1408, %v2585
        %v2587 = vand.u32 %v2586, 4294901760
        %2588 = vmatprep.subr.mxu0 %v2587
        %v2589 = vand.u32 %v1407, 4294901760
        %v2590 = vsub.f32 %v1407, %v2589
        %v2591 = vand.u32 %v2590, 4294901760
        %2592 = vmatpush1.msra.mxu0 %v2591
        %v2593 = vand.u32 %v1410, 4294901760
        %v2594 = vsub.f32 %v1410, %v2593
        %v2595 = vand.u32 %v2594, 4294901760
        %2596 = vmatprep.subr.mxu0 %v2595
        %v2597 = vand.u32 %v1409, 4294901760
        %v2598 = vsub.f32 %v1409, %v2597
        %v2599 = vand.u32 %v2598, 4294901760
        %2600 = vmatpush1.msra.mxu0 %v2599
        %v2601 = vand.u32 %v1412, 4294901760
        %v2602 = vsub.f32 %v1412, %v2601
        %v2603 = vand.u32 %v2602, 4294901760
        %2604 = vmatprep.subr.mxu0 %v2603
        %v2605 = vand.u32 %v1411, 4294901760
        %v2606 = vsub.f32 %v1411, %v2605
        %v2607 = vand.u32 %v2606, 4294901760
        %2608 = vmatpush1.msra.mxu0 %v2607
        %v2609 = vand.u32 %v1414, 4294901760
        %v2610 = vsub.f32 %v1414, %v2609
        %v2611 = vand.u32 %v2610, 4294901760
        %2612 = vmatprep.subr.mxu0 %v2611
        %v2613 = vand.u32 %v1413, 4294901760
        %v2614 = vsub.f32 %v1413, %v2613
        %v2615 = vand.u32 %v2614, 4294901760
        %2616 = vmatpush1.msra.mxu0 %v2615
        %v2617 = vand.u32 %v1332, 4294901760
        %2618 = vmatprep.mubr.f32.mxu0 %v2617
        %v2619 = vand.u32 %v1331, 4294901760
        %2620 = vmatmul.mubr.f32.gmra.mrb[0].mxu0 %v2619
        %v2621 = vpop.f32.mrb[0].mxu0
        %v2622 = vadd.f32 %v2357, %v2621
        %v2623 = vpop.f32.mrb[0].mxu0
        %v2624 = vadd.f32 %v2359, %v2623
        %2625 = vdwg.mxu0
        %v2626 = vand.u32 %v1352, 4294901760
        %2627 = vmatprep.subr.mxu0 %v2626
        %v2628 = vand.u32 %v1351, 4294901760
        %2629 = vmatpush1.msra.mxu0 %v2628
        %v2630 = vand.u32 %v1354, 4294901760
        %2631 = vmatprep.subr.mxu0 %v2630
        %v2632 = vand.u32 %v1353, 4294901760
        %2633 = vmatpush1.msra.mxu0 %v2632
        %v2634 = vand.u32 %v1356, 4294901760
        %2635 = vmatprep.subr.mxu0 %v2634
        %v2636 = vand.u32 %v1355, 4294901760
        %2637 = vmatpush1.msra.mxu0 %v2636
        %v2638 = vand.u32 %v1358, 4294901760
        %2639 = vmatprep.subr.mxu0 %v2638
        %v2640 = vand.u32 %v1357, 4294901760
        %2641 = vmatpush1.msra.mxu0 %v2640
        %v2642 = vand.u32 %v1360, 4294901760
        %2643 = vmatprep.subr.mxu0 %v2642
        %v2644 = vand.u32 %v1359, 4294901760
        %2645 = vmatpush1.msra.mxu0 %v2644
        %v2646 = vand.u32 %v1362, 4294901760
        %2647 = vmatprep.subr.mxu0 %v2646
        %v2648 = vand.u32 %v1361, 4294901760
        %2649 = vmatpush1.msra.mxu0 %v2648
        %v2650 = vand.u32 %v1364, 4294901760
        %2651 = vmatprep.subr.mxu0 %v2650
        %v2652 = vand.u32 %v1363, 4294901760
        %2653 = vmatpush1.msra.mxu0 %v2652
        %v2654 = vand.u32 %v1366, 4294901760
        %2655 = vmatprep.subr.mxu0 %v2654
        %v2656 = vand.u32 %v1365, 4294901760
        %2657 = vmatpush1.msra.mxu0 %v2656
        %v2658 = vand.u32 %v1368, 4294901760
        %2659 = vmatprep.subr.mxu0 %v2658
        %v2660 = vand.u32 %v1367, 4294901760
        %2661 = vmatpush1.msra.mxu0 %v2660
        %v2662 = vand.u32 %v1370, 4294901760
        %2663 = vmatprep.subr.mxu0 %v2662
        %v2664 = vand.u32 %v1369, 4294901760
        %2665 = vmatpush1.msra.mxu0 %v2664
        %v2666 = vand.u32 %v1372, 4294901760
        %2667 = vmatprep.subr.mxu0 %v2666
        %v2668 = vand.u32 %v1371, 4294901760
        %2669 = vmatpush1.msra.mxu0 %v2668
        %v2670 = vand.u32 %v1374, 4294901760
        %2671 = vmatprep.subr.mxu0 %v2670
        %v2672 = vand.u32 %v1373, 4294901760
        %2673 = vmatpush1.msra.mxu0 %v2672
        %v2674 = vand.u32 %v1376, 4294901760
        %2675 = vmatprep.subr.mxu0 %v2674
        %v2676 = vand.u32 %v1375, 4294901760
        %2677 = vmatpush1.msra.mxu0 %v2676
        %v2678 = vand.u32 %v1378, 4294901760
        %2679 = vmatprep.subr.mxu0 %v2678
        %v2680 = vand.u32 %v1377, 4294901760
        %2681 = vmatpush1.msra.mxu0 %v2680
        %v2682 = vand.u32 %v1380, 4294901760
        %2683 = vmatprep.subr.mxu0 %v2682
        %v2684 = vand.u32 %v1379, 4294901760
        %2685 = vmatpush1.msra.mxu0 %v2684
        %v2686 = vand.u32 %v1382, 4294901760
        %2687 = vmatprep.subr.mxu0 %v2686
        %v2688 = vand.u32 %v1381, 4294901760
        %2689 = vmatpush1.msra.mxu0 %v2688
        %v2690 = vand.u32 %v1384, 4294901760
        %2691 = vmatprep.subr.mxu0 %v2690
        %v2692 = vand.u32 %v1383, 4294901760
        %2693 = vmatpush1.msra.mxu0 %v2692
        %v2694 = vand.u32 %v1386, 4294901760
        %2695 = vmatprep.subr.mxu0 %v2694
        %v2696 = vand.u32 %v1385, 4294901760
        %2697 = vmatpush1.msra.mxu0 %v2696
        %v2698 = vand.u32 %v1388, 4294901760
        %2699 = vmatprep.subr.mxu0 %v2698
        %v2700 = vand.u32 %v1387, 4294901760
        %2701 = vmatpush1.msra.mxu0 %v2700
        %v2702 = vand.u32 %v1390, 4294901760
        %2703 = vmatprep.subr.mxu0 %v2702
        %v2704 = vand.u32 %v1389, 4294901760
        %2705 = vmatpush1.msra.mxu0 %v2704
        %v2706 = vand.u32 %v1392, 4294901760
        %2707 = vmatprep.subr.mxu0 %v2706
        %v2708 = vand.u32 %v1391, 4294901760
        %2709 = vmatpush1.msra.mxu0 %v2708
        %v2710 = vand.u32 %v1394, 4294901760
        %2711 = vmatprep.subr.mxu0 %v2710
        %v2712 = vand.u32 %v1393, 4294901760
        %2713 = vmatpush1.msra.mxu0 %v2712
        %v2714 = vand.u32 %v1396, 4294901760
        %2715 = vmatprep.subr.mxu0 %v2714
        %v2716 = vand.u32 %v1395, 4294901760
        %2717 = vmatpush1.msra.mxu0 %v2716
        %v2718 = vand.u32 %v1398, 4294901760
        %2719 = vmatprep.subr.mxu0 %v2718
        %v2720 = vand.u32 %v1397, 4294901760
        %2721 = vmatpush1.msra.mxu0 %v2720
        %v2722 = vand.u32 %v1400, 4294901760
        %2723 = vmatprep.subr.mxu0 %v2722
        %v2724 = vand.u32 %v1399, 4294901760
        %2725 = vmatpush1.msra.mxu0 %v2724
        %v2726 = vand.u32 %v1402, 4294901760
        %2727 = vmatprep.subr.mxu0 %v2726
        %v2728 = vand.u32 %v1401, 4294901760
        %2729 = vmatpush1.msra.mxu0 %v2728
        %v2730 = vand.u32 %v1404, 4294901760
        %2731 = vmatprep.subr.mxu0 %v2730
        %v2732 = vand.u32 %v1403, 4294901760
        %2733 = vmatpush1.msra.mxu0 %v2732
        %v2734 = vand.u32 %v1406, 4294901760
        %2735 = vmatprep.subr.mxu0 %v2734
        %v2736 = vand.u32 %v1405, 4294901760
        %2737 = vmatpush1.msra.mxu0 %v2736
        %v2738 = vand.u32 %v1408, 4294901760
        %2739 = vmatprep.subr.mxu0 %v2738
        %v2740 = vand.u32 %v1407, 4294901760
        %2741 = vmatpush1.msra.mxu0 %v2740
        %v2742 = vand.u32 %v1410, 4294901760
        %2743 = vmatprep.subr.mxu0 %v2742
        %v2744 = vand.u32 %v1409, 4294901760
        %2745 = vmatpush1.msra.mxu0 %v2744
        %v2746 = vand.u32 %v1412, 4294901760
        %2747 = vmatprep.subr.mxu0 %v2746
        %v2748 = vand.u32 %v1411, 4294901760
        %2749 = vmatpush1.msra.mxu0 %v2748
        %v2750 = vand.u32 %v1414, 4294901760
        %2751 = vmatprep.subr.mxu0 %v2750
        %v2752 = vand.u32 %v1413, 4294901760
        %2753 = vmatpush1.msra.mxu0 %v2752
        %v2754 = vand.u32 %v1332, 4294901760
        %2755 = vmatprep.mubr.f32.mxu0 %v2754
        %v2756 = vand.u32 %v1331, 4294901760
        %2757 = vmatmul.mubr.f32.gmra.mrb[0].mxu0 %v2756
        %v2758 = vpop.f32.mrb[0].mxu0
        %v2759 = vadd.f32 %v2622, %v2758
        %v2760 = vpop.f32.mrb[0].mxu0
        %v2761 = vadd.f32 %v2624, %v2760
        %2762 = vdwg.mxu0
        %v2763 = vand.u32 %v1416, 4294901760
        %2764 = vmatprep.subr.mxu0 %v2763
        %v2765 = vand.u32 %v1415, 4294901760
        %2766 = vmatpush1.msra.mxu0 %v2765
        %v2767 = vand.u32 %v1418, 4294901760
        %2768 = vmatprep.subr.mxu0 %v2767
        %v2769 = vand.u32 %v1417, 4294901760
        %2770 = vmatpush1.msra.mxu0 %v2769
        %v2771 = vand.u32 %v1420, 4294901760
        %2772 = vmatprep.subr.mxu0 %v2771
        %v2773 = vand.u32 %v1419, 4294901760
        %2774 = vmatpush1.msra.mxu0 %v2773
        %v2775 = vand.u32 %v1422, 4294901760
        %2776 = vmatprep.subr.mxu0 %v2775
        %v2777 = vand.u32 %v1421, 4294901760
        %2778 = vmatpush1.msra.mxu0 %v2777
        %v2779 = vand.u32 %v1424, 4294901760
        %2780 = vmatprep.subr.mxu0 %v2779
        %v2781 = vand.u32 %v1423, 4294901760
        %2782 = vmatpush1.msra.mxu0 %v2781
        %v2783 = vand.u32 %v1426, 4294901760
        %2784 = vmatprep.subr.mxu0 %v2783
        %v2785 = vand.u32 %v1425, 4294901760
        %2786 = vmatpush1.msra.mxu0 %v2785
        %v2787 = vand.u32 %v1428, 4294901760
        %2788 = vmatprep.subr.mxu0 %v2787
        %v2789 = vand.u32 %v1427, 4294901760
        %2790 = vmatpush1.msra.mxu0 %v2789
        %v2791 = vand.u32 %v1430, 4294901760
        %2792 = vmatprep.subr.mxu0 %v2791
        %v2793 = vand.u32 %v1429, 4294901760
        %2794 = vmatpush1.msra.mxu0 %v2793
        %v2795 = vand.u32 %v1432, 4294901760
        %2796 = vmatprep.subr.mxu0 %v2795
        %v2797 = vand.u32 %v1431, 4294901760
        %2798 = vmatpush1.msra.mxu0 %v2797
        %v2799 = vand.u32 %v1434, 4294901760
        %2800 = vmatprep.subr.mxu0 %v2799
        %v2801 = vand.u32 %v1433, 4294901760
        %2802 = vmatpush1.msra.mxu0 %v2801
        %v2803 = vand.u32 %v1436, 4294901760
        %2804 = vmatprep.subr.mxu0 %v2803
        %v2805 = vand.u32 %v1435, 4294901760
        %2806 = vmatpush1.msra.mxu0 %v2805
        %v2807 = vand.u32 %v1438, 4294901760
        %2808 = vmatprep.subr.mxu0 %v2807
        %v2809 = vand.u32 %v1437, 4294901760
        %2810 = vmatpush1.msra.mxu0 %v2809
        %v2811 = vand.u32 %v1440, 4294901760
        %2812 = vmatprep.subr.mxu0 %v2811
        %v2813 = vand.u32 %v1439, 4294901760
        %2814 = vmatpush1.msra.mxu0 %v2813
        %v2815 = vand.u32 %v1442, 4294901760
        %2816 = vmatprep.subr.mxu0 %v2815
        %v2817 = vand.u32 %v1441, 4294901760
        %2818 = vmatpush1.msra.mxu0 %v2817
        %v2819 = vand.u32 %v1444, 4294901760
        %2820 = vmatprep.subr.mxu0 %v2819
        %v2821 = vand.u32 %v1443, 4294901760
        %2822 = vmatpush1.msra.mxu0 %v2821
        %v2823 = vand.u32 %v1446, 4294901760
        %2824 = vmatprep.subr.mxu0 %v2823
        %v2825 = vand.u32 %v1445, 4294901760
        %2826 = vmatpush1.msra.mxu0 %v2825
        %v2827 = vand.u32 %v1448, 4294901760
        %2828 = vmatprep.subr.mxu0 %v2827
        %v2829 = vand.u32 %v1447, 4294901760
        %2830 = vmatpush1.msra.mxu0 %v2829
        %v2831 = vand.u32 %v1450, 4294901760
        %2832 = vmatprep.subr.mxu0 %v2831
        %v2833 = vand.u32 %v1449, 4294901760
        %2834 = vmatpush1.msra.mxu0 %v2833
        %v2835 = vand.u32 %v1452, 4294901760
        %2836 = vmatprep.subr.mxu0 %v2835
        %v2837 = vand.u32 %v1451, 4294901760
        %2838 = vmatpush1.msra.mxu0 %v2837
        %v2839 = vand.u32 %v1454, 4294901760
        %2840 = vmatprep.subr.mxu0 %v2839
        %v2841 = vand.u32 %v1453, 4294901760
        %2842 = vmatpush1.msra.mxu0 %v2841
        %v2843 = vand.u32 %v1456, 4294901760
        %2844 = vmatprep.subr.mxu0 %v2843
        %v2845 = vand.u32 %v1455, 4294901760
        %2846 = vmatpush1.msra.mxu0 %v2845
        %v2847 = vand.u32 %v1458, 4294901760
        %2848 = vmatprep.subr.mxu0 %v2847
        %v2849 = vand.u32 %v1457, 4294901760
        %2850 = vmatpush1.msra.mxu0 %v2849
        %v2851 = vand.u32 %v1460, 4294901760
        %2852 = vmatprep.subr.mxu0 %v2851
        %v2853 = vand.u32 %v1459, 4294901760
        %2854 = vmatpush1.msra.mxu0 %v2853
        %v2855 = vand.u32 %v1462, 4294901760
        %2856 = vmatprep.subr.mxu0 %v2855
        %v2857 = vand.u32 %v1461, 4294901760
        %2858 = vmatpush1.msra.mxu0 %v2857
        %v2859 = vand.u32 %v1464, 4294901760
        %2860 = vmatprep.subr.mxu0 %v2859
        %v2861 = vand.u32 %v1463, 4294901760
        %2862 = vmatpush1.msra.mxu0 %v2861
        %v2863 = vand.u32 %v1466, 4294901760
        %2864 = vmatprep.subr.mxu0 %v2863
        %v2865 = vand.u32 %v1465, 4294901760
        %2866 = vmatpush1.msra.mxu0 %v2865
        %v2867 = vand.u32 %v1468, 4294901760
        %2868 = vmatprep.subr.mxu0 %v2867
        %v2869 = vand.u32 %v1467, 4294901760
        %2870 = vmatpush1.msra.mxu0 %v2869
        %v2871 = vand.u32 %v1470, 4294901760
        %2872 = vmatprep.subr.mxu0 %v2871
        %v2873 = vand.u32 %v1469, 4294901760
        %2874 = vmatpush1.msra.mxu0 %v2873
        %v2875 = vand.u32 %v1472, 4294901760
        %2876 = vmatprep.subr.mxu0 %v2875
        %v2877 = vand.u32 %v1471, 4294901760
        %2878 = vmatpush1.msra.mxu0 %v2877
        %v2879 = vand.u32 %v1474, 4294901760
        %2880 = vmatprep.subr.mxu0 %v2879
        %v2881 = vand.u32 %v1473, 4294901760
        %2882 = vmatpush1.msra.mxu0 %v2881
        %v2883 = vand.u32 %v1476, 4294901760
        %2884 = vmatprep.subr.mxu0 %v2883
        %v2885 = vand.u32 %v1475, 4294901760
        %2886 = vmatpush1.msra.mxu0 %v2885
        %v2887 = vand.u32 %v1478, 4294901760
        %2888 = vmatprep.subr.mxu0 %v2887
        %v2889 = vand.u32 %v1477, 4294901760
        %2890 = vmatpush1.msra.mxu0 %v2889
        %v2891 = vand.u32 %v1350, 4294901760
        %v2892 = vsub.f32 %v1350, %v2891
        %v2893 = vand.u32 %v2892, 4294901760
        %v2894 = vsub.f32 %v2892, %v2893
        %v2895 = vand.u32 %v2894, 4294901760
        %2896 = vmatprep.mubr.f32.mxu0 %v2895
        %v2897 = vand.u32 %v1341, 4294901760
        %v2898 = vsub.f32 %v1341, %v2897
        %v2899 = vand.u32 %v2898, 4294901760
        %v2900 = vsub.f32 %v2898, %v2899
        %v2901 = vand.u32 %v2900, 4294901760
        %2902 = vmatmul.mubr.f32.gmra.mrb[0].mxu0 %v2901
        %v2903 = vpop.f32.mrb[0].mxu0
        %v2904 = vadd.f32 %v2759, %v2903
        %v2905 = vpop.f32.mrb[0].mxu0
        %v2906 = vadd.f32 %v2761, %v2905
        %2907 = vdwg.mxu0
        %v2908 = vand.u32 %v1416, 4294901760
        %v2909 = vsub.f32 %v1416, %v2908
        %v2910 = vand.u32 %v2909, 4294901760
        %v2911 = vsub.f32 %v2909, %v2910
        %v2912 = vand.u32 %v2911, 4294901760
        %2913 = vmatprep.subr.mxu0 %v2912
        %v2914 = vand.u32 %v1415, 4294901760
        %v2915 = vsub.f32 %v1415, %v2914
        %v2916 = vand.u32 %v2915, 4294901760
        %v2917 = vsub.f32 %v2915, %v2916
        %v2918 = vand.u32 %v2917, 4294901760
        %2919 = vmatpush1.msra.mxu0 %v2918
        %v2920 = vand.u32 %v1418, 4294901760
        %v2921 = vsub.f32 %v1418, %v2920
        %v2922 = vand.u32 %v2921, 4294901760
        %v2923 = vsub.f32 %v2921, %v2922
        %v2924 = vand.u32 %v2923, 4294901760
        %2925 = vmatprep.subr.mxu0 %v2924
        %v2926 = vand.u32 %v1417, 4294901760
        %v2927 = vsub.f32 %v1417, %v2926
        %v2928 = vand.u32 %v2927, 4294901760
        %v2929 = vsub.f32 %v2927, %v2928
        %v2930 = vand.u32 %v2929, 4294901760
        %2931 = vmatpush1.msra.mxu0 %v2930
        %v2932 = vand.u32 %v1420, 4294901760
        %v2933 = vsub.f32 %v1420, %v2932
        %v2934 = vand.u32 %v2933, 4294901760
        %v2935 = vsub.f32 %v2933, %v2934
        %v2936 = vand.u32 %v2935, 4294901760
        %2937 = vmatprep.subr.mxu0 %v2936
        %v2938 = vand.u32 %v1419, 4294901760
        %v2939 = vsub.f32 %v1419, %v2938
        %v2940 = vand.u32 %v2939, 4294901760
        %v2941 = vsub.f32 %v2939, %v2940
        %v2942 = vand.u32 %v2941, 4294901760
        %2943 = vmatpush1.msra.mxu0 %v2942
        %v2944 = vand.u32 %v1422, 4294901760
        %v2945 = vsub.f32 %v1422, %v2944
        %v2946 = vand.u32 %v2945, 4294901760
        %v2947 = vsub.f32 %v2945, %v2946
        %v2948 = vand.u32 %v2947, 4294901760
        %2949 = vmatprep.subr.mxu0 %v2948
        %v2950 = vand.u32 %v1421, 4294901760
        %v2951 = vsub.f32 %v1421, %v2950
        %v2952 = vand.u32 %v2951, 4294901760
        %v2953 = vsub.f32 %v2951, %v2952
        %v2954 = vand.u32 %v2953, 4294901760
        %2955 = vmatpush1.msra.mxu0 %v2954
        %v2956 = vand.u32 %v1424, 4294901760
        %v2957 = vsub.f32 %v1424, %v2956
        %v2958 = vand.u32 %v2957, 4294901760
        %v2959 = vsub.f32 %v2957, %v2958
        %v2960 = vand.u32 %v2959, 4294901760
        %2961 = vmatprep.subr.mxu0 %v2960
        %v2962 = vand.u32 %v1423, 4294901760
        %v2963 = vsub.f32 %v1423, %v2962
        %v2964 = vand.u32 %v2963, 4294901760
        %v2965 = vsub.f32 %v2963, %v2964
        %v2966 = vand.u32 %v2965, 4294901760
        %2967 = vmatpush1.msra.mxu0 %v2966
        %v2968 = vand.u32 %v1426, 4294901760
        %v2969 = vsub.f32 %v1426, %v2968
        %v2970 = vand.u32 %v2969, 4294901760
        %v2971 = vsub.f32 %v2969, %v2970
        %v2972 = vand.u32 %v2971, 4294901760
        %2973 = vmatprep.subr.mxu0 %v2972
        %v2974 = vand.u32 %v1425, 4294901760
        %v2975 = vsub.f32 %v1425, %v2974
        %v2976 = vand.u32 %v2975, 4294901760
        %v2977 = vsub.f32 %v2975, %v2976
        %v2978 = vand.u32 %v2977, 4294901760
        %2979 = vmatpush1.msra.mxu0 %v2978
        %v2980 = vand.u32 %v1428, 4294901760
        %v2981 = vsub.f32 %v1428, %v2980
        %v2982 = vand.u32 %v2981, 4294901760
        %v2983 = vsub.f32 %v2981, %v2982
        %v2984 = vand.u32 %v2983, 4294901760
        %2985 = vmatprep.subr.mxu0 %v2984
        %v2986 = vand.u32 %v1427, 4294901760
        %v2987 = vsub.f32 %v1427, %v2986
        %v2988 = vand.u32 %v2987, 4294901760
        %v2989 = vsub.f32 %v2987, %v2988
        %v2990 = vand.u32 %v2989, 4294901760
        %2991 = vmatpush1.msra.mxu0 %v2990
        %v2992 = vand.u32 %v1430, 4294901760
        %v2993 = vsub.f32 %v1430, %v2992
        %v2994 = vand.u32 %v2993, 4294901760
        %v2995 = vsub.f32 %v2993, %v2994
        %v2996 = vand.u32 %v2995, 4294901760
        %2997 = vmatprep.subr.mxu0 %v2996
        %v2998 = vand.u32 %v1429, 4294901760
        %v2999 = vsub.f32 %v1429, %v2998
        %v3000 = vand.u32 %v2999, 4294901760
        %v3001 = vsub.f32 %v2999, %v3000
        %v3002 = vand.u32 %v3001, 4294901760
        %3003 = vmatpush1.msra.mxu0 %v3002
        %v3004 = vand.u32 %v1432, 4294901760
        %v3005 = vsub.f32 %v1432, %v3004
        %v3006 = vand.u32 %v3005, 4294901760
        %v3007 = vsub.f32 %v3005, %v3006
        %v3008 = vand.u32 %v3007, 4294901760
        %3009 = vmatprep.subr.mxu0 %v3008
        %v3010 = vand.u32 %v1431, 4294901760
        %v3011 = vsub.f32 %v1431, %v3010
        %v3012 = vand.u32 %v3011, 4294901760
        %v3013 = vsub.f32 %v3011, %v3012
        %v3014 = vand.u32 %v3013, 4294901760
        %3015 = vmatpush1.msra.mxu0 %v3014
        %v3016 = vand.u32 %v1434, 4294901760
        %v3017 = vsub.f32 %v1434, %v3016
        %v3018 = vand.u32 %v3017, 4294901760
        %v3019 = vsub.f32 %v3017, %v3018
        %v3020 = vand.u32 %v3019, 4294901760
        %3021 = vmatprep.subr.mxu0 %v3020
        %v3022 = vand.u32 %v1433, 4294901760
        %v3023 = vsub.f32 %v1433, %v3022
        %v3024 = vand.u32 %v3023, 4294901760
        %v3025 = vsub.f32 %v3023, %v3024
        %v3026 = vand.u32 %v3025, 4294901760
        %3027 = vmatpush1.msra.mxu0 %v3026
        %v3028 = vand.u32 %v1436, 4294901760
        %v3029 = vsub.f32 %v1436, %v3028
        %v3030 = vand.u32 %v3029, 4294901760
        %v3031 = vsub.f32 %v3029, %v3030
        %v3032 = vand.u32 %v3031, 4294901760
        %3033 = vmatprep.subr.mxu0 %v3032
        %v3034 = vand.u32 %v1435, 4294901760
        %v3035 = vsub.f32 %v1435, %v3034
        %v3036 = vand.u32 %v3035, 4294901760
        %v3037 = vsub.f32 %v3035, %v3036
        %v3038 = vand.u32 %v3037, 4294901760
        %3039 = vmatpush1.msra.mxu0 %v3038
        %v3040 = vand.u32 %v1438, 4294901760
        %v3041 = vsub.f32 %v1438, %v3040
        %v3042 = vand.u32 %v3041, 4294901760
        %v3043 = vsub.f32 %v3041, %v3042
        %v3044 = vand.u32 %v3043, 4294901760
        %3045 = vmatprep.subr.mxu0 %v3044
        %v3046 = vand.u32 %v1437, 4294901760
        %v3047 = vsub.f32 %v1437, %v3046
        %v3048 = vand.u32 %v3047, 4294901760
        %v3049 = vsub.f32 %v3047, %v3048
        %v3050 = vand.u32 %v3049, 4294901760
        %3051 = vmatpush1.msra.mxu0 %v3050
        %v3052 = vand.u32 %v1440, 4294901760
        %v3053 = vsub.f32 %v1440, %v3052
        %v3054 = vand.u32 %v3053, 4294901760
        %v3055 = vsub.f32 %v3053, %v3054
        %v3056 = vand.u32 %v3055, 4294901760
        %3057 = vmatprep.subr.mxu0 %v3056
        %v3058 = vand.u32 %v1439, 4294901760
        %v3059 = vsub.f32 %v1439, %v3058
        %v3060 = vand.u32 %v3059, 4294901760
        %v3061 = vsub.f32 %v3059, %v3060
        %v3062 = vand.u32 %v3061, 4294901760
        %3063 = vmatpush1.msra.mxu0 %v3062
        %v3064 = vand.u32 %v1442, 4294901760
        %v3065 = vsub.f32 %v1442, %v3064
        %v3066 = vand.u32 %v3065, 4294901760
        %v3067 = vsub.f32 %v3065, %v3066
        %v3068 = vand.u32 %v3067, 4294901760
        %3069 = vmatprep.subr.mxu0 %v3068
        %v3070 = vand.u32 %v1441, 4294901760
        %v3071 = vsub.f32 %v1441, %v3070
        %v3072 = vand.u32 %v3071, 4294901760
        %v3073 = vsub.f32 %v3071, %v3072
        %v3074 = vand.u32 %v3073, 4294901760
        %3075 = vmatpush1.msra.mxu0 %v3074
        %v3076 = vand.u32 %v1444, 4294901760
        %v3077 = vsub.f32 %v1444, %v3076
        %v3078 = vand.u32 %v3077, 4294901760
        %v3079 = vsub.f32 %v3077, %v3078
        %v3080 = vand.u32 %v3079, 4294901760
        %3081 = vmatprep.subr.mxu0 %v3080
        %v3082 = vand.u32 %v1443, 4294901760
        %v3083 = vsub.f32 %v1443, %v3082
        %v3084 = vand.u32 %v3083, 4294901760
        %v3085 = vsub.f32 %v3083, %v3084
        %v3086 = vand.u32 %v3085, 4294901760
        %3087 = vmatpush1.msra.mxu0 %v3086
        %v3088 = vand.u32 %v1446, 4294901760
        %v3089 = vsub.f32 %v1446, %v3088
        %v3090 = vand.u32 %v3089, 4294901760
        %v3091 = vsub.f32 %v3089, %v3090
        %v3092 = vand.u32 %v3091, 4294901760
        %3093 = vmatprep.subr.mxu0 %v3092
        %v3094 = vand.u32 %v1445, 4294901760
        %v3095 = vsub.f32 %v1445, %v3094
        %v3096 = vand.u32 %v3095, 4294901760
        %v3097 = vsub.f32 %v3095, %v3096
        %v3098 = vand.u32 %v3097, 4294901760
        %3099 = vmatpush1.msra.mxu0 %v3098
        %v3100 = vand.u32 %v1448, 4294901760
        %v3101 = vsub.f32 %v1448, %v3100
        %v3102 = vand.u32 %v3101, 4294901760
        %v3103 = vsub.f32 %v3101, %v3102
        %v3104 = vand.u32 %v3103, 4294901760
        %3105 = vmatprep.subr.mxu0 %v3104
        %v3106 = vand.u32 %v1447, 4294901760
        %v3107 = vsub.f32 %v1447, %v3106
        %v3108 = vand.u32 %v3107, 4294901760
        %v3109 = vsub.f32 %v3107, %v3108
        %v3110 = vand.u32 %v3109, 4294901760
        %3111 = vmatpush1.msra.mxu0 %v3110
        %v3112 = vand.u32 %v1450, 4294901760
        %v3113 = vsub.f32 %v1450, %v3112
        %v3114 = vand.u32 %v3113, 4294901760
        %v3115 = vsub.f32 %v3113, %v3114
        %v3116 = vand.u32 %v3115, 4294901760
        %3117 = vmatprep.subr.mxu0 %v3116
        %v3118 = vand.u32 %v1449, 4294901760
        %v3119 = vsub.f32 %v1449, %v3118
        %v3120 = vand.u32 %v3119, 4294901760
        %v3121 = vsub.f32 %v3119, %v3120
        %v3122 = vand.u32 %v3121, 4294901760
        %3123 = vmatpush1.msra.mxu0 %v3122
        %v3124 = vand.u32 %v1452, 4294901760
        %v3125 = vsub.f32 %v1452, %v3124
        %v3126 = vand.u32 %v3125, 4294901760
        %v3127 = vsub.f32 %v3125, %v3126
        %v3128 = vand.u32 %v3127, 4294901760
        %3129 = vmatprep.subr.mxu0 %v3128
        %v3130 = vand.u32 %v1451, 4294901760
        %v3131 = vsub.f32 %v1451, %v3130
        %v3132 = vand.u32 %v3131, 4294901760
        %v3133 = vsub.f32 %v3131, %v3132
        %v3134 = vand.u32 %v3133, 4294901760
        %3135 = vmatpush1.msra.mxu0 %v3134
        %v3136 = vand.u32 %v1454, 4294901760
        %v3137 = vsub.f32 %v1454, %v3136
        %v3138 = vand.u32 %v3137, 4294901760
        %v3139 = vsub.f32 %v3137, %v3138
        %v3140 = vand.u32 %v3139, 4294901760
        %3141 = vmatprep.subr.mxu0 %v3140
        %v3142 = vand.u32 %v1453, 4294901760
        %v3143 = vsub.f32 %v1453, %v3142
        %v3144 = vand.u32 %v3143, 4294901760
        %v3145 = vsub.f32 %v3143, %v3144
        %v3146 = vand.u32 %v3145, 4294901760
        %3147 = vmatpush1.msra.mxu0 %v3146
        %v3148 = vand.u32 %v1456, 4294901760
        %v3149 = vsub.f32 %v1456, %v3148
        %v3150 = vand.u32 %v3149, 4294901760
        %v3151 = vsub.f32 %v3149, %v3150
        %v3152 = vand.u32 %v3151, 4294901760
        %3153 = vmatprep.subr.mxu0 %v3152
        %v3154 = vand.u32 %v1455, 4294901760
        %v3155 = vsub.f32 %v1455, %v3154
        %v3156 = vand.u32 %v3155, 4294901760
        %v3157 = vsub.f32 %v3155, %v3156
        %v3158 = vand.u32 %v3157, 4294901760
        %3159 = vmatpush1.msra.mxu0 %v3158
        %v3160 = vand.u32 %v1458, 4294901760
        %v3161 = vsub.f32 %v1458, %v3160
        %v3162 = vand.u32 %v3161, 4294901760
        %v3163 = vsub.f32 %v3161, %v3162
        %v3164 = vand.u32 %v3163, 4294901760
        %3165 = vmatprep.subr.mxu0 %v3164
        %v3166 = vand.u32 %v1457, 4294901760
        %v3167 = vsub.f32 %v1457, %v3166
        %v3168 = vand.u32 %v3167, 4294901760
        %v3169 = vsub.f32 %v3167, %v3168
        %v3170 = vand.u32 %v3169, 4294901760
        %3171 = vmatpush1.msra.mxu0 %v3170
        %v3172 = vand.u32 %v1460, 4294901760
        %v3173 = vsub.f32 %v1460, %v3172
        %v3174 = vand.u32 %v3173, 4294901760
        %v3175 = vsub.f32 %v3173, %v3174
        %v3176 = vand.u32 %v3175, 4294901760
        %3177 = vmatprep.subr.mxu0 %v3176
        %v3178 = vand.u32 %v1459, 4294901760
        %v3179 = vsub.f32 %v1459, %v3178
        %v3180 = vand.u32 %v3179, 4294901760
        %v3181 = vsub.f32 %v3179, %v3180
        %v3182 = vand.u32 %v3181, 4294901760
        %3183 = vmatpush1.msra.mxu0 %v3182
        %v3184 = vand.u32 %v1462, 4294901760
        %v3185 = vsub.f32 %v1462, %v3184
        %v3186 = vand.u32 %v3185, 4294901760
        %v3187 = vsub.f32 %v3185, %v3186
        %v3188 = vand.u32 %v3187, 4294901760
        %3189 = vmatprep.subr.mxu0 %v3188
        %v3190 = vand.u32 %v1461, 4294901760
        %v3191 = vsub.f32 %v1461, %v3190
        %v3192 = vand.u32 %v3191, 4294901760
        %v3193 = vsub.f32 %v3191, %v3192
        %v3194 = vand.u32 %v3193, 4294901760
        %3195 = vmatpush1.msra.mxu0 %v3194
        %v3196 = vand.u32 %v1464, 4294901760
        %v3197 = vsub.f32 %v1464, %v3196
        %v3198 = vand.u32 %v3197, 4294901760
        %v3199 = vsub.f32 %v3197, %v3198
        %v3200 = vand.u32 %v3199, 4294901760
        %3201 = vmatprep.subr.mxu0 %v3200
        %v3202 = vand.u32 %v1463, 4294901760
        %v3203 = vsub.f32 %v1463, %v3202
        %v3204 = vand.u32 %v3203, 4294901760
        %v3205 = vsub.f32 %v3203, %v3204
        %v3206 = vand.u32 %v3205, 4294901760
        %3207 = vmatpush1.msra.mxu0 %v3206
        %v3208 = vand.u32 %v1466, 4294901760
        %v3209 = vsub.f32 %v1466, %v3208
        %v3210 = vand.u32 %v3209, 4294901760
        %v3211 = vsub.f32 %v3209, %v3210
        %v3212 = vand.u32 %v3211, 4294901760
        %3213 = vmatprep.subr.mxu0 %v3212
        %v3214 = vand.u32 %v1465, 4294901760
        %v3215 = vsub.f32 %v1465, %v3214
        %v3216 = vand.u32 %v3215, 4294901760
        %v3217 = vsub.f32 %v3215, %v3216
        %v3218 = vand.u32 %v3217, 4294901760
        %3219 = vmatpush1.msra.mxu0 %v3218
        %v3220 = vand.u32 %v1468, 4294901760
        %v3221 = vsub.f32 %v1468, %v3220
        %v3222 = vand.u32 %v3221, 4294901760
        %v3223 = vsub.f32 %v3221, %v3222
        %v3224 = vand.u32 %v3223, 4294901760
        %3225 = vmatprep.subr.mxu0 %v3224
        %v3226 = vand.u32 %v1467, 4294901760
        %v3227 = vsub.f32 %v1467, %v3226
        %v3228 = vand.u32 %v3227, 4294901760
        %v3229 = vsub.f32 %v3227, %v3228
        %v3230 = vand.u32 %v3229, 4294901760
        %3231 = vmatpush1.msra.mxu0 %v3230
        %v3232 = vand.u32 %v1470, 4294901760
        %v3233 = vsub.f32 %v1470, %v3232
        %v3234 = vand.u32 %v3233, 4294901760
        %v3235 = vsub.f32 %v3233, %v3234
        %v3236 = vand.u32 %v3235, 4294901760
        %3237 = vmatprep.subr.mxu0 %v3236
        %v3238 = vand.u32 %v1469, 4294901760
        %v3239 = vsub.f32 %v1469, %v3238
        %v3240 = vand.u32 %v3239, 4294901760
        %v3241 = vsub.f32 %v3239, %v3240
        %v3242 = vand.u32 %v3241, 4294901760
        %3243 = vmatpush1.msra.mxu0 %v3242
        %v3244 = vand.u32 %v1472, 4294901760
        %v3245 = vsub.f32 %v1472, %v3244
        %v3246 = vand.u32 %v3245, 4294901760
        %v3247 = vsub.f32 %v3245, %v3246
        %v3248 = vand.u32 %v3247, 4294901760
        %3249 = vmatprep.subr.mxu0 %v3248
        %v3250 = vand.u32 %v1471, 4294901760
        %v3251 = vsub.f32 %v1471, %v3250
        %v3252 = vand.u32 %v3251, 4294901760
        %v3253 = vsub.f32 %v3251, %v3252
        %v3254 = vand.u32 %v3253, 4294901760
        %3255 = vmatpush1.msra.mxu0 %v3254
        %v3256 = vand.u32 %v1474, 4294901760
        %v3257 = vsub.f32 %v1474, %v3256
        %v3258 = vand.u32 %v3257, 4294901760
        %v3259 = vsub.f32 %v3257, %v3258
        %v3260 = vand.u32 %v3259, 4294901760
        %3261 = vmatprep.subr.mxu0 %v3260
        %v3262 = vand.u32 %v1473, 4294901760
        %v3263 = vsub.f32 %v1473, %v3262
        %v3264 = vand.u32 %v3263, 4294901760
        %v3265 = vsub.f32 %v3263, %v3264
        %v3266 = vand.u32 %v3265, 4294901760
        %3267 = vmatpush1.msra.mxu0 %v3266
        %v3268 = vand.u32 %v1476, 4294901760
        %v3269 = vsub.f32 %v1476, %v3268
        %v3270 = vand.u32 %v3269, 4294901760
        %v3271 = vsub.f32 %v3269, %v3270
        %v3272 = vand.u32 %v3271, 4294901760
        %3273 = vmatprep.subr.mxu0 %v3272
        %v3274 = vand.u32 %v1475, 4294901760
        %v3275 = vsub.f32 %v1475, %v3274
        %v3276 = vand.u32 %v3275, 4294901760
        %v3277 = vsub.f32 %v3275, %v3276
        %v3278 = vand.u32 %v3277, 4294901760
        %3279 = vmatpush1.msra.mxu0 %v3278
        %v3280 = vand.u32 %v1478, 4294901760
        %v3281 = vsub.f32 %v1478, %v3280
        %v3282 = vand.u32 %v3281, 4294901760
        %v3283 = vsub.f32 %v3281, %v3282
        %v3284 = vand.u32 %v3283, 4294901760
        %3285 = vmatprep.subr.mxu0 %v3284
        %v3286 = vand.u32 %v1477, 4294901760
        %v3287 = vsub.f32 %v1477, %v3286
        %v3288 = vand.u32 %v3287, 4294901760
        %v3289 = vsub.f32 %v3287, %v3288
        %v3290 = vand.u32 %v3289, 4294901760
        %3291 = vmatpush1.msra.mxu0 %v3290
        %v3292 = vand.u32 %v1350, 4294901760
        %3293 = vmatprep.mubr.f32.mxu0 %v3292
        %v3294 = vand.u32 %v1341, 4294901760
        %3295 = vmatmul.mubr.f32.gmra.mrb[0].mxu0 %v3294
        %v3296 = vpop.f32.mrb[0].mxu0
        %v3297 = vadd.f32 %v2904, %v3296
        %v3298 = vpop.f32.mrb[0].mxu0
        %v3299 = vadd.f32 %v2906, %v3298
        %3300 = vdwg.mxu0
        %v3301 = vand.u32 %v1416, 4294901760
        %v3302 = vsub.f32 %v1416, %v3301
        %3303 = vmatprep.subr.mxu0 %v3302
        %v3304 = vand.u32 %v1415, 4294901760
        %v3305 = vsub.f32 %v1415, %v3304
        %3306 = vmatpush1.msra.mxu0 %v3305
        %v3307 = vand.u32 %v1418, 4294901760
        %v3308 = vsub.f32 %v1418, %v3307
        %3309 = vmatprep.subr.mxu0 %v3308
        %v3310 = vand.u32 %v1417, 4294901760
        %v3311 = vsub.f32 %v1417, %v3310
        %3312 = vmatpush1.msra.mxu0 %v3311
        %v3313 = vand.u32 %v1420, 4294901760
        %v3314 = vsub.f32 %v1420, %v3313
        %3315 = vmatprep.subr.mxu0 %v3314
        %v3316 = vand.u32 %v1419, 4294901760
        %v3317 = vsub.f32 %v1419, %v3316
        %3318 = vmatpush1.msra.mxu0 %v3317
        %v3319 = vand.u32 %v1422, 4294901760
        %v3320 = vsub.f32 %v1422, %v3319
        %3321 = vmatprep.subr.mxu0 %v3320
        %v3322 = vand.u32 %v1421, 4294901760
        %v3323 = vsub.f32 %v1421, %v3322
        %3324 = vmatpush1.msra.mxu0 %v3323
        %v3325 = vand.u32 %v1424, 4294901760
        %v3326 = vsub.f32 %v1424, %v3325
        %3327 = vmatprep.subr.mxu0 %v3326
        %v3328 = vand.u32 %v1423, 4294901760
        %v3329 = vsub.f32 %v1423, %v3328
        %3330 = vmatpush1.msra.mxu0 %v3329
        %v3331 = vand.u32 %v1426, 4294901760
        %v3332 = vsub.f32 %v1426, %v3331
        %3333 = vmatprep.subr.mxu0 %v3332
        %v3334 = vand.u32 %v1425, 4294901760
        %v3335 = vsub.f32 %v1425, %v3334
        %3336 = vmatpush1.msra.mxu0 %v3335
        %v3337 = vand.u32 %v1428, 4294901760
        %v3338 = vsub.f32 %v1428, %v3337
        %3339 = vmatprep.subr.mxu0 %v3338
        %v3340 = vand.u32 %v1427, 4294901760
        %v3341 = vsub.f32 %v1427, %v3340
        %3342 = vmatpush1.msra.mxu0 %v3341
        %v3343 = vand.u32 %v1430, 4294901760
        %v3344 = vsub.f32 %v1430, %v3343
        %3345 = vmatprep.subr.mxu0 %v3344
        %v3346 = vand.u32 %v1429, 4294901760
        %v3347 = vsub.f32 %v1429, %v3346
        %3348 = vmatpush1.msra.mxu0 %v3347
        %v3349 = vand.u32 %v1432, 4294901760
        %v3350 = vsub.f32 %v1432, %v3349
        %3351 = vmatprep.subr.mxu0 %v3350
        %v3352 = vand.u32 %v1431, 4294901760
        %v3353 = vsub.f32 %v1431, %v3352
        %3354 = vmatpush1.msra.mxu0 %v3353
        %v3355 = vand.u32 %v1434, 4294901760
        %v3356 = vsub.f32 %v1434, %v3355
        %3357 = vmatprep.subr.mxu0 %v3356
        %v3358 = vand.u32 %v1433, 4294901760
        %v3359 = vsub.f32 %v1433, %v3358
        %3360 = vmatpush1.msra.mxu0 %v3359
        %v3361 = vand.u32 %v1436, 4294901760
        %v3362 = vsub.f32 %v1436, %v3361
        %3363 = vmatprep.subr.mxu0 %v3362
        %v3364 = vand.u32 %v1435, 4294901760
        %v3365 = vsub.f32 %v1435, %v3364
        %3366 = vmatpush1.msra.mxu0 %v3365
        %v3367 = vand.u32 %v1438, 4294901760
        %v3368 = vsub.f32 %v1438, %v3367
        %3369 = vmatprep.subr.mxu0 %v3368
        %v3370 = vand.u32 %v1437, 4294901760
        %v3371 = vsub.f32 %v1437, %v3370
        %3372 = vmatpush1.msra.mxu0 %v3371
        %v3373 = vand.u32 %v1440, 4294901760
        %v3374 = vsub.f32 %v1440, %v3373
        %3375 = vmatprep.subr.mxu0 %v3374
        %v3376 = vand.u32 %v1439, 4294901760
        %v3377 = vsub.f32 %v1439, %v3376
        %3378 = vmatpush1.msra.mxu0 %v3377
        %v3379 = vand.u32 %v1442, 4294901760
        %v3380 = vsub.f32 %v1442, %v3379
        %3381 = vmatprep.subr.mxu0 %v3380
        %v3382 = vand.u32 %v1441, 4294901760
        %v3383 = vsub.f32 %v1441, %v3382
        %3384 = vmatpush1.msra.mxu0 %v3383
        %v3385 = vand.u32 %v1444, 4294901760
        %v3386 = vsub.f32 %v1444, %v3385
        %3387 = vmatprep.subr.mxu0 %v3386
        %v3388 = vand.u32 %v1443, 4294901760
        %v3389 = vsub.f32 %v1443, %v3388
        %3390 = vmatpush1.msra.mxu0 %v3389
        %v3391 = vand.u32 %v1446, 4294901760
        %v3392 = vsub.f32 %v1446, %v3391
        %3393 = vmatprep.subr.mxu0 %v3392
        %v3394 = vand.u32 %v1445, 4294901760
        %v3395 = vsub.f32 %v1445, %v3394
        %3396 = vmatpush1.msra.mxu0 %v3395
        %v3397 = vand.u32 %v1448, 4294901760
        %v3398 = vsub.f32 %v1448, %v3397
        %3399 = vmatprep.subr.mxu0 %v3398
        %v3400 = vand.u32 %v1447, 4294901760
        %v3401 = vsub.f32 %v1447, %v3400
        %3402 = vmatpush1.msra.mxu0 %v3401
        %v3403 = vand.u32 %v1450, 4294901760
        %v3404 = vsub.f32 %v1450, %v3403
        %3405 = vmatprep.subr.mxu0 %v3404
        %v3406 = vand.u32 %v1449, 4294901760
        %v3407 = vsub.f32 %v1449, %v3406
        %3408 = vmatpush1.msra.mxu0 %v3407
        %v3409 = vand.u32 %v1452, 4294901760
        %v3410 = vsub.f32 %v1452, %v3409
        %3411 = vmatprep.subr.mxu0 %v3410
        %v3412 = vand.u32 %v1451, 4294901760
        %v3413 = vsub.f32 %v1451, %v3412
        %3414 = vmatpush1.msra.mxu0 %v3413
        %v3415 = vand.u32 %v1454, 4294901760
        %v3416 = vsub.f32 %v1454, %v3415
        %3417 = vmatprep.subr.mxu0 %v3416
        %v3418 = vand.u32 %v1453, 4294901760
        %v3419 = vsub.f32 %v1453, %v3418
        %3420 = vmatpush1.msra.mxu0 %v3419
        %v3421 = vand.u32 %v1456, 4294901760
        %v3422 = vsub.f32 %v1456, %v3421
        %3423 = vmatprep.subr.mxu0 %v3422
        %v3424 = vand.u32 %v1455, 4294901760
        %v3425 = vsub.f32 %v1455, %v3424
        %3426 = vmatpush1.msra.mxu0 %v3425
        %v3427 = vand.u32 %v1458, 4294901760
        %v3428 = vsub.f32 %v1458, %v3427
        %3429 = vmatprep.subr.mxu0 %v3428
        %v3430 = vand.u32 %v1457, 4294901760
        %v3431 = vsub.f32 %v1457, %v3430
        %3432 = vmatpush1.msra.mxu0 %v3431
        %v3433 = vand.u32 %v1460, 4294901760
        %v3434 = vsub.f32 %v1460, %v3433
        %3435 = vmatprep.subr.mxu0 %v3434
        %v3436 = vand.u32 %v1459, 4294901760
        %v3437 = vsub.f32 %v1459, %v3436
        %3438 = vmatpush1.msra.mxu0 %v3437
        %v3439 = vand.u32 %v1462, 4294901760
        %v3440 = vsub.f32 %v1462, %v3439
        %3441 = vmatprep.subr.mxu0 %v3440
        %v3442 = vand.u32 %v1461, 4294901760
        %v3443 = vsub.f32 %v1461, %v3442
        %3444 = vmatpush1.msra.mxu0 %v3443
        %v3445 = vand.u32 %v1464, 4294901760
        %v3446 = vsub.f32 %v1464, %v3445
        %3447 = vmatprep.subr.mxu0 %v3446
        %v3448 = vand.u32 %v1463, 4294901760
        %v3449 = vsub.f32 %v1463, %v3448
        %3450 = vmatpush1.msra.mxu0 %v3449
        %v3451 = vand.u32 %v1466, 4294901760
        %v3452 = vsub.f32 %v1466, %v3451
        %3453 = vmatprep.subr.mxu0 %v3452
        %v3454 = vand.u32 %v1465, 4294901760
        %v3455 = vsub.f32 %v1465, %v3454
        %3456 = vmatpush1.msra.mxu0 %v3455
        %v3457 = vand.u32 %v1468, 4294901760
        %v3458 = vsub.f32 %v1468, %v3457
        %3459 = vmatprep.subr.mxu0 %v3458
        %v3460 = vand.u32 %v1467, 4294901760
        %v3461 = vsub.f32 %v1467, %v3460
        %3462 = vmatpush1.msra.mxu0 %v3461
        %v3463 = vand.u32 %v1470, 4294901760
        %v3464 = vsub.f32 %v1470, %v3463
        %3465 = vmatprep.subr.mxu0 %v3464
        %v3466 = vand.u32 %v1469, 4294901760
        %v3467 = vsub.f32 %v1469, %v3466
        %3468 = vmatpush1.msra.mxu0 %v3467
        %v3469 = vand.u32 %v1472, 4294901760
        %v3470 = vsub.f32 %v1472, %v3469
        %3471 = vmatprep.subr.mxu0 %v3470
        %v3472 = vand.u32 %v1471, 4294901760
        %v3473 = vsub.f32 %v1471, %v3472
        %3474 = vmatpush1.msra.mxu0 %v3473
        %v3475 = vand.u32 %v1474, 4294901760
        %v3476 = vsub.f32 %v1474, %v3475
        %3477 = vmatprep.subr.mxu0 %v3476
        %v3478 = vand.u32 %v1473, 4294901760
        %v3479 = vsub.f32 %v1473, %v3478
        %3480 = vmatpush1.msra.mxu0 %v3479
        %v3481 = vand.u32 %v1476, 4294901760
        %v3482 = vsub.f32 %v1476, %v3481
        %3483 = vmatprep.subr.mxu0 %v3482
        %v3484 = vand.u32 %v1475, 4294901760
        %v3485 = vsub.f32 %v1475, %v3484
        %3486 = vmatpush1.msra.mxu0 %v3485
        %v3487 = vand.u32 %v1478, 4294901760
        %v3488 = vsub.f32 %v1478, %v3487
        %3489 = vmatprep.subr.mxu0 %v3488
        %v3490 = vand.u32 %v1477, 4294901760
        %v3491 = vsub.f32 %v1477, %v3490
        %3492 = vmatpush1.msra.mxu0 %v3491
        %v3493 = vand.u32 %v1350, 4294901760
        %v3494 = vsub.f32 %v1350, %v3493
        %3495 = vmatprep.mubr.f32.mxu0 %v3494
        %v3496 = vand.u32 %v1341, 4294901760
        %v3497 = vsub.f32 %v1341, %v3496
        %3498 = vmatmul.mubr.f32.gmra.mrb[0].mxu0 %v3497
        %v3499 = vpop.f32.mrb[0].mxu0
        %v3500 = vadd.f32 %v3297, %v3499
        %v3501 = vpop.f32.mrb[0].mxu0
        %v3502 = vadd.f32 %v3299, %v3501
        %3503 = vdwg.mxu0
        %v3504 = vand.u32 %v1416, 4294901760
        %3505 = vmatprep.subr.mxu0 %v3504
        %v3506 = vand.u32 %v1415, 4294901760
        %3507 = vmatpush1.msra.mxu0 %v3506
        %v3508 = vand.u32 %v1418, 4294901760
        %3509 = vmatprep.subr.mxu0 %v3508
        %v3510 = vand.u32 %v1417, 4294901760
        %3511 = vmatpush1.msra.mxu0 %v3510
        %v3512 = vand.u32 %v1420, 4294901760
        %3513 = vmatprep.subr.mxu0 %v3512
        %v3514 = vand.u32 %v1419, 4294901760
        %3515 = vmatpush1.msra.mxu0 %v3514
        %v3516 = vand.u32 %v1422, 4294901760
        %3517 = vmatprep.subr.mxu0 %v3516
        %v3518 = vand.u32 %v1421, 4294901760
        %3519 = vmatpush1.msra.mxu0 %v3518
        %v3520 = vand.u32 %v1424, 4294901760
        %3521 = vmatprep.subr.mxu0 %v3520
        %v3522 = vand.u32 %v1423, 4294901760
        %3523 = vmatpush1.msra.mxu0 %v3522
        %v3524 = vand.u32 %v1426, 4294901760
        %3525 = vmatprep.subr.mxu0 %v3524
        %v3526 = vand.u32 %v1425, 4294901760
        %3527 = vmatpush1.msra.mxu0 %v3526
        %v3528 = vand.u32 %v1428, 4294901760
        %3529 = vmatprep.subr.mxu0 %v3528
        %v3530 = vand.u32 %v1427, 4294901760
        %3531 = vmatpush1.msra.mxu0 %v3530
        %v3532 = vand.u32 %v1430, 4294901760
        %3533 = vmatprep.subr.mxu0 %v3532
        %v3534 = vand.u32 %v1429, 4294901760
        %3535 = vmatpush1.msra.mxu0 %v3534
        %v3536 = vand.u32 %v1432, 4294901760
        %3537 = vmatprep.subr.mxu0 %v3536
        %v3538 = vand.u32 %v1431, 4294901760
        %3539 = vmatpush1.msra.mxu0 %v3538
        %v3540 = vand.u32 %v1434, 4294901760
        %3541 = vmatprep.subr.mxu0 %v3540
        %v3542 = vand.u32 %v1433, 4294901760
        %3543 = vmatpush1.msra.mxu0 %v3542
        %v3544 = vand.u32 %v1436, 4294901760
        %3545 = vmatprep.subr.mxu0 %v3544
        %v3546 = vand.u32 %v1435, 4294901760
        %3547 = vmatpush1.msra.mxu0 %v3546
        %v3548 = vand.u32 %v1438, 4294901760
        %3549 = vmatprep.subr.mxu0 %v3548
        %v3550 = vand.u32 %v1437, 4294901760
        %3551 = vmatpush1.msra.mxu0 %v3550
        %v3552 = vand.u32 %v1440, 4294901760
        %3553 = vmatprep.subr.mxu0 %v3552
        %v3554 = vand.u32 %v1439, 4294901760
        %3555 = vmatpush1.msra.mxu0 %v3554
        %v3556 = vand.u32 %v1442, 4294901760
        %3557 = vmatprep.subr.mxu0 %v3556
        %v3558 = vand.u32 %v1441, 4294901760
        %3559 = vmatpush1.msra.mxu0 %v3558
        %v3560 = vand.u32 %v1444, 4294901760
        %3561 = vmatprep.subr.mxu0 %v3560
        %v3562 = vand.u32 %v1443, 4294901760
        %3563 = vmatpush1.msra.mxu0 %v3562
        %v3564 = vand.u32 %v1446, 4294901760
        %3565 = vmatprep.subr.mxu0 %v3564
        %v3566 = vand.u32 %v1445, 4294901760
        %3567 = vmatpush1.msra.mxu0 %v3566
        %v3568 = vand.u32 %v1448, 4294901760
        %3569 = vmatprep.subr.mxu0 %v3568
        %v3570 = vand.u32 %v1447, 4294901760
        %3571 = vmatpush1.msra.mxu0 %v3570
        %v3572 = vand.u32 %v1450, 4294901760
        %3573 = vmatprep.subr.mxu0 %v3572
        %v3574 = vand.u32 %v1449, 4294901760
        %3575 = vmatpush1.msra.mxu0 %v3574
        %v3576 = vand.u32 %v1452, 4294901760
        %3577 = vmatprep.subr.mxu0 %v3576
        %v3578 = vand.u32 %v1451, 4294901760
        %3579 = vmatpush1.msra.mxu0 %v3578
        %v3580 = vand.u32 %v1454, 4294901760
        %3581 = vmatprep.subr.mxu0 %v3580
        %v3582 = vand.u32 %v1453, 4294901760
        %3583 = vmatpush1.msra.mxu0 %v3582
        %v3584 = vand.u32 %v1456, 4294901760
        %3585 = vmatprep.subr.mxu0 %v3584
        %v3586 = vand.u32 %v1455, 4294901760
        %3587 = vmatpush1.msra.mxu0 %v3586
        %v3588 = vand.u32 %v1458, 4294901760
        %3589 = vmatprep.subr.mxu0 %v3588
        %v3590 = vand.u32 %v1457, 4294901760
        %3591 = vmatpush1.msra.mxu0 %v3590
        %v3592 = vand.u32 %v1460, 4294901760
        %3593 = vmatprep.subr.mxu0 %v3592
        %v3594 = vand.u32 %v1459, 4294901760
        %3595 = vmatpush1.msra.mxu0 %v3594
        %v3596 = vand.u32 %v1462, 4294901760
        %3597 = vmatprep.subr.mxu0 %v3596
        %v3598 = vand.u32 %v1461, 4294901760
        %3599 = vmatpush1.msra.mxu0 %v3598
        %v3600 = vand.u32 %v1464, 4294901760
        %3601 = vmatprep.subr.mxu0 %v3600
        %v3602 = vand.u32 %v1463, 4294901760
        %3603 = vmatpush1.msra.mxu0 %v3602
        %v3604 = vand.u32 %v1466, 4294901760
        %3605 = vmatprep.subr.mxu0 %v3604
        %v3606 = vand.u32 %v1465, 4294901760
        %3607 = vmatpush1.msra.mxu0 %v3606
        %v3608 = vand.u32 %v1468, 4294901760
        %3609 = vmatprep.subr.mxu0 %v3608
        %v3610 = vand.u32 %v1467, 4294901760
        %3611 = vmatpush1.msra.mxu0 %v3610
        %v3612 = vand.u32 %v1470, 4294901760
        %3613 = vmatprep.subr.mxu0 %v3612
        %v3614 = vand.u32 %v1469, 4294901760
        %3615 = vmatpush1.msra.mxu0 %v3614
        %v3616 = vand.u32 %v1472, 4294901760
        %3617 = vmatprep.subr.mxu0 %v3616
        %v3618 = vand.u32 %v1471, 4294901760
        %3619 = vmatpush1.msra.mxu0 %v3618
        %v3620 = vand.u32 %v1474, 4294901760
        %3621 = vmatprep.subr.mxu0 %v3620
        %v3622 = vand.u32 %v1473, 4294901760
        %3623 = vmatpush1.msra.mxu0 %v3622
        %v3624 = vand.u32 %v1476, 4294901760
        %3625 = vmatprep.subr.mxu0 %v3624
        %v3626 = vand.u32 %v1475, 4294901760
        %3627 = vmatpush1.msra.mxu0 %v3626
        %v3628 = vand.u32 %v1478, 4294901760
        %3629 = vmatprep.subr.mxu0 %v3628
        %v3630 = vand.u32 %v1477, 4294901760
        %3631 = vmatpush1.msra.mxu0 %v3630
        %v3632 = vand.u32 %v1350, 4294901760
        %v3633 = vsub.f32 %v1350, %v3632
        %v3634 = vand.u32 %v3633, 4294901760
        %3635 = vmatprep.mubr.f32.mxu0 %v3634
        %v3636 = vand.u32 %v1341, 4294901760
        %v3637 = vsub.f32 %v1341, %v3636
        %v3638 = vand.u32 %v3637, 4294901760
        %3639 = vmatmul.mubr.f32.gmra.mrb[0].mxu0 %v3638
        %v3640 = vpop.f32.mrb[0].mxu0
        %v3641 = vadd.f32 %v3500, %v3640
        %v3642 = vpop.f32.mrb[0].mxu0
        %v3643 = vadd.f32 %v3502, %v3642
        %3644 = vdwg.mxu0
        %v3645 = vand.u32 %v1416, 4294901760
        %v3646 = vsub.f32 %v1416, %v3645
        %v3647 = vand.u32 %v3646, 4294901760
        %3648 = vmatprep.subr.mxu0 %v3647
        %v3649 = vand.u32 %v1415, 4294901760
        %v3650 = vsub.f32 %v1415, %v3649
        %v3651 = vand.u32 %v3650, 4294901760
        %3652 = vmatpush1.msra.mxu0 %v3651
        %v3653 = vand.u32 %v1418, 4294901760
        %v3654 = vsub.f32 %v1418, %v3653
        %v3655 = vand.u32 %v3654, 4294901760
        %3656 = vmatprep.subr.mxu0 %v3655
        %v3657 = vand.u32 %v1417, 4294901760
        %v3658 = vsub.f32 %v1417, %v3657
        %v3659 = vand.u32 %v3658, 4294901760
        %3660 = vmatpush1.msra.mxu0 %v3659
        %v3661 = vand.u32 %v1420, 4294901760
        %v3662 = vsub.f32 %v1420, %v3661
        %v3663 = vand.u32 %v3662, 4294901760
        %3664 = vmatprep.subr.mxu0 %v3663
        %v3665 = vand.u32 %v1419, 4294901760
        %v3666 = vsub.f32 %v1419, %v3665
        %v3667 = vand.u32 %v3666, 4294901760
        %3668 = vmatpush1.msra.mxu0 %v3667
        %v3669 = vand.u32 %v1422, 4294901760
        %v3670 = vsub.f32 %v1422, %v3669
        %v3671 = vand.u32 %v3670, 4294901760
        %3672 = vmatprep.subr.mxu0 %v3671
        %v3673 = vand.u32 %v1421, 4294901760
        %v3674 = vsub.f32 %v1421, %v3673
        %v3675 = vand.u32 %v3674, 4294901760
        %3676 = vmatpush1.msra.mxu0 %v3675
        %v3677 = vand.u32 %v1424, 4294901760
        %v3678 = vsub.f32 %v1424, %v3677
        %v3679 = vand.u32 %v3678, 4294901760
        %3680 = vmatprep.subr.mxu0 %v3679
        %v3681 = vand.u32 %v1423, 4294901760
        %v3682 = vsub.f32 %v1423, %v3681
        %v3683 = vand.u32 %v3682, 4294901760
        %3684 = vmatpush1.msra.mxu0 %v3683
        %v3685 = vand.u32 %v1426, 4294901760
        %v3686 = vsub.f32 %v1426, %v3685
        %v3687 = vand.u32 %v3686, 4294901760
        %3688 = vmatprep.subr.mxu0 %v3687
        %v3689 = vand.u32 %v1425, 4294901760
        %v3690 = vsub.f32 %v1425, %v3689
        %v3691 = vand.u32 %v3690, 4294901760
        %3692 = vmatpush1.msra.mxu0 %v3691
        %v3693 = vand.u32 %v1428, 4294901760
        %v3694 = vsub.f32 %v1428, %v3693
        %v3695 = vand.u32 %v3694, 4294901760
        %3696 = vmatprep.subr.mxu0 %v3695
        %v3697 = vand.u32 %v1427, 4294901760
        %v3698 = vsub.f32 %v1427, %v3697
        %v3699 = vand.u32 %v3698, 4294901760
        %3700 = vmatpush1.msra.mxu0 %v3699
        %v3701 = vand.u32 %v1430, 4294901760
        %v3702 = vsub.f32 %v1430, %v3701
        %v3703 = vand.u32 %v3702, 4294901760
        %3704 = vmatprep.subr.mxu0 %v3703
        %v3705 = vand.u32 %v1429, 4294901760
        %v3706 = vsub.f32 %v1429, %v3705
        %v3707 = vand.u32 %v3706, 4294901760
        %3708 = vmatpush1.msra.mxu0 %v3707
        %v3709 = vand.u32 %v1432, 4294901760
        %v3710 = vsub.f32 %v1432, %v3709
        %v3711 = vand.u32 %v3710, 4294901760
        %3712 = vmatprep.subr.mxu0 %v3711
        %v3713 = vand.u32 %v1431, 4294901760
        %v3714 = vsub.f32 %v1431, %v3713
        %v3715 = vand.u32 %v3714, 4294901760
        %3716 = vmatpush1.msra.mxu0 %v3715
        %v3717 = vand.u32 %v1434, 4294901760
        %v3718 = vsub.f32 %v1434, %v3717
        %v3719 = vand.u32 %v3718, 4294901760
        %3720 = vmatprep.subr.mxu0 %v3719
        %v3721 = vand.u32 %v1433, 4294901760
        %v3722 = vsub.f32 %v1433, %v3721
        %v3723 = vand.u32 %v3722, 4294901760
        %3724 = vmatpush1.msra.mxu0 %v3723
        %v3725 = vand.u32 %v1436, 4294901760
        %v3726 = vsub.f32 %v1436, %v3725
        %v3727 = vand.u32 %v3726, 4294901760
        %3728 = vmatprep.subr.mxu0 %v3727
        %v3729 = vand.u32 %v1435, 4294901760
        %v3730 = vsub.f32 %v1435, %v3729
        %v3731 = vand.u32 %v3730, 4294901760
        %3732 = vmatpush1.msra.mxu0 %v3731
        %v3733 = vand.u32 %v1438, 4294901760
        %v3734 = vsub.f32 %v1438, %v3733
        %v3735 = vand.u32 %v3734, 4294901760
        %3736 = vmatprep.subr.mxu0 %v3735
        %v3737 = vand.u32 %v1437, 4294901760
        %v3738 = vsub.f32 %v1437, %v3737
        %v3739 = vand.u32 %v3738, 4294901760
        %3740 = vmatpush1.msra.mxu0 %v3739
        %v3741 = vand.u32 %v1440, 4294901760
        %v3742 = vsub.f32 %v1440, %v3741
        %v3743 = vand.u32 %v3742, 4294901760
        %3744 = vmatprep.subr.mxu0 %v3743
        %v3745 = vand.u32 %v1439, 4294901760
        %v3746 = vsub.f32 %v1439, %v3745
        %v3747 = vand.u32 %v3746, 4294901760
        %3748 = vmatpush1.msra.mxu0 %v3747
        %v3749 = vand.u32 %v1442, 4294901760
        %v3750 = vsub.f32 %v1442, %v3749
        %v3751 = vand.u32 %v3750, 4294901760
        %3752 = vmatprep.subr.mxu0 %v3751
        %v3753 = vand.u32 %v1441, 4294901760
        %v3754 = vsub.f32 %v1441, %v3753
        %v3755 = vand.u32 %v3754, 4294901760
        %3756 = vmatpush1.msra.mxu0 %v3755
        %v3757 = vand.u32 %v1444, 4294901760
        %v3758 = vsub.f32 %v1444, %v3757
        %v3759 = vand.u32 %v3758, 4294901760
        %3760 = vmatprep.subr.mxu0 %v3759
        %v3761 = vand.u32 %v1443, 4294901760
        %v3762 = vsub.f32 %v1443, %v3761
        %v3763 = vand.u32 %v3762, 4294901760
        %3764 = vmatpush1.msra.mxu0 %v3763
        %v3765 = vand.u32 %v1446, 4294901760
        %v3766 = vsub.f32 %v1446, %v3765
        %v3767 = vand.u32 %v3766, 4294901760
        %3768 = vmatprep.subr.mxu0 %v3767
        %v3769 = vand.u32 %v1445, 4294901760
        %v3770 = vsub.f32 %v1445, %v3769
        %v3771 = vand.u32 %v3770, 4294901760
        %3772 = vmatpush1.msra.mxu0 %v3771
        %v3773 = vand.u32 %v1448, 4294901760
        %v3774 = vsub.f32 %v1448, %v3773
        %v3775 = vand.u32 %v3774, 4294901760
        %3776 = vmatprep.subr.mxu0 %v3775
        %v3777 = vand.u32 %v1447, 4294901760
        %v3778 = vsub.f32 %v1447, %v3777
        %v3779 = vand.u32 %v3778, 4294901760
        %3780 = vmatpush1.msra.mxu0 %v3779
        %v3781 = vand.u32 %v1450, 4294901760
        %v3782 = vsub.f32 %v1450, %v3781
        %v3783 = vand.u32 %v3782, 4294901760
        %3784 = vmatprep.subr.mxu0 %v3783
        %v3785 = vand.u32 %v1449, 4294901760
        %v3786 = vsub.f32 %v1449, %v3785
        %v3787 = vand.u32 %v3786, 4294901760
        %3788 = vmatpush1.msra.mxu0 %v3787
        %v3789 = vand.u32 %v1452, 4294901760
        %v3790 = vsub.f32 %v1452, %v3789
        %v3791 = vand.u32 %v3790, 4294901760
        %3792 = vmatprep.subr.mxu0 %v3791
        %v3793 = vand.u32 %v1451, 4294901760
        %v3794 = vsub.f32 %v1451, %v3793
        %v3795 = vand.u32 %v3794, 4294901760
        %3796 = vmatpush1.msra.mxu0 %v3795
        %v3797 = vand.u32 %v1454, 4294901760
        %v3798 = vsub.f32 %v1454, %v3797
        %v3799 = vand.u32 %v3798, 4294901760
        %3800 = vmatprep.subr.mxu0 %v3799
        %v3801 = vand.u32 %v1453, 4294901760
        %v3802 = vsub.f32 %v1453, %v3801
        %v3803 = vand.u32 %v3802, 4294901760
        %3804 = vmatpush1.msra.mxu0 %v3803
        %v3805 = vand.u32 %v1456, 4294901760
        %v3806 = vsub.f32 %v1456, %v3805
        %v3807 = vand.u32 %v3806, 4294901760
        %3808 = vmatprep.subr.mxu0 %v3807
        %v3809 = vand.u32 %v1455, 4294901760
        %v3810 = vsub.f32 %v1455, %v3809
        %v3811 = vand.u32 %v3810, 4294901760
        %3812 = vmatpush1.msra.mxu0 %v3811
        %v3813 = vand.u32 %v1458, 4294901760
        %v3814 = vsub.f32 %v1458, %v3813
        %v3815 = vand.u32 %v3814, 4294901760
        %3816 = vmatprep.subr.mxu0 %v3815
        %v3817 = vand.u32 %v1457, 4294901760
        %v3818 = vsub.f32 %v1457, %v3817
        %v3819 = vand.u32 %v3818, 4294901760
        %3820 = vmatpush1.msra.mxu0 %v3819
        %v3821 = vand.u32 %v1460, 4294901760
        %v3822 = vsub.f32 %v1460, %v3821
        %v3823 = vand.u32 %v3822, 4294901760
        %3824 = vmatprep.subr.mxu0 %v3823
        %v3825 = vand.u32 %v1459, 4294901760
        %v3826 = vsub.f32 %v1459, %v3825
        %v3827 = vand.u32 %v3826, 4294901760
        %3828 = vmatpush1.msra.mxu0 %v3827
        %v3829 = vand.u32 %v1462, 4294901760
        %v3830 = vsub.f32 %v1462, %v3829
        %v3831 = vand.u32 %v3830, 4294901760
        %3832 = vmatprep.subr.mxu0 %v3831
        %v3833 = vand.u32 %v1461, 4294901760
        %v3834 = vsub.f32 %v1461, %v3833
        %v3835 = vand.u32 %v3834, 4294901760
        %3836 = vmatpush1.msra.mxu0 %v3835
        %v3837 = vand.u32 %v1464, 4294901760
        %v3838 = vsub.f32 %v1464, %v3837
        %v3839 = vand.u32 %v3838, 4294901760
        %3840 = vmatprep.subr.mxu0 %v3839
        %v3841 = vand.u32 %v1463, 4294901760
        %v3842 = vsub.f32 %v1463, %v3841
        %v3843 = vand.u32 %v3842, 4294901760
        %3844 = vmatpush1.msra.mxu0 %v3843
        %v3845 = vand.u32 %v1466, 4294901760
        %v3846 = vsub.f32 %v1466, %v3845
        %v3847 = vand.u32 %v3846, 4294901760
        %3848 = vmatprep.subr.mxu0 %v3847
        %v3849 = vand.u32 %v1465, 4294901760
        %v3850 = vsub.f32 %v1465, %v3849
        %v3851 = vand.u32 %v3850, 4294901760
        %3852 = vmatpush1.msra.mxu0 %v3851
        %v3853 = vand.u32 %v1468, 4294901760
        %v3854 = vsub.f32 %v1468, %v3853
        %v3855 = vand.u32 %v3854, 4294901760
        %3856 = vmatprep.subr.mxu0 %v3855
        %v3857 = vand.u32 %v1467, 4294901760
        %v3858 = vsub.f32 %v1467, %v3857
        %v3859 = vand.u32 %v3858, 4294901760
        %3860 = vmatpush1.msra.mxu0 %v3859
        %v3861 = vand.u32 %v1470, 4294901760
        %v3862 = vsub.f32 %v1470, %v3861
        %v3863 = vand.u32 %v3862, 4294901760
        %3864 = vmatprep.subr.mxu0 %v3863
        %v3865 = vand.u32 %v1469, 4294901760
        %v3866 = vsub.f32 %v1469, %v3865
        %v3867 = vand.u32 %v3866, 4294901760
        %3868 = vmatpush1.msra.mxu0 %v3867
        %v3869 = vand.u32 %v1472, 4294901760
        %v3870 = vsub.f32 %v1472, %v3869
        %v3871 = vand.u32 %v3870, 4294901760
        %3872 = vmatprep.subr.mxu0 %v3871
        %v3873 = vand.u32 %v1471, 4294901760
        %v3874 = vsub.f32 %v1471, %v3873
        %v3875 = vand.u32 %v3874, 4294901760
        %3876 = vmatpush1.msra.mxu0 %v3875
        %v3877 = vand.u32 %v1474, 4294901760
        %v3878 = vsub.f32 %v1474, %v3877
        %v3879 = vand.u32 %v3878, 4294901760
        %3880 = vmatprep.subr.mxu0 %v3879
        %v3881 = vand.u32 %v1473, 4294901760
        %v3882 = vsub.f32 %v1473, %v3881
        %v3883 = vand.u32 %v3882, 4294901760
        %3884 = vmatpush1.msra.mxu0 %v3883
        %v3885 = vand.u32 %v1476, 4294901760
        %v3886 = vsub.f32 %v1476, %v3885
        %v3887 = vand.u32 %v3886, 4294901760
        %3888 = vmatprep.subr.mxu0 %v3887
        %v3889 = vand.u32 %v1475, 4294901760
        %v3890 = vsub.f32 %v1475, %v3889
        %v3891 = vand.u32 %v3890, 4294901760
        %3892 = vmatpush1.msra.mxu0 %v3891
        %v3893 = vand.u32 %v1478, 4294901760
        %v3894 = vsub.f32 %v1478, %v3893
        %v3895 = vand.u32 %v3894, 4294901760
        %3896 = vmatprep.subr.mxu0 %v3895
        %v3897 = vand.u32 %v1477, 4294901760
        %v3898 = vsub.f32 %v1477, %v3897
        %v3899 = vand.u32 %v3898, 4294901760
        %3900 = vmatpush1.msra.mxu0 %v3899
        %v3901 = vand.u32 %v1350, 4294901760
        %3902 = vmatprep.mubr.f32.mxu0 %v3901
        %v3903 = vand.u32 %v1341, 4294901760
        %3904 = vmatmul.mubr.f32.gmra.mrb[0].mxu0 %v3903
        %v3905 = vpop.f32.mrb[0].mxu0
        %v3906 = vadd.f32 %v3641, %v3905
        %v3907 = vpop.f32.mrb[0].mxu0
        %v3908 = vadd.f32 %v3643, %v3907
        %3909 = vdwg.mxu0
        %v3910 = vand.u32 %v1416, 4294901760
        %3911 = vmatprep.subr.mxu0 %v3910
        %v3912 = vand.u32 %v1415, 4294901760
        %3913 = vmatpush1.msra.mxu0 %v3912
        %v3914 = vand.u32 %v1418, 4294901760
        %3915 = vmatprep.subr.mxu0 %v3914
        %v3916 = vand.u32 %v1417, 4294901760
        %3917 = vmatpush1.msra.mxu0 %v3916
        %v3918 = vand.u32 %v1420, 4294901760
        %3919 = vmatprep.subr.mxu0 %v3918
        %v3920 = vand.u32 %v1419, 4294901760
        %3921 = vmatpush1.msra.mxu0 %v3920
        %v3922 = vand.u32 %v1422, 4294901760
        %3923 = vmatprep.subr.mxu0 %v3922
        %v3924 = vand.u32 %v1421, 4294901760
        %3925 = vmatpush1.msra.mxu0 %v3924
        %v3926 = vand.u32 %v1424, 4294901760
        %3927 = vmatprep.subr.mxu0 %v3926
        %v3928 = vand.u32 %v1423, 4294901760
        %3929 = vmatpush1.msra.mxu0 %v3928
        %v3930 = vand.u32 %v1426, 4294901760
        %3931 = vmatprep.subr.mxu0 %v3930
        %v3932 = vand.u32 %v1425, 4294901760
        %3933 = vmatpush1.msra.mxu0 %v3932
        %v3934 = vand.u32 %v1428, 4294901760
        %3935 = vmatprep.subr.mxu0 %v3934
        %v3936 = vand.u32 %v1427, 4294901760
        %3937 = vmatpush1.msra.mxu0 %v3936
        %v3938 = vand.u32 %v1430, 4294901760
        %3939 = vmatprep.subr.mxu0 %v3938
        %v3940 = vand.u32 %v1429, 4294901760
        %3941 = vmatpush1.msra.mxu0 %v3940
        %v3942 = vand.u32 %v1432, 4294901760
        %3943 = vmatprep.subr.mxu0 %v3942
        %v3944 = vand.u32 %v1431, 4294901760
        %3945 = vmatpush1.msra.mxu0 %v3944
        %v3946 = vand.u32 %v1434, 4294901760
        %3947 = vmatprep.subr.mxu0 %v3946
        %v3948 = vand.u32 %v1433, 4294901760
        %3949 = vmatpush1.msra.mxu0 %v3948
        %v3950 = vand.u32 %v1436, 4294901760
        %3951 = vmatprep.subr.mxu0 %v3950
        %v3952 = vand.u32 %v1435, 4294901760
        %3953 = vmatpush1.msra.mxu0 %v3952
        %v3954 = vand.u32 %v1438, 4294901760
        %3955 = vmatprep.subr.mxu0 %v3954
        %v3956 = vand.u32 %v1437, 4294901760
        %3957 = vmatpush1.msra.mxu0 %v3956
        %v3958 = vand.u32 %v1440, 4294901760
        %3959 = vmatprep.subr.mxu0 %v3958
        %v3960 = vand.u32 %v1439, 4294901760
        %3961 = vmatpush1.msra.mxu0 %v3960
        %v3962 = vand.u32 %v1442, 4294901760
        %3963 = vmatprep.subr.mxu0 %v3962
        %v3964 = vand.u32 %v1441, 4294901760
        %3965 = vmatpush1.msra.mxu0 %v3964
        %v3966 = vand.u32 %v1444, 4294901760
        %3967 = vmatprep.subr.mxu0 %v3966
        %v3968 = vand.u32 %v1443, 4294901760
        %3969 = vmatpush1.msra.mxu0 %v3968
        %v3970 = vand.u32 %v1446, 4294901760
        %3971 = vmatprep.subr.mxu0 %v3970
        %v3972 = vand.u32 %v1445, 4294901760
        %3973 = vmatpush1.msra.mxu0 %v3972
        %v3974 = vand.u32 %v1448, 4294901760
        %3975 = vmatprep.subr.mxu0 %v3974
        %v3976 = vand.u32 %v1447, 4294901760
        %3977 = vmatpush1.msra.mxu0 %v3976
        %v3978 = vand.u32 %v1450, 4294901760
        %3979 = vmatprep.subr.mxu0 %v3978
        %v3980 = vand.u32 %v1449, 4294901760
        %3981 = vmatpush1.msra.mxu0 %v3980
        %v3982 = vand.u32 %v1452, 4294901760
        %3983 = vmatprep.subr.mxu0 %v3982
        %v3984 = vand.u32 %v1451, 4294901760
        %3985 = vmatpush1.msra.mxu0 %v3984
        %v3986 = vand.u32 %v1454, 4294901760
        %3987 = vmatprep.subr.mxu0 %v3986
        %v3988 = vand.u32 %v1453, 4294901760
        %3989 = vmatpush1.msra.mxu0 %v3988
        %v3990 = vand.u32 %v1456, 4294901760
        %3991 = vmatprep.subr.mxu0 %v3990
        %v3992 = vand.u32 %v1455, 4294901760
        %3993 = vmatpush1.msra.mxu0 %v3992
        %v3994 = vand.u32 %v1458, 4294901760
        %3995 = vmatprep.subr.mxu0 %v3994
        %v3996 = vand.u32 %v1457, 4294901760
        %3997 = vmatpush1.msra.mxu0 %v3996
        %v3998 = vand.u32 %v1460, 4294901760
        %3999 = vmatprep.subr.mxu0 %v3998
        %v4000 = vand.u32 %v1459, 4294901760
        %4001 = vmatpush1.msra.mxu0 %v4000
        %v4002 = vand.u32 %v1462, 4294901760
        %4003 = vmatprep.subr.mxu0 %v4002
        %v4004 = vand.u32 %v1461, 4294901760
        %4005 = vmatpush1.msra.mxu0 %v4004
        %v4006 = vand.u32 %v1464, 4294901760
        %4007 = vmatprep.subr.mxu0 %v4006
        %v4008 = vand.u32 %v1463, 4294901760
        %4009 = vmatpush1.msra.mxu0 %v4008
        %v4010 = vand.u32 %v1466, 4294901760
        %4011 = vmatprep.subr.mxu0 %v4010
        %v4012 = vand.u32 %v1465, 4294901760
        %4013 = vmatpush1.msra.mxu0 %v4012
        %v4014 = vand.u32 %v1468, 4294901760
        %4015 = vmatprep.subr.mxu0 %v4014
        %v4016 = vand.u32 %v1467, 4294901760
        %4017 = vmatpush1.msra.mxu0 %v4016
        %v4018 = vand.u32 %v1470, 4294901760
        %4019 = vmatprep.subr.mxu0 %v4018
        %v4020 = vand.u32 %v1469, 4294901760
        %4021 = vmatpush1.msra.mxu0 %v4020
        %v4022 = vand.u32 %v1472, 4294901760
        %4023 = vmatprep.subr.mxu0 %v4022
        %v4024 = vand.u32 %v1471, 4294901760
        %4025 = vmatpush1.msra.mxu0 %v4024
        %v4026 = vand.u32 %v1474, 4294901760
        %4027 = vmatprep.subr.mxu0 %v4026
        %v4028 = vand.u32 %v1473, 4294901760
        %4029 = vmatpush1.msra.mxu0 %v4028
        %v4030 = vand.u32 %v1476, 4294901760
        %4031 = vmatprep.subr.mxu0 %v4030
        %v4032 = vand.u32 %v1475, 4294901760
        %4033 = vmatpush1.msra.mxu0 %v4032
        %v4034 = vand.u32 %v1478, 4294901760
        %4035 = vmatprep.subr.mxu0 %v4034
        %v4036 = vand.u32 %v1477, 4294901760
        %4037 = vmatpush1.msra.mxu0 %v4036
        %v4038 = vand.u32 %v1350, 4294901760
        %4039 = vmatprep.mubr.f32.mxu0 %v4038
        %v4040 = vand.u32 %v1341, 4294901760
        %4041 = vmatmul.mubr.f32.gmra.mrb[0].mxu0 %v4040
        %v4042 = vpop.f32.mrb[0].mxu0
        %v4043 = vadd.f32 %v3906, %v4042
        %v4044 = vpop.f32.mrb[0].mxu0
        %v4045 = vadd.f32 %v3908, %v4044
        %4046 = vdwg.mxu0
        %v4047 = vxor.u32 %v4043, 2147483648
        %v4048 = vxor.u32 %v4045, 2147483648
        %v4049 = vmul.f32 %v4047, 1.442695
        %v4050 = vpow.pop %v4049
        %v4051 = vmul.f32 %v4048, 1.442695
        %v4052 = vpow.pop %v4051
        %v4053 = vadd.f32 %v4050, 1.0
        %v4054 = vadd.f32 %v4052, 1.0
        %v4055 = vrcp.pop %v4053
        %v4056 = vmul.f32 1.0, %v4055
        %v4057 = vrcp.pop %v4054
        %v4058 = vmul.f32 1.0, %v4057
        %v4059 = vlaneseq
        %v4060 = vshrl.u32 %v4059, 7
        %v4061 = vsub.s32 0, %v4060
        %v4062 = vrot.slane %v4056, %v4061
        %v4063 = vlaneseq
        %v4064 = vshrl.u32 %v4063, 7
        %v4065 = vsub.s32 0, %v4064
        %v4066 = vrot.slane %v4058, %v4065
        %v4067 = vmul.f32 %v1304, %v4062
        %v4068 = vmul.f32 %v1305, %v4066
        %v4069 = vmul.f32 %v1306, %v4062
        %v4070 = vmul.f32 %v1307, %v4066
        %v4071 = vmul.f32 %v1308, %v4062
        %v4072 = vmul.f32 %v1309, %v4066
        %v4073 = vmul.f32 %v1310, %v4062
        %v4074 = vmul.f32 %v1311, %v4066
        %4075 = vst [vmem:[%s230] sm:$0xff] %v4067
        %4076 = vst [vmem:[%s230 + $0x8] sm:$0xff] %v4068
        %4077 = vst [vmem:[%s230 + $0x10] sm:$0xff] %v4069
        %4078 = vst [vmem:[%s230 + $0x18] sm:$0xff] %v4070
        %4079 = vst [vmem:[%s230 + $0x20] sm:$0xff] %v4071
        %4080 = vst [vmem:[%s230 + $0x28] sm:$0xff] %v4072
        %4081 = vst [vmem:[%s230 + $0x30] sm:$0xff] %v4073
        %4082 = vst [vmem:[%s230 + $0x38] sm:$0xff] %v4074
        %s4083 = sand.u32 %s119, 1
        %s4084 = scalar_lea.sflag [#allocation4], %s4083
        %s4085 = sand.u32 %s119, 1
        %s4086 = smul.addr %s4085, 64
        %s4087 = scalar_lea.vmem [#allocation7], %s4086
        // Predicated region
        $region45: #{tpu_custom_call.1} parent=35 // pred_check
          %p4088 = pneg %p129
        $region46: #{tpu_custom_call.1} parent=35 // pred_check_branch
          %4090 = sbr.rel (%p4088) target = $region48
        $region47: #{tpu_custom_call.1} parent=35 // pred_region
          %s4092 = ssub.s32 1024, 1024
          %4093 = vsyncadd %s4084, %s4092
          %s4094 = smul.addr %s22, 8
          %s4095 = smul.addr %s4094, 128
          %s4096 = scalar_lea.hbm %s4, %s4095
          %s4097 = sshll.u32 %s4087, 4
          %s4098 = int_to_ptr.vmem [resolvable:$true] %s4097
          %4103 = dma.vmem_to_hbm [thread:$0]  %s4098, 1024, %s4096, %s4084, 256, 256, 16
        $region48: #{tpu_custom_call.1} parent=35 // pred_fallthru
          _
      $region36: #{tpu_custom_call.1} parent=5 // pred_fallthru
        _
      %p4104 = scmp.le.s32.totalorder 2, %s17
      // Predicated region
      $region49: #{tpu_custom_call.1} parent=5 // pred_check
        %p4105 = pneg %p4104
      $region50: #{tpu_custom_call.1} parent=5 // pred_check_branch
        %4107 = sbr.rel (%p4105) target = $region52
      $region51: #{tpu_custom_call.1} parent=5 // pred_region
        %s4108 = ssub.s32 %s17, 2
        // Predicated region
        $region53: #{tpu_custom_call.1} parent=51 // pred_check
          %p4109 = pneg %p135
        $region54: #{tpu_custom_call.1} parent=51 // pred_check_branch
          %4111 = sbr.rel (%p4109) target = $region56
        $region55: #{tpu_custom_call.1} parent=51 // pred_region
          %s4112 = sand.u32 %s120, 1
          %s4113 = scalar_lea.sflag [#allocation4], %s4112
          %s4114 = sand.u32 %s120, 1
          %s4115 = smul.addr %s4114, 64
          %s4116 = scalar_lea.vmem [#allocation7], %s4115
          %4117 = dma.done %s4113, 1024
        $region56: #{tpu_custom_call.1} parent=51 // pred_fallthru
          _
      $region52: #{tpu_custom_call.1} parent=5 // pred_fallthru
        _
    $region6: #{tpu_custom_call.1} parent=1 // loop_footer
      %s21 = sadd.s32 1, %s17
    $region7: #{tpu_custom_call.1} parent=1 // loop_footer_branch
      %16 = sbr.rel target = $region3
    $region8: #{tpu_custom_call.1} parent=1 // loop_exit
      _
    %4118 = vsyncpa [#allocation3], 1
    %s4119 = scalar_lea.sflag [#allocation3], 1
    %4120 = vsyncpa %s4119, 1
    %4121 = vsyncpa [#allocation6], 1
    %4122 = vsyncpa [#allocation4], 1
    %s4123 = scalar_lea.sflag [#allocation4], 1
    %4124 = vsyncpa %s4123, 1

</llo_original>
